<compile_context>
chip_gen: v5e
topology: v5e:2x2
jax: 0.10.0
libtpu: 0.0.40
codegen_flags: <defaults>
</compile_context>

<pallas_src>
import functools

import numpy as np
import jax
import jax.numpy as jnp
from jax.experimental import pallas as pl
from jax.experimental.pallas import tpu as pltpu


# ---------------------------------------------------------------------------
# In-kernel helpers
# ---------------------------------------------------------------------------
def _mm(a, b, compute_dtype):
    """MXU matmul with f32 accumulation; operands optionally cast (bf16 on v6e/v7x)."""
    return jnp.dot(a.astype(compute_dtype), b.astype(compute_dtype),
                   preferred_element_type=jnp.float32)


def _layer_norm(y, gamma, beta, eps=1e-5):
    # one-pass variance: E[y^2] - E[y]^2 (one fewer cross-lane reduction)
    mu = jnp.mean(y, axis=-1, keepdims=True)
    ms = jnp.mean(y * y, axis=-1, keepdims=True)
    var = ms - mu * mu
    return (y - mu) * jax.lax.rsqrt(var + eps) * gamma + beta


def _attention(q, k, v, mask, nhead, compute_dtype):
    """Batched multi-head attention (all heads in one contraction per step)."""
    L, D = q.shape
    M = k.shape[0]
    hd = D // nhead
    scale = 1.0 / float(np.sqrt(hd))
    # Fold the softmax scale into q: [L,D] multiply instead of [H,L,M] multiply.
    qh = (q * scale).reshape(L, nhead, hd).astype(compute_dtype)
    kh = k.reshape(M, nhead, hd).astype(compute_dtype)
    vh = v.reshape(M, nhead, hd).astype(compute_dtype)
    s = jnp.einsum("lhd,mhd->hlm", qh, kh,
                   preferred_element_type=jnp.float32)
    s = s + mask[None, :, :]
    m = jnp.max(s, axis=-1, keepdims=True)
    m = jnp.maximum(m, -1e30)                     # guard fully-masked rows (no NaN)
    p = jnp.exp(s - m)
    denom = jnp.sum(p, axis=-1, keepdims=True)
    p = p * pl.reciprocal(jnp.maximum(denom, 1e-30), approx=True)  # EUP, not VALU
    o = jnp.einsum("hlm,mhd->lhd", p.astype(compute_dtype), vh,
                   preferred_element_type=jnp.float32)
    return o.reshape(L, D)


# ---------------------------------------------------------------------------
# Fused kernel: grid=(nlayer,), h resident in VMEM scratch across layers
# ---------------------------------------------------------------------------
def fused_encoder_kernel(
    # invariant inputs
    traj_ref, pe_ref, w_in_ref, b_in_ref, mem_ref, tgt_mask_ref, mem_mask_ref,
    # per-layer stacks (leading layer dim squeezed by BlockSpec)
    s_wqkv_ref, s_bqkv_ref, s_wo_ref, s_bo_ref, s_g_ref, s_b_ref,
    c_wq_ref, c_bq_ref, c_wkv_ref, c_bkv_ref, c_wo_ref, c_bo_ref, c_g_ref, c_b_ref,
    f_w1_ref, f_b1_ref, f_w2_ref, f_b2_ref, f_g_ref, f_b_ref,
    # q_z head
    qz_w_ref, qz_b_ref,
    # output
    out_ref,
    # scratch
    h_ref,
    *, nhead, pooling, num_t, compute_dtype):
    layer = pl.program_id(0)
    nlayer = pl.num_programs(0)

    # ---- layer 0: input_fc + positional encoding (additive, concat=False) ----
    @pl.when(layer == 0)
    def _init():
        h_ref[...] = (_mm(traj_ref[...], w_in_ref[...], compute_dtype)
                      + b_in_ref[...] + pe_ref[...])

    x = h_ref[...]
    mem = mem_ref[...]
    d = x.shape[-1]

    # ---- masked self-attention + residual + LN (fused QKV matmul) ----
    qkv = _mm(x, s_wqkv_ref[...], compute_dtype) + s_bqkv_ref[...]
    q, k, v = qkv[:, :d], qkv[:, d:2 * d], qkv[:, 2 * d:]
    attn = _attention(q, k, v, tgt_mask_ref[...], nhead, compute_dtype)
    y = x + _mm(attn, s_wo_ref[...], compute_dtype) + s_bo_ref[...]
    x = _layer_norm(y, s_g_ref[...], s_b_ref[...])

    # ---- masked cross-attention + residual + LN (fused KV matmul on memory) ----
    qc = _mm(x, c_wq_ref[...], compute_dtype) + c_bq_ref[...]
    kvc = _mm(mem, c_wkv_ref[...], compute_dtype) + c_bkv_ref[...]
    kc, vc = kvc[:, :d], kvc[:, d:]
    attn = _attention(qc, kc, vc, mem_mask_ref[...], nhead, compute_dtype)
    y = x + _mm(attn, c_wo_ref[...], compute_dtype) + c_bo_ref[...]
    x = _layer_norm(y, c_g_ref[...], c_b_ref[...])

    # ---- feed-forward (ReLU) + residual + LN ----
    hmid = jnp.maximum(_mm(x, f_w1_ref[...], compute_dtype) + f_b1_ref[...], 0.0)
    y = x + _mm(hmid, f_w2_ref[...], compute_dtype) + f_b2_ref[...]
    x = _layer_norm(y, f_g_ref[...], f_b_ref[...])

    h_ref[...] = x

    # ---- last layer: temporal pooling + q_z_net, directly on VMEM activation ----
    @pl.when(layer == nlayer - 1)
    def _final():
        L = x.shape[0]
        num_a = L // num_t
        xt = x.reshape(num_t, num_a, d)
        if pooling == "mean":
            pooled = jnp.mean(xt, axis=0)
        else:
            pooled = jnp.max(xt, axis=0)
        out_ref[...] = _mm(pooled, qz_w_ref[...], compute_dtype) + qz_b_ref[...]


def fused_future_encoder(traj, pe, w_in, b_in, mem, tgt_mask, mem_mask,
                         stack, qz_w, qz_b, *, nhead, num_t, pooling,
                         compute_dtype=jnp.float32):
    L, in_dim = traj.shape
    D = w_in.shape[1]
    C = mem.shape[0]
    F = stack["f_w1"].shape[-1]
    nlayer = stack["s_wqkv"].shape[0]
    P = qz_w.shape[1]
    num_a = L // num_t

    def inv(shape):  # grid-invariant block (kept resident, not re-fetched)
        return pl.BlockSpec(shape, lambda l, _s=shape: (0,) * len(_s))

    def per_layer(*dims):  # per-layer slice of a [nlayer, ...] stack (double-buffered)
        return pl.BlockSpec((None,) + dims, lambda l, _n=len(dims): (l,) + (0,) * _n)

    kern = functools.partial(fused_encoder_kernel, nhead=nhead, pooling=pooling,
                             num_t=num_t, compute_dtype=compute_dtype)

    in_specs = [
        inv((L, in_dim)), inv((L, D)), inv((in_dim, D)), inv((1, D)),
        inv((C, D)), inv((L, L)), inv((L, C)),
        # self-attention stacks
        per_layer(D, 3 * D), per_layer(1, 3 * D), per_layer(D, D), per_layer(1, D),
        per_layer(1, D), per_layer(1, D),
        # cross-attention stacks
        per_layer(D, D), per_layer(1, D), per_layer(D, 2 * D), per_layer(1, 2 * D),
        per_layer(D, D), per_layer(1, D), per_layer(1, D), per_layer(1, D),
        # FFN stacks
        per_layer(D, F), per_layer(1, F), per_layer(F, D), per_layer(1, D),
        per_layer(1, D), per_layer(1, D),
        # q_z head
        inv((D, P)), inv((1, P)),
    ]

    return pl.pallas_call(
        kern,
        out_shape=jax.ShapeDtypeStruct((num_a, P), jnp.float32),
        grid=(nlayer,),
        in_specs=in_specs,
        out_specs=pl.BlockSpec((num_a, P), lambda l: (0, 0)),
        scratch_shapes=[pltpu.VMEM((L, D), jnp.float32)],
        compiler_params=pltpu.CompilerParams(
            dimension_semantics=("arbitrary",),          # layers are sequential
            vmem_limit_bytes=32 * 1024 * 1024),
    )(traj, pe, w_in, b_in, mem, tgt_mask, mem_mask,
      stack["s_wqkv"], stack["s_bqkv"], stack["s_wo"], stack["s_bo"],
      stack["s_g"], stack["s_b"],
      stack["c_wq"], stack["c_bq"], stack["c_wkv"], stack["c_bkv"],
      stack["c_wo"], stack["c_bo"], stack["c_g"], stack["c_b"],
      stack["f_w1"], stack["f_b1"], stack["f_w2"], stack["f_b2"],
      stack["f_g"], stack["f_b"],
      qz_w, qz_b)


# ---------------------------------------------------------------------------
# Glue: positional encoding, masks, parameter init, forward wrapper
# ---------------------------------------------------------------------------
def build_pos_enc(max_len, d_model):
    pe = np.zeros((max_len, d_model), np.float32)
    position = np.arange(0, max_len, dtype=np.float32)[:, None]
    div_term = np.exp(np.arange(0, d_model, 2, dtype=np.float32)
                      * (-np.log(10000.0) / d_model))
    pe[:, 0::2] = np.sin(position * div_term)
    pe[:, 1::2] = np.cos(position * div_term)
    return jnp.asarray(pe)


def generate_mask(tgt_sz, src_sz, agent_num, agent_mask):
    assert tgt_sz % agent_num == 0 and src_sz % agent_num == 0
    return jnp.tile(agent_mask, (tgt_sz // agent_num, src_sz // agent_num))


def init_params(key, in_dim, model_dim, ff_dim, nhead, nlayer, num_dist_params,
                max_t_len=200):
    keys = iter(jax.random.split(key, 16))

    def w(shape):
        return jax.random.normal(next(keys), shape, jnp.float32) * 0.02

    D, F = model_dim, ff_dim
    stack = dict(
        # self-attention (fused QKV)
        s_wqkv=w((nlayer, D, 3 * D)),
        s_bqkv=jnp.zeros((nlayer, 1, 3 * D), jnp.float32),
        s_wo=w((nlayer, D, D)),
        s_bo=jnp.zeros((nlayer, 1, D), jnp.float32),
        s_g=jnp.ones((nlayer, 1, D), jnp.float32),
        s_b=jnp.zeros((nlayer, 1, D), jnp.float32),
        # cross-attention (separate Q, fused KV)
        c_wq=w((nlayer, D, D)),
        c_bq=jnp.zeros((nlayer, 1, D), jnp.float32),
        c_wkv=w((nlayer, D, 2 * D)),
        c_bkv=jnp.zeros((nlayer, 1, 2 * D), jnp.float32),
        c_wo=w((nlayer, D, D)),
        c_bo=jnp.zeros((nlayer, 1, D), jnp.float32),
        c_g=jnp.ones((nlayer, 1, D), jnp.float32),
        c_b=jnp.zeros((nlayer, 1, D), jnp.float32),
        # FFN
        f_w1=w((nlayer, D, F)),
        f_b1=jnp.zeros((nlayer, 1, F), jnp.float32),
        f_w2=w((nlayer, F, D)),
        f_b2=jnp.zeros((nlayer, 1, D), jnp.float32),
        f_g=jnp.ones((nlayer, 1, D), jnp.float32),
        f_b=jnp.zeros((nlayer, 1, D), jnp.float32),
    )

    params = {
        "input_fc_w": w((in_dim, D)),
        "input_fc_b": jnp.zeros((1, D), jnp.float32),
        "pe": build_pos_enc(max_t_len, D),
        "stack": stack,
        "qz_w": w((D, num_dist_params)),
        "qz_b": jnp.zeros((1, num_dist_params), jnp.float32),
        "nhead": nhead,
        "model_dim": D,
    }
    return params


def future_encoder_forward(params, data, key=None, pooling="mean",
                           compute_dtype=jnp.float32):
    nhead = params["nhead"]
    model_dim = params["model_dim"]

    # input_type = ['pos', 'vel']
    traj_in = jnp.concatenate([data["fut_motion"], data["fut_vel"]], axis=-1)
    T, N, in_dim = traj_in.shape
    L = T * N
    x = traj_in.reshape(L, in_dim)

    # pos encoding: pe[0:T] repeat_interleave(num_a) (concat=False -> additive)
    pe = jnp.repeat(params["pe"][:T], N, axis=0)                  # [L, D]

    mem = data["context_enc"].reshape(-1, model_dim)              # [C, D]
    C = mem.shape[0]
    am = data["agent_mask"]                                       # [N, N] additive float
    tgt_mask = generate_mask(L, L, N, am)
    mem_mask = generate_mask(L, C, N, am)

    q_z_params = fused_future_encoder(
        x, pe, params["input_fc_w"], params["input_fc_b"], mem,
        tgt_mask, mem_mask, params["stack"], params["qz_w"], params["qz_b"],
        nhead=nhead, num_t=T, pooling=pooling, compute_dtype=compute_dtype)

    # z_type == 'gaussian': Normal(params).rsample()
    mu, logvar = jnp.split(q_z_params, 2, axis=-1)
    std = jnp.exp(0.5 * logvar)
    if key is None:
        key = jax.random.PRNGKey(0)
    eps = jax.random.normal(key, mu.shape, jnp.float32)
    q_z_samp = mu + std * eps
    return q_z_params, q_z_samp


if __name__ == "__main__":
    # small config: forecast_dim=2, input_type=['pos','vel'] -> in_dim=4
    T, N = 4, 2                  # future timesteps, agents
    forecast_dim = 2
    model_dim, ff_dim, nhead, nlayer = 32, 64, 4, 2
    nz = 8
    num_dist_params = 2 * nz     # gaussian
    C = 8                        # context (memory) length, divisible by N

    key = jax.random.PRNGKey(0)
    k_data, k_par, k_samp = jax.random.split(key, 3)
    kd = jax.random.split(k_data, 4)

    data = {
        "fut_motion": jax.random.normal(kd[0], (T, N, forecast_dim), jnp.float32),
        "fut_vel": jax.random.normal(kd[1], (T, N, forecast_dim), jnp.float32),
        "context_enc": jax.random.normal(kd[2], (C, 1, model_dim), jnp.float32),
        "agent_mask": jnp.zeros((N, N), jnp.float32),   # additive mask (0 = attend)
        "agent_num": N,
    }

    params = init_params(k_par, in_dim=forecast_dim * 2, model_dim=model_dim,
                         ff_dim=ff_dim, nhead=nhead, nlayer=nlayer,
                         num_dist_params=num_dist_params)

    # compute_dtype=jnp.bfloat16 enables the v6e/v7x MXU path (f32 accumulation);
    # default f32 keeps exact module semantics.
    q_z_params, q_z_samp = future_encoder_forward(params, data, key=k_samp,
                                                  pooling="mean")
    jax.block_until_ready((q_z_params, q_z_samp))
    assert q_z_params.shape == (N, num_dist_params)
    assert q_z_samp.shape == (N, nz)
    print("KERNEL_OK")
</pallas_src>

<mosaic_0001>
module attributes {stable_mosaic.version = 11 : i64} {
  func.func @fused_encoder_kernel(%arg0: i32, %arg1: memref<8x4xf32, #tpu.memory_space<vmem>>, %arg2: memref<8x32xf32, #tpu.memory_space<vmem>>, %arg3: memref<4x32xf32, #tpu.memory_space<vmem>>, %arg4: memref<1x32xf32, #tpu.memory_space<vmem>>, %arg5: memref<8x32xf32, #tpu.memory_space<vmem>>, %arg6: memref<8x8xf32, #tpu.memory_space<vmem>>, %arg7: memref<8x8xf32, #tpu.memory_space<vmem>>, %arg8: memref<1x32x96xf32, #tpu.memory_space<vmem>>, %arg9: memref<1x1x96xf32, #tpu.memory_space<vmem>>, %arg10: memref<1x32x32xf32, #tpu.memory_space<vmem>>, %arg11: memref<1x1x32xf32, #tpu.memory_space<vmem>>, %arg12: memref<1x1x32xf32, #tpu.memory_space<vmem>>, %arg13: memref<1x1x32xf32, #tpu.memory_space<vmem>>, %arg14: memref<1x32x32xf32, #tpu.memory_space<vmem>>, %arg15: memref<1x1x32xf32, #tpu.memory_space<vmem>>, %arg16: memref<1x32x64xf32, #tpu.memory_space<vmem>>, %arg17: memref<1x1x64xf32, #tpu.memory_space<vmem>>, %arg18: memref<1x32x32xf32, #tpu.memory_space<vmem>>, %arg19: memref<1x1x32xf32, #tpu.memory_space<vmem>>, %arg20: memref<1x1x32xf32, #tpu.memory_space<vmem>>, %arg21: memref<1x1x32xf32, #tpu.memory_space<vmem>>, %arg22: memref<1x32x64xf32, #tpu.memory_space<vmem>>, %arg23: memref<1x1x64xf32, #tpu.memory_space<vmem>>, %arg24: memref<1x64x32xf32, #tpu.memory_space<vmem>>, %arg25: memref<1x1x32xf32, #tpu.memory_space<vmem>>, %arg26: memref<1x1x32xf32, #tpu.memory_space<vmem>>, %arg27: memref<1x1x32xf32, #tpu.memory_space<vmem>>, %arg28: memref<32x16xf32, #tpu.memory_space<vmem>>, %arg29: memref<1x16xf32, #tpu.memory_space<vmem>>, %arg30: memref<2x16xf32, #tpu.memory_space<vmem>>, %arg31: memref<8x32xf32, #tpu.memory_space<vmem>>) attributes {dimension_semantics = [#tpu.dimension_semantics<arbitrary>], iteration_bounds = array<i64: 2>, scalar_prefetch = 0 : i64, scratch_operands = 1 : i64, tpu.core_type = #tpu.core_type<tc>, window_params = [{pipeline_mode = #tpu.pipeline_mode<synchronous>, transform_indices = @transform_0, window_bounds = array<i64: 8, 4>}, {pipeline_mode = #tpu.pipeline_mode<synchronous>, transform_indices = @transform_1, window_bounds = array<i64: 8, 32>}, {pipeline_mode = #tpu.pipeline_mode<synchronous>, transform_indices = @transform_2, window_bounds = array<i64: 4, 32>}, {pipeline_mode = #tpu.pipeline_mode<synchronous>, transform_indices = @transform_3, window_bounds = array<i64: 1, 32>}, {pipeline_mode = #tpu.pipeline_mode<synchronous>, transform_indices = @transform_4, window_bounds = array<i64: 8, 32>}, {pipeline_mode = #tpu.pipeline_mode<synchronous>, transform_indices = @transform_5, window_bounds = array<i64: 8, 8>}, {pipeline_mode = #tpu.pipeline_mode<synchronous>, transform_indices = @transform_6, window_bounds = array<i64: 8, 8>}, {transform_indices = @transform_7, window_bounds = array<i64: 1, 32, 96>}, {transform_indices = @transform_8, window_bounds = array<i64: 1, 1, 96>}, {transform_indices = @transform_9, window_bounds = array<i64: 1, 32, 32>}, {transform_indices = @transform_10, window_bounds = array<i64: 1, 1, 32>}, {transform_indices = @transform_11, window_bounds = array<i64: 1, 1, 32>}, {transform_indices = @transform_12, window_bounds = array<i64: 1, 1, 32>}, {transform_indices = @transform_13, window_bounds = array<i64: 1, 32, 32>}, {transform_indices = @transform_14, window_bounds = array<i64: 1, 1, 32>}, {transform_indices = @transform_15, window_bounds = array<i64: 1, 32, 64>}, {transform_indices = @transform_16, window_bounds = array<i64: 1, 1, 64>}, {transform_indices = @transform_17, window_bounds = array<i64: 1, 32, 32>}, {transform_indices = @transform_18, window_bounds = array<i64: 1, 1, 32>}, {transform_indices = @transform_19, window_bounds = array<i64: 1, 1, 32>}, {transform_indices = @transform_20, window_bounds = array<i64: 1, 1, 32>}, {transform_indices = @transform_21, window_bounds = array<i64: 1, 32, 64>}, {transform_indices = @transform_22, window_bounds = array<i64: 1, 1, 64>}, {transform_indices = @transform_23, window_bounds = array<i64: 1, 64, 32>}, {transform_indices = @transform_24, window_bounds = array<i64: 1, 1, 32>}, {transform_indices = @transform_25, window_bounds = array<i64: 1, 1, 32>}, {transform_indices = @transform_26, window_bounds = array<i64: 1, 1, 32>}, {pipeline_mode = #tpu.pipeline_mode<synchronous>, transform_indices = @transform_27, window_bounds = array<i64: 32, 16>}, {pipeline_mode = #tpu.pipeline_mode<synchronous>, transform_indices = @transform_28, window_bounds = array<i64: 1, 16>}, {pipeline_mode = #tpu.pipeline_mode<synchronous>, transform_indices = @transform_29, window_bounds = array<i64: 2, 16>}]} {
    %c0_i32 = arith.constant 0 : i32
    %0 = arith.cmpi eq, %arg0, %c0_i32 : i32
    %1 = arith.extui %0 : i1 to i32
    %c0_i32_0 = arith.constant 0 : i32
    %2 = arith.cmpi ne, %1, %c0_i32_0 : i32
    scf.if %2 {
      %c0_107 = arith.constant 0 : index
      %c0_108 = arith.constant 0 : index
      %200 = vector.load %arg1[%c0_107, %c0_108] : memref<8x4xf32, #tpu.memory_space<vmem>>, vector<8x4xf32>
      %c0_109 = arith.constant 0 : index
      %c0_110 = arith.constant 0 : index
      %201 = vector.load %arg3[%c0_109, %c0_110] : memref<4x32xf32, #tpu.memory_space<vmem>>, vector<4x32xf32>
      %cst_111 = arith.constant dense<0.000000e+00> : vector<8x32xf32>
      %202 = tpu.matmul %200, %201, %cst_111 {dimension_numbers = #tpu.dot_dimension_numbers<[1], [0], [0], [1], [0, 0, 1, 1], [], []>} : vector<8x4xf32>, vector<4x32xf32>, vector<8x32xf32> -> vector<8x32xf32>
      %c0_112 = arith.constant 0 : index
      %c0_113 = arith.constant 0 : index
      %203 = vector.load %arg4[%c0_112, %c0_113] : memref<1x32xf32, #tpu.memory_space<vmem>>, vector<1x32xf32>
      %204 = vector.broadcast %203 : vector<1x32xf32> to vector<8x32xf32>
      %205 = arith.addf %202, %204 : vector<8x32xf32>
      %c0_114 = arith.constant 0 : index
      %c0_115 = arith.constant 0 : index
      %206 = vector.load %arg2[%c0_114, %c0_115] : memref<8x32xf32, #tpu.memory_space<vmem>>, vector<8x32xf32>
      %207 = arith.addf %205, %206 : vector<8x32xf32>
      %c0_116 = arith.constant 0 : index
      %c0_117 = arith.constant 0 : index
      %208 = vector.load %arg31[%c0_116, %c0_117] : memref<8x32xf32, #tpu.memory_space<vmem>>, vector<8x32xf32>
      tpu.vector_store %arg31[%c0_116, %c0_117], %207 {strides = array<i32>} : memref<8x32xf32, #tpu.memory_space<vmem>>, vector<8x32xf32>,
    } else {
    }
    %c0 = arith.constant 0 : index
    %c0_1 = arith.constant 0 : index
    %3 = vector.load %arg31[%c0, %c0_1] : memref<8x32xf32, #tpu.memory_space<vmem>>, vector<8x32xf32>
    %c0_2 = arith.constant 0 : index
    %c0_3 = arith.constant 0 : index
    %4 = vector.load %arg5[%c0_2, %c0_3] : memref<8x32xf32, #tpu.memory_space<vmem>>, vector<8x32xf32>
    %c0_4 = arith.constant 0 : index
    %c0_5 = arith.constant 0 : index
    %c0_6 = arith.constant 0 : index
    %5 = vector.load %arg8[%c0_4, %c0_5, %c0_6] : memref<1x32x96xf32, #tpu.memory_space<vmem>>, vector<1x32x96xf32>
    %6 = vector.shape_cast %5 : vector<1x32x96xf32> to vector<32x96xf32>
    %cst = arith.constant dense<0.000000e+00> : vector<8x96xf32>
    %7 = tpu.matmul %3, %6, %cst {dimension_numbers = #tpu.dot_dimension_numbers<[1], [0], [0], [1], [0, 0, 1, 1], [], []>} : vector<8x32xf32>, vector<32x96xf32>, vector<8x96xf32> -> vector<8x96xf32>
    %c0_7 = arith.constant 0 : index
    %c0_8 = arith.constant 0 : index
    %c0_9 = arith.constant 0 : index
    %8 = vector.load %arg9[%c0_7, %c0_8, %c0_9] : memref<1x1x96xf32, #tpu.memory_space<vmem>>, vector<1x1x96xf32>
    %9 = vector.shape_cast %8 : vector<1x1x96xf32> to vector<1x96xf32>
    %10 = vector.broadcast %9 : vector<1x96xf32> to vector<8x96xf32>
    %11 = arith.addf %7, %10 : vector<8x96xf32>
    %12 = vector.extract_strided_slice %11 {offsets = [0, 0], sizes = [8, 32], strides = [1, 1]} : vector<8x96xf32> to vector<8x32xf32>
    %13 = vector.extract_strided_slice %11 {offsets = [0, 32], sizes = [8, 32], strides = [1, 1]} : vector<8x96xf32> to vector<8x32xf32>
    %14 = vector.extract_strided_slice %11 {offsets = [0, 64], sizes = [8, 32], strides = [1, 1]} : vector<8x96xf32> to vector<8x32xf32>
    %c0_10 = arith.constant 0 : index
    %c0_11 = arith.constant 0 : index
    %15 = vector.load %arg6[%c0_10, %c0_11] : memref<8x8xf32, #tpu.memory_space<vmem>>, vector<8x8xf32>
    %cst_12 = arith.constant 0.353553385 : f32
    %16 = vector.broadcast %cst_12 : f32 to vector<8x32xf32>
    %17 = arith.mulf %12, %16 : vector<8x32xf32>
    %18 = vector.shape_cast %17 : vector<8x32xf32> to vector<8x4x8xf32>
    %19 = vector.shape_cast %13 : vector<8x32xf32> to vector<8x4x8xf32>
    %20 = vector.shape_cast %14 : vector<8x32xf32> to vector<8x4x8xf32>
    "tpu.trace_start"() <{level = 10 : i32, message = "lhd,mhd->hlm"}> : () -> ()
    %cst_13 = arith.constant dense<0.000000e+00> : vector<4x8x8xf32>
    %21 = tpu.matmul %18, %19, %cst_13 {dimension_numbers = #tpu.dot_dimension_numbers<[2], [2], [0], [0], [0, 1, 0, 0, 1, 0], [1], [1]>} : vector<8x4x8xf32>, vector<8x4x8xf32>, vector<4x8x8xf32> -> vector<4x8x8xf32>
    "tpu.trace_stop"() : () -> ()
    %22 = vector.shape_cast %15 : vector<8x8xf32> to vector<1x8x8xf32>
    %23 = vector.broadcast %22 : vector<1x8x8xf32> to vector<4x8x8xf32>
    %24 = arith.addf %21, %23 : vector<4x8x8xf32>
    %cst_14 = arith.constant dense<0xFF800000> : vector<4x8xf32>
    %25 = vector.multi_reduction <maximumf>, %24, %cst_14 [2] : vector<4x8x8xf32> to vector<4x8xf32>
    %26 = vector.shape_cast %25 : vector<4x8xf32> to vector<4x8x1xf32>
    %cst_15 = arith.constant -1.000000e+30 : f32
    %27 = vector.broadcast %cst_15 : f32 to vector<4x8x1xf32>
    %28 = arith.maximumf %26, %27 : vector<4x8x1xf32>
    %29 = vector.broadcast %28 : vector<4x8x1xf32> to vector<4x8x8xf32>
    %30 = arith.subf %24, %29 : vector<4x8x8xf32>
    %31 = math.exp %30 : vector<4x8x8xf32>
    %cst_16 = arith.constant dense<0.000000e+00> : vector<4x8xf32>
    %32 = vector.multi_reduction <add>, %31, %cst_16 [2] : vector<4x8x8xf32> to vector<4x8xf32>
    %33 = vector.shape_cast %32 : vector<4x8xf32> to vector<4x8x1xf32>
    %cst_17 = arith.constant 1.000000e-30 : f32
    %34 = vector.broadcast %cst_17 : f32 to vector<4x8x1xf32>
    %35 = arith.maximumf %33, %34 : vector<4x8x1xf32>
    %36 = tpu.reciprocal %35 {approx = true} : vector<4x8x1xf32> -> vector<4x8x1xf32>
    %37 = vector.broadcast %36 : vector<4x8x1xf32> to vector<4x8x8xf32>
    %38 = arith.mulf %31, %37 : vector<4x8x8xf32>
    "tpu.trace_start"() <{level = 10 : i32, message = "hlm,mhd->lhd"}> : () -> ()
    %cst_18 = arith.constant dense<0.000000e+00> : vector<4x8x8xf32>
    %39 = tpu.matmul %20, %38, %cst_18 {dimension_numbers = #tpu.dot_dimension_numbers<[0], [2], [2], [1], [0, 1, 0, 2, 1, 1], [1], [0]>} : vector<8x4x8xf32>, vector<4x8x8xf32>, vector<4x8x8xf32> -> vector<4x8x8xf32>
    %40 = tpu.transpose %39, [2, 0, 1] : vector<4x8x8xf32> -> vector<8x4x8xf32>
    "tpu.trace_stop"() : () -> ()
    %41 = vector.shape_cast %40 : vector<8x4x8xf32> to vector<8x32xf32>
    %c0_19 = arith.constant 0 : index
    %c0_20 = arith.constant 0 : index
    %c0_21 = arith.constant 0 : index
    %42 = vector.load %arg10[%c0_19, %c0_20, %c0_21] : memref<1x32x32xf32, #tpu.memory_space<vmem>>, vector<1x32x32xf32>
    %43 = vector.shape_cast %42 : vector<1x32x32xf32> to vector<32x32xf32>
    %cst_22 = arith.constant dense<0.000000e+00> : vector<8x32xf32>
    %44 = tpu.matmul %41, %43, %cst_22 {dimension_numbers = #tpu.dot_dimension_numbers<[1], [0], [0], [1], [0, 0, 1, 1], [], []>} : vector<8x32xf32>, vector<32x32xf32>, vector<8x32xf32> -> vector<8x32xf32>
    %45 = arith.addf %3, %44 : vector<8x32xf32>
    %c0_23 = arith.constant 0 : index
    %c0_24 = arith.constant 0 : index
    %c0_25 = arith.constant 0 : index
    %46 = vector.load %arg11[%c0_23, %c0_24, %c0_25] : memref<1x1x32xf32, #tpu.memory_space<vmem>>, vector<1x1x32xf32>
    %47 = vector.shape_cast %46 : vector<1x1x32xf32> to vector<1x32xf32>
    %48 = vector.broadcast %47 : vector<1x32xf32> to vector<8x32xf32>
    %49 = arith.addf %45, %48 : vector<8x32xf32>
    %c0_26 = arith.constant 0 : index
    %c0_27 = arith.constant 0 : index
    %c0_28 = arith.constant 0 : index
    %50 = vector.load %arg12[%c0_26, %c0_27, %c0_28] : memref<1x1x32xf32, #tpu.memory_space<vmem>>, vector<1x1x32xf32>
    %51 = vector.shape_cast %50 : vector<1x1x32xf32> to vector<1x32xf32>
    %c0_29 = arith.constant 0 : index
    %c0_30 = arith.constant 0 : index
    %c0_31 = arith.constant 0 : index
    %52 = vector.load %arg13[%c0_29, %c0_30, %c0_31] : memref<1x1x32xf32, #tpu.memory_space<vmem>>, vector<1x1x32xf32>
    %53 = vector.shape_cast %52 : vector<1x1x32xf32> to vector<1x32xf32>
    %cst_32 = arith.constant dense<0.000000e+00> : vector<8xf32>
    %54 = vector.multi_reduction <add>, %49, %cst_32 [1] : vector<8x32xf32> to vector<8xf32>
    %55 = vector.shape_cast %54 : vector<8xf32> to vector<8x1xf32>
    %cst_33 = arith.constant 3.200000e+01 : f32
    %56 = vector.broadcast %cst_33 : f32 to vector<8x1xf32>
    %57 = arith.divf %55, %56 : vector<8x1xf32>
    %58 = arith.mulf %49, %49 : vector<8x32xf32>
    %cst_34 = arith.constant dense<0.000000e+00> : vector<8xf32>
    %59 = vector.multi_reduction <add>, %58, %cst_34 [1] : vector<8x32xf32> to vector<8xf32>
    %60 = vector.shape_cast %59 : vector<8xf32> to vector<8x1xf32>
    %cst_35 = arith.constant 3.200000e+01 : f32
    %61 = vector.broadcast %cst_35 : f32 to vector<8x1xf32>
    %62 = arith.divf %60, %61 : vector<8x1xf32>
    %63 = arith.mulf %57, %57 : vector<8x1xf32>
    %64 = arith.subf %62, %63 : vector<8x1xf32>
    %65 = vector.broadcast %57 : vector<8x1xf32> to vector<8x32xf32>
    %66 = arith.subf %49, %65 : vector<8x32xf32>
    %cst_36 = arith.constant 9.99999974E-6 : f32
    %67 = vector.broadcast %cst_36 : f32 to vector<8x1xf32>
    %68 = arith.addf %64, %67 : vector<8x1xf32>
    %69 = math.rsqrt %68 : vector<8x1xf32>
    %70 = vector.broadcast %69 : vector<8x1xf32> to vector<8x32xf32>
    %71 = arith.mulf %66, %70 : vector<8x32xf32>
    %72 = vector.broadcast %51 : vector<1x32xf32> to vector<8x32xf32>
    %73 = arith.mulf %71, %72 : vector<8x32xf32>
    %74 = vector.broadcast %53 : vector<1x32xf32> to vector<8x32xf32>
    %75 = arith.addf %73, %74 : vector<8x32xf32>
    %c0_37 = arith.constant 0 : index
    %c0_38 = arith.constant 0 : index
    %c0_39 = arith.constant 0 : index
    %76 = vector.load %arg14[%c0_37, %c0_38, %c0_39] : memref<1x32x32xf32, #tpu.memory_space<vmem>>, vector<1x32x32xf32>
    %77 = vector.shape_cast %76 : vector<1x32x32xf32> to vector<32x32xf32>
    %cst_40 = arith.constant dense<0.000000e+00> : vector<8x32xf32>
    %78 = tpu.matmul %75, %77, %cst_40 {dimension_numbers = #tpu.dot_dimension_numbers<[1], [0], [0], [1], [0, 0, 1, 1], [], []>} : vector<8x32xf32>, vector<32x32xf32>, vector<8x32xf32> -> vector<8x32xf32>
    %c0_41 = arith.constant 0 : index
    %c0_42 = arith.constant 0 : index
    %c0_43 = arith.constant 0 : index
    %79 = vector.load %arg15[%c0_41, %c0_42, %c0_43] : memref<1x1x32xf32, #tpu.memory_space<vmem>>, vector<1x1x32xf32>
    %80 = vector.shape_cast %79 : vector<1x1x32xf32> to vector<1x32xf32>
    %81 = vector.broadcast %80 : vector<1x32xf32> to vector<8x32xf32>
    %82 = arith.addf %78, %81 : vector<8x32xf32>
    %c0_44 = arith.constant 0 : index
    %c0_45 = arith.constant 0 : index
    %c0_46 = arith.constant 0 : index
    %83 = vector.load %arg16[%c0_44, %c0_45, %c0_46] : memref<1x32x64xf32, #tpu.memory_space<vmem>>, vector<1x32x64xf32>
    %84 = vector.shape_cast %83 : vector<1x32x64xf32> to vector<32x64xf32>
    %cst_47 = arith.constant dense<0.000000e+00> : vector<8x64xf32>
    %85 = tpu.matmul %4, %84, %cst_47 {dimension_numbers = #tpu.dot_dimension_numbers<[1], [0], [0], [1], [0, 0, 1, 1], [], []>} : vector<8x32xf32>, vector<32x64xf32>, vector<8x64xf32> -> vector<8x64xf32>
    %c0_48 = arith.constant 0 : index
    %c0_49 = arith.constant 0 : index
    %c0_50 = arith.constant 0 : index
    %86 = vector.load %arg17[%c0_48, %c0_49, %c0_50] : memref<1x1x64xf32, #tpu.memory_space<vmem>>, vector<1x1x64xf32>
    %87 = vector.shape_cast %86 : vector<1x1x64xf32> to vector<1x64xf32>
    %88 = vector.broadcast %87 : vector<1x64xf32> to vector<8x64xf32>
    %89 = arith.addf %85, %88 : vector<8x64xf32>
    %90 = vector.extract_strided_slice %89 {offsets = [0, 0], sizes = [8, 32], strides = [1, 1]} : vector<8x64xf32> to vector<8x32xf32>
    %91 = vector.extract_strided_slice %89 {offsets = [0, 32], sizes = [8, 32], strides = [1, 1]} : vector<8x64xf32> to vector<8x32xf32>
    %c0_51 = arith.constant 0 : index
    %c0_52 = arith.constant 0 : index
    %92 = vector.load %arg7[%c0_51, %c0_52] : memref<8x8xf32, #tpu.memory_space<vmem>>, vector<8x8xf32>
    %cst_53 = arith.constant 0.353553385 : f32
    %93 = vector.broadcast %cst_53 : f32 to vector<8x32xf32>
    %94 = arith.mulf %82, %93 : vector<8x32xf32>
    %95 = vector.shape_cast %94 : vector<8x32xf32> to vector<8x4x8xf32>
    %96 = vector.shape_cast %90 : vector<8x32xf32> to vector<8x4x8xf32>
    %97 = vector.shape_cast %91 : vector<8x32xf32> to vector<8x4x8xf32>
    "tpu.trace_start"() <{level = 10 : i32, message = "lhd,mhd->hlm"}> : () -> ()
    %cst_54 = arith.constant dense<0.000000e+00> : vector<4x8x8xf32>
    %98 = tpu.matmul %95, %96, %cst_54 {dimension_numbers = #tpu.dot_dimension_numbers<[2], [2], [0], [0], [0, 1, 0, 0, 1, 0], [1], [1]>} : vector<8x4x8xf32>, vector<8x4x8xf32>, vector<4x8x8xf32> -> vector<4x8x8xf32>
    "tpu.trace_stop"() : () -> ()
    %99 = vector.shape_cast %92 : vector<8x8xf32> to vector<1x8x8xf32>
    %100 = vector.broadcast %99 : vector<1x8x8xf32> to vector<4x8x8xf32>
    %101 = arith.addf %98, %100 : vector<4x8x8xf32>
    %cst_55 = arith.constant dense<0xFF800000> : vector<4x8xf32>
    %102 = vector.multi_reduction <maximumf>, %101, %cst_55 [2] : vector<4x8x8xf32> to vector<4x8xf32>
    %103 = vector.shape_cast %102 : vector<4x8xf32> to vector<4x8x1xf32>
    %cst_56 = arith.constant -1.000000e+30 : f32
    %104 = vector.broadcast %cst_56 : f32 to vector<4x8x1xf32>
    %105 = arith.maximumf %103, %104 : vector<4x8x1xf32>
    %106 = vector.broadcast %105 : vector<4x8x1xf32> to vector<4x8x8xf32>
    %107 = arith.subf %101, %106 : vector<4x8x8xf32>
    %108 = math.exp %107 : vector<4x8x8xf32>
    %cst_57 = arith.constant dense<0.000000e+00> : vector<4x8xf32>
    %109 = vector.multi_reduction <add>, %108, %cst_57 [2] : vector<4x8x8xf32> to vector<4x8xf32>
    %110 = vector.shape_cast %109 : vector<4x8xf32> to vector<4x8x1xf32>
    %cst_58 = arith.constant 1.000000e-30 : f32
    %111 = vector.broadcast %cst_58 : f32 to vector<4x8x1xf32>
    %112 = arith.maximumf %110, %111 : vector<4x8x1xf32>
    %113 = tpu.reciprocal %112 {approx = true} : vector<4x8x1xf32> -> vector<4x8x1xf32>
    %114 = vector.broadcast %113 : vector<4x8x1xf32> to vector<4x8x8xf32>
    %115 = arith.mulf %108, %114 : vector<4x8x8xf32>
    "tpu.trace_start"() <{level = 10 : i32, message = "hlm,mhd->lhd"}> : () -> ()
    %cst_59 = arith.constant dense<0.000000e+00> : vector<4x8x8xf32>
    %116 = tpu.matmul %97, %115, %cst_59 {dimension_numbers = #tpu.dot_dimension_numbers<[0], [2], [2], [1], [0, 1, 0, 2, 1, 1], [1], [0]>} : vector<8x4x8xf32>, vector<4x8x8xf32>, vector<4x8x8xf32> -> vector<4x8x8xf32>
    %117 = tpu.transpose %116, [2, 0, 1] : vector<4x8x8xf32> -> vector<8x4x8xf32>
    "tpu.trace_stop"() : () -> ()
    %118 = vector.shape_cast %117 : vector<8x4x8xf32> to vector<8x32xf32>
    %c0_60 = arith.constant 0 : index
    %c0_61 = arith.constant 0 : index
    %c0_62 = arith.constant 0 : index
    %119 = vector.load %arg18[%c0_60, %c0_61, %c0_62] : memref<1x32x32xf32, #tpu.memory_space<vmem>>, vector<1x32x32xf32>
    %120 = vector.shape_cast %119 : vector<1x32x32xf32> to vector<32x32xf32>
    %cst_63 = arith.constant dense<0.000000e+00> : vector<8x32xf32>
    %121 = tpu.matmul %118, %120, %cst_63 {dimension_numbers = #tpu.dot_dimension_numbers<[1], [0], [0], [1], [0, 0, 1, 1], [], []>} : vector<8x32xf32>, vector<32x32xf32>, vector<8x32xf32> -> vector<8x32xf32>
    %122 = arith.addf %75, %121 : vector<8x32xf32>
    %c0_64 = arith.constant 0 : index
    %c0_65 = arith.constant 0 : index
    %c0_66 = arith.constant 0 : index
    %123 = vector.load %arg19[%c0_64, %c0_65, %c0_66] : memref<1x1x32xf32, #tpu.memory_space<vmem>>, vector<1x1x32xf32>
    %124 = vector.shape_cast %123 : vector<1x1x32xf32> to vector<1x32xf32>
    %125 = vector.broadcast %124 : vector<1x32xf32> to vector<8x32xf32>
    %126 = arith.addf %122, %125 : vector<8x32xf32>
    %c0_67 = arith.constant 0 : index
    %c0_68 = arith.constant 0 : index
    %c0_69 = arith.constant 0 : index
    %127 = vector.load %arg20[%c0_67, %c0_68, %c0_69] : memref<1x1x32xf32, #tpu.memory_space<vmem>>, vector<1x1x32xf32>
    %128 = vector.shape_cast %127 : vector<1x1x32xf32> to vector<1x32xf32>
    %c0_70 = arith.constant 0 : index
    %c0_71 = arith.constant 0 : index
    %c0_72 = arith.constant 0 : index
    %129 = vector.load %arg21[%c0_70, %c0_71, %c0_72] : memref<1x1x32xf32, #tpu.memory_space<vmem>>, vector<1x1x32xf32>
    %130 = vector.shape_cast %129 : vector<1x1x32xf32> to vector<1x32xf32>
    %cst_73 = arith.constant dense<0.000000e+00> : vector<8xf32>
    %131 = vector.multi_reduction <add>, %126, %cst_73 [1] : vector<8x32xf32> to vector<8xf32>
    %132 = vector.shape_cast %131 : vector<8xf32> to vector<8x1xf32>
    %cst_74 = arith.constant 3.200000e+01 : f32
    %133 = vector.broadcast %cst_74 : f32 to vector<8x1xf32>
    %134 = arith.divf %132, %133 : vector<8x1xf32>
    %135 = arith.mulf %126, %126 : vector<8x32xf32>
    %cst_75 = arith.constant dense<0.000000e+00> : vector<8xf32>
    %136 = vector.multi_reduction <add>, %135, %cst_75 [1] : vector<8x32xf32> to vector<8xf32>
    %137 = vector.shape_cast %136 : vector<8xf32> to vector<8x1xf32>
    %cst_76 = arith.constant 3.200000e+01 : f32
    %138 = vector.broadcast %cst_76 : f32 to vector<8x1xf32>
    %139 = arith.divf %137, %138 : vector<8x1xf32>
    %140 = arith.mulf %134, %134 : vector<8x1xf32>
    %141 = arith.subf %139, %140 : vector<8x1xf32>
    %142 = vector.broadcast %134 : vector<8x1xf32> to vector<8x32xf32>
    %143 = arith.subf %126, %142 : vector<8x32xf32>
    %cst_77 = arith.constant 9.99999974E-6 : f32
    %144 = vector.broadcast %cst_77 : f32 to vector<8x1xf32>
    %145 = arith.addf %141, %144 : vector<8x1xf32>
    %146 = math.rsqrt %145 : vector<8x1xf32>
    %147 = vector.broadcast %146 : vector<8x1xf32> to vector<8x32xf32>
    %148 = arith.mulf %143, %147 : vector<8x32xf32>
    %149 = vector.broadcast %128 : vector<1x32xf32> to vector<8x32xf32>
    %150 = arith.mulf %148, %149 : vector<8x32xf32>
    %151 = vector.broadcast %130 : vector<1x32xf32> to vector<8x32xf32>
    %152 = arith.addf %150, %151 : vector<8x32xf32>
    %c0_78 = arith.constant 0 : index
    %c0_79 = arith.constant 0 : index
    %c0_80 = arith.constant 0 : index
    %153 = vector.load %arg22[%c0_78, %c0_79, %c0_80] : memref<1x32x64xf32, #tpu.memory_space<vmem>>, vector<1x32x64xf32>
    %154 = vector.shape_cast %153 : vector<1x32x64xf32> to vector<32x64xf32>
    %cst_81 = arith.constant dense<0.000000e+00> : vector<8x64xf32>
    %155 = tpu.matmul %152, %154, %cst_81 {dimension_numbers = #tpu.dot_dimension_numbers<[1], [0], [0], [1], [0, 0, 1, 1], [], []>} : vector<8x32xf32>, vector<32x64xf32>, vector<8x64xf32> -> vector<8x64xf32>
    %c0_82 = arith.constant 0 : index
    %c0_83 = arith.constant 0 : index
    %c0_84 = arith.constant 0 : index
    %156 = vector.load %arg23[%c0_82, %c0_83, %c0_84] : memref<1x1x64xf32, #tpu.memory_space<vmem>>, vector<1x1x64xf32>
    %157 = vector.shape_cast %156 : vector<1x1x64xf32> to vector<1x64xf32>
    %158 = vector.broadcast %157 : vector<1x64xf32> to vector<8x64xf32>
    %159 = arith.addf %155, %158 : vector<8x64xf32>
    %cst_85 = arith.constant 0.000000e+00 : f32
    %160 = vector.broadcast %cst_85 : f32 to vector<8x64xf32>
    %161 = arith.maximumf %159, %160 : vector<8x64xf32>
    %c0_86 = arith.constant 0 : index
    %c0_87 = arith.constant 0 : index
    %c0_88 = arith.constant 0 : index
    %162 = vector.load %arg24[%c0_86, %c0_87, %c0_88] : memref<1x64x32xf32, #tpu.memory_space<vmem>>, vector<1x64x32xf32>
    %163 = vector.shape_cast %162 : vector<1x64x32xf32> to vector<64x32xf32>
    %cst_89 = arith.constant dense<0.000000e+00> : vector<8x32xf32>
    %164 = tpu.matmul %161, %163, %cst_89 {dimension_numbers = #tpu.dot_dimension_numbers<[1], [0], [0], [1], [0, 0, 1, 1], [], []>} : vector<8x64xf32>, vector<64x32xf32>, vector<8x32xf32> -> vector<8x32xf32>
    %165 = arith.addf %152, %164 : vector<8x32xf32>
    %c0_90 = arith.constant 0 : index
    %c0_91 = arith.constant 0 : index
    %c0_92 = arith.constant 0 : index
    %166 = vector.load %arg25[%c0_90, %c0_91, %c0_92] : memref<1x1x32xf32, #tpu.memory_space<vmem>>, vector<1x1x32xf32>
    %167 = vector.shape_cast %166 : vector<1x1x32xf32> to vector<1x32xf32>
    %168 = vector.broadcast %167 : vector<1x32xf32> to vector<8x32xf32>
    %169 = arith.addf %165, %168 : vector<8x32xf32>
    %c0_93 = arith.constant 0 : index
    %c0_94 = arith.constant 0 : index
    %c0_95 = arith.constant 0 : index
    %170 = vector.load %arg26[%c0_93, %c0_94, %c0_95] : memref<1x1x32xf32, #tpu.memory_space<vmem>>, vector<1x1x32xf32>
    %171 = vector.shape_cast %170 : vector<1x1x32xf32> to vector<1x32xf32>
    %c0_96 = arith.constant 0 : index
    %c0_97 = arith.constant 0 : index
    %c0_98 = arith.constant 0 : index
    %172 = vector.load %arg27[%c0_96, %c0_97, %c0_98] : memref<1x1x32xf32, #tpu.memory_space<vmem>>, vector<1x1x32xf32>
    %173 = vector.shape_cast %172 : vector<1x1x32xf32> to vector<1x32xf32>
    %cst_99 = arith.constant dense<0.000000e+00> : vector<8xf32>
    %174 = vector.multi_reduction <add>, %169, %cst_99 [1] : vector<8x32xf32> to vector<8xf32>
    %175 = vector.shape_cast %174 : vector<8xf32> to vector<8x1xf32>
    %cst_100 = arith.constant 3.200000e+01 : f32
    %176 = vector.broadcast %cst_100 : f32 to vector<8x1xf32>
    %177 = arith.divf %175, %176 : vector<8x1xf32>
    %178 = arith.mulf %169, %169 : vector<8x32xf32>
    %cst_101 = arith.constant dense<0.000000e+00> : vector<8xf32>
    %179 = vector.multi_reduction <add>, %178, %cst_101 [1] : vector<8x32xf32> to vector<8xf32>
    %180 = vector.shape_cast %179 : vector<8xf32> to vector<8x1xf32>
    %cst_102 = arith.constant 3.200000e+01 : f32
    %181 = vector.broadcast %cst_102 : f32 to vector<8x1xf32>
    %182 = arith.divf %180, %181 : vector<8x1xf32>
    %183 = arith.mulf %177, %177 : vector<8x1xf32>
    %184 = arith.subf %182, %183 : vector<8x1xf32>
    %185 = vector.broadcast %177 : vector<8x1xf32> to vector<8x32xf32>
    %186 = arith.subf %169, %185 : vector<8x32xf32>
    %cst_103 = arith.constant 9.99999974E-6 : f32
    %187 = vector.broadcast %cst_103 : f32 to vector<8x1xf32>
    %188 = arith.addf %184, %187 : vector<8x1xf32>
    %189 = math.rsqrt %188 : vector<8x1xf32>
    %190 = vector.broadcast %189 : vector<8x1xf32> to vector<8x32xf32>
    %191 = arith.mulf %186, %190 : vector<8x32xf32>
    %192 = vector.broadcast %171 : vector<1x32xf32> to vector<8x32xf32>
    %193 = arith.mulf %191, %192 : vector<8x32xf32>
    %194 = vector.broadcast %173 : vector<1x32xf32> to vector<8x32xf32>
    %195 = arith.addf %193, %194 : vector<8x32xf32>
    %c0_104 = arith.constant 0 : index
    %c0_105 = arith.constant 0 : index
    %196 = vector.load %arg31[%c0_104, %c0_105] : memref<8x32xf32, #tpu.memory_space<vmem>>, vector<8x32xf32>
    tpu.vector_store %arg31[%c0_104, %c0_105], %195 {strides = array<i32>} : memref<8x32xf32, #tpu.memory_space<vmem>>, vector<8x32xf32>,
    %c1_i32 = arith.constant 1 : i32
    %197 = arith.cmpi eq, %arg0, %c1_i32 : i32
    %198 = arith.extui %197 : i1 to i32
    %c0_i32_106 = arith.constant 0 : i32
    %199 = arith.cmpi ne, %198, %c0_i32_106 : i32
    scf.if %199 {
      %200 = vector.shape_cast %195 : vector<8x32xf32> to vector<4x2x32xf32>
      %cst_107 = arith.constant dense<0.000000e+00> : vector<2x32xf32>
      %201 = vector.multi_reduction <add>, %200, %cst_107 [0] : vector<4x2x32xf32> to vector<2x32xf32>
      %cst_108 = arith.constant 4.000000e+00 : f32
      %202 = vector.broadcast %cst_108 : f32 to vector<2x32xf32>
      %203 = arith.divf %201, %202 : vector<2x32xf32>
      %c0_109 = arith.constant 0 : index
      %c0_110 = arith.constant 0 : index
      %204 = vector.load %arg28[%c0_109, %c0_110] : memref<32x16xf32, #tpu.memory_space<vmem>>, vector<32x16xf32>
      %cst_111 = arith.constant dense<0.000000e+00> : vector<2x16xf32>
      %205 = tpu.matmul %203, %204, %cst_111 {dimension_numbers = #tpu.dot_dimension_numbers<[1], [0], [0], [1], [0, 0, 1, 1], [], []>} : vector<2x32xf32>, vector<32x16xf32>, vector<2x16xf32> -> vector<2x16xf32>
      %c0_112 = arith.constant 0 : index
      %c0_113 = arith.constant 0 : index
      %206 = vector.load %arg29[%c0_112, %c0_113] : memref<1x16xf32, #tpu.memory_space<vmem>>, vector<1x16xf32>
      %207 = vector.broadcast %206 : vector<1x16xf32> to vector<2x16xf32>
      %208 = arith.addf %205, %207 : vector<2x16xf32>
      %c0_114 = arith.constant 0 : index
      %c0_115 = arith.constant 0 : index
      %209 = vector.load %arg30[%c0_114, %c0_115] : memref<2x16xf32, #tpu.memory_space<vmem>>, vector<2x16xf32>
      tpu.vector_store %arg30[%c0_114, %c0_115], %208 {strides = array<i32>} : memref<2x16xf32, #tpu.memory_space<vmem>>, vector<2x16xf32>,
    } else {
    }
    return
  }
  func.func @transform_0(%arg0: i32) -> (i32, i32) {
    %c0_i32 = arith.constant 0 : i32
    %c0_i32_0 = arith.constant 0 : i32
    %c0_i32_1 = arith.constant 0 : i32
    return %c0_i32, %c0_i32_0 : i32, i32
  }
  func.func @transform_1(%arg0: i32) -> (i32, i32) {
    %c0_i32 = arith.constant 0 : i32
    %c0_i32_0 = arith.constant 0 : i32
    %c0_i32_1 = arith.constant 0 : i32
    return %c0_i32, %c0_i32_0 : i32, i32
  }
  func.func @transform_2(%arg0: i32) -> (i32, i32) {
    %c0_i32 = arith.constant 0 : i32
    %c0_i32_0 = arith.constant 0 : i32
    %c0_i32_1 = arith.constant 0 : i32
    return %c0_i32, %c0_i32_0 : i32, i32
  }
  func.func @transform_3(%arg0: i32) -> (i32, i32) {
    %c0_i32 = arith.constant 0 : i32
    %c0_i32_0 = arith.constant 0 : i32
    %c0_i32_1 = arith.constant 0 : i32
    return %c0_i32, %c0_i32_0 : i32, i32
  }
  func.func @transform_4(%arg0: i32) -> (i32, i32) {
    %c0_i32 = arith.constant 0 : i32
    %c0_i32_0 = arith.constant 0 : i32
    %c0_i32_1 = arith.constant 0 : i32
    return %c0_i32, %c0_i32_0 : i32, i32
  }
  func.func @transform_5(%arg0: i32) -> (i32, i32) {
    %c0_i32 = arith.constant 0 : i32
    %c0_i32_0 = arith.constant 0 : i32
    %c0_i32_1 = arith.constant 0 : i32
    return %c0_i32, %c0_i32_0 : i32, i32
  }
  func.func @transform_6(%arg0: i32) -> (i32, i32) {
    %c0_i32 = arith.constant 0 : i32
    %c0_i32_0 = arith.constant 0 : i32
    %c0_i32_1 = arith.constant 0 : i32
    return %c0_i32, %c0_i32_0 : i32, i32
  }
  func.func @transform_7(%arg0: i32) -> (i32, i32, i32) {
    %c0_i32 = arith.constant 0 : i32
    %c0_i32_0 = arith.constant 0 : i32
    %c0_i32_1 = arith.constant 0 : i32
    return %arg0, %c0_i32, %c0_i32_0 : i32, i32, i32
  }
  func.func @transform_8(%arg0: i32) -> (i32, i32, i32) {
    %c0_i32 = arith.constant 0 : i32
    %c0_i32_0 = arith.constant 0 : i32
    %c0_i32_1 = arith.constant 0 : i32
    return %arg0, %c0_i32, %c0_i32_0 : i32, i32, i32
  }
  func.func @transform_9(%arg0: i32) -> (i32, i32, i32) {
    %c0_i32 = arith.constant 0 : i32
    %c0_i32_0 = arith.constant 0 : i32
    %c0_i32_1 = arith.constant 0 : i32
    return %arg0, %c0_i32, %c0_i32_0 : i32, i32, i32
  }
  func.func @transform_10(%arg0: i32) -> (i32, i32, i32) {
    %c0_i32 = arith.constant 0 : i32
    %c0_i32_0 = arith.constant 0 : i32
    %c0_i32_1 = arith.constant 0 : i32
    return %arg0, %c0_i32, %c0_i32_0 : i32, i32, i32
  }
  func.func @transform_11(%arg0: i32) -> (i32, i32, i32) {
    %c0_i32 = arith.constant 0 : i32
    %c0_i32_0 = arith.constant 0 : i32
    %c0_i32_1 = arith.constant 0 : i32
    return %arg0, %c0_i32, %c0_i32_0 : i32, i32, i32
  }
  func.func @transform_12(%arg0: i32) -> (i32, i32, i32) {
    %c0_i32 = arith.constant 0 : i32
    %c0_i32_0 = arith.constant 0 : i32
    %c0_i32_1 = arith.constant 0 : i32
    return %arg0, %c0_i32, %c0_i32_0 : i32, i32, i32
  }
  func.func @transform_13(%arg0: i32) -> (i32, i32, i32) {
    %c0_i32 = arith.constant 0 : i32
    %c0_i32_0 = arith.constant 0 : i32
    %c0_i32_1 = arith.constant 0 : i32
    return %arg0, %c0_i32, %c0_i32_0 : i32, i32, i32
  }
  func.func @transform_14(%arg0: i32) -> (i32, i32, i32) {
    %c0_i32 = arith.constant 0 : i32
    %c0_i32_0 = arith.constant 0 : i32
    %c0_i32_1 = arith.constant 0 : i32
    return %arg0, %c0_i32, %c0_i32_0 : i32, i32, i32
  }
  func.func @transform_15(%arg0: i32) -> (i32, i32, i32) {
    %c0_i32 = arith.constant 0 : i32
    %c0_i32_0 = arith.constant 0 : i32
    %c0_i32_1 = arith.constant 0 : i32
    return %arg0, %c0_i32, %c0_i32_0 : i32, i32, i32
  }
  func.func @transform_16(%arg0: i32) -> (i32, i32, i32) {
    %c0_i32 = arith.constant 0 : i32
    %c0_i32_0 = arith.constant 0 : i32
    %c0_i32_1 = arith.constant 0 : i32
    return %arg0, %c0_i32, %c0_i32_0 : i32, i32, i32
  }
  func.func @transform_17(%arg0: i32) -> (i32, i32, i32) {
    %c0_i32 = arith.constant 0 : i32
    %c0_i32_0 = arith.constant 0 : i32
    %c0_i32_1 = arith.constant 0 : i32
    return %arg0, %c0_i32, %c0_i32_0 : i32, i32, i32
  }
  func.func @transform_18(%arg0: i32) -> (i32, i32, i32) {
    %c0_i32 = arith.constant 0 : i32
    %c0_i32_0 = arith.constant 0 : i32
    %c0_i32_1 = arith.constant 0 : i32
    return %arg0, %c0_i32, %c0_i32_0 : i32, i32, i32
  }
  func.func @transform_19(%arg0: i32) -> (i32, i32, i32) {
    %c0_i32 = arith.constant 0 : i32
    %c0_i32_0 = arith.constant 0 : i32
    %c0_i32_1 = arith.constant 0 : i32
    return %arg0, %c0_i32, %c0_i32_0 : i32, i32, i32
  }
  func.func @transform_20(%arg0: i32) -> (i32, i32, i32) {
    %c0_i32 = arith.constant 0 : i32
    %c0_i32_0 = arith.constant 0 : i32
    %c0_i32_1 = arith.constant 0 : i32
    return %arg0, %c0_i32, %c0_i32_0 : i32, i32, i32
  }
  func.func @transform_21(%arg0: i32) -> (i32, i32, i32) {
    %c0_i32 = arith.constant 0 : i32
    %c0_i32_0 = arith.constant 0 : i32
    %c0_i32_1 = arith.constant 0 : i32
    return %arg0, %c0_i32, %c0_i32_0 : i32, i32, i32
  }
  func.func @transform_22(%arg0: i32) -> (i32, i32, i32) {
    %c0_i32 = arith.constant 0 : i32
    %c0_i32_0 = arith.constant 0 : i32
    %c0_i32_1 = arith.constant 0 : i32
    return %arg0, %c0_i32, %c0_i32_0 : i32, i32, i32
  }
  func.func @transform_23(%arg0: i32) -> (i32, i32, i32) {
    %c0_i32 = arith.constant 0 : i32
    %c0_i32_0 = arith.constant 0 : i32
    %c0_i32_1 = arith.constant 0 : i32
    return %arg0, %c0_i32, %c0_i32_0 : i32, i32, i32
  }
  func.func @transform_24(%arg0: i32) -> (i32, i32, i32) {
    %c0_i32 = arith.constant 0 : i32
    %c0_i32_0 = arith.constant 0 : i32
    %c0_i32_1 = arith.constant 0 : i32
    return %arg0, %c0_i32, %c0_i32_0 : i32, i32, i32
  }
  func.func @transform_25(%arg0: i32) -> (i32, i32, i32) {
    %c0_i32 = arith.constant 0 : i32
    %c0_i32_0 = arith.constant 0 : i32
    %c0_i32_1 = arith.constant 0 : i32
    return %arg0, %c0_i32, %c0_i32_0 : i32, i32, i32
  }
  func.func @transform_26(%arg0: i32) -> (i32, i32, i32) {
    %c0_i32 = arith.constant 0 : i32
    %c0_i32_0 = arith.constant 0 : i32
    %c0_i32_1 = arith.constant 0 : i32
    return %arg0, %c0_i32, %c0_i32_0 : i32, i32, i32
  }
  func.func @transform_27(%arg0: i32) -> (i32, i32) {
    %c0_i32 = arith.constant 0 : i32
    %c0_i32_0 = arith.constant 0 : i32
    %c0_i32_1 = arith.constant 0 : i32
    return %c0_i32, %c0_i32_0 : i32, i32
  }
  func.func @transform_28(%arg0: i32) -> (i32, i32) {
    %c0_i32 = arith.constant 0 : i32
    %c0_i32_0 = arith.constant 0 : i32
    %c0_i32_1 = arith.constant 0 : i32
    return %c0_i32, %c0_i32_0 : i32, i32
  }
  func.func @transform_29(%arg0: i32) -> (i32, i32) {
    %c0_i32 = arith.constant 0 : i32
    %c0_i32_0 = arith.constant 0 : i32
    %c0_i32_1 = arith.constant 0 : i32
    return %c0_i32, %c0_i32_0 : i32, i32
  }
}

</mosaic_0001>

<llo_original>
// kernel: tpu_custom_call.1
$region0: #{tpu_custom_call.1}
  #allocation0 [shape = 'u32[]', space=smem, size = 0x4, offset = 0x4, fixed_abs, tag = 'smem constant byte address 0x4 - core index']
  #allocation1 [shape = 'u32[72,128]{1,0:T(1,128)}', space=vmem, size = 0x9000, scoped, tag = 'internal scratch']
  #allocation2 [shape = 'f32[8,32]{1,0:T(8,128)}', space=vmem, size = 0x1000, scoped, tag = 'scratch operand']
  %s0 = inlined_call_operand.smem [shape: u32[30], index: -1, kind: input, shape index: {}]
  %s1 = sld [smem:[%s0]]
  %s2 = scalar_lea.smem %s0, 1
  %s3 = sld [smem:[%s2]]
  %s4 = scalar_lea.smem %s0, 2
  %s5 = sld [smem:[%s4]]
  %s6 = scalar_lea.smem %s0, 3
  %s7 = sld [smem:[%s6]]
  %s8 = scalar_lea.smem %s0, 4
  %s9 = sld [smem:[%s8]]
  %s10 = scalar_lea.smem %s0, 5
  %s11 = sld [smem:[%s10]]
  %s12 = scalar_lea.smem %s0, 6
  %s13 = sld [smem:[%s12]]
  %s14 = scalar_lea.smem %s0, 7
  %s15 = sld [smem:[%s14]]
  %s16 = scalar_lea.smem %s0, 8
  %s17 = sld [smem:[%s16]]
  %s18 = scalar_lea.smem %s0, 9
  %s19 = sld [smem:[%s18]]
  %s20 = scalar_lea.smem %s0, 10
  %s21 = sld [smem:[%s20]]
  %s22 = scalar_lea.smem %s0, 11
  %s23 = sld [smem:[%s22]]
  %s24 = scalar_lea.smem %s0, 12
  %s25 = sld [smem:[%s24]]
  %s26 = scalar_lea.smem %s0, 13
  %s27 = sld [smem:[%s26]]
  %s28 = scalar_lea.smem %s0, 14
  %s29 = sld [smem:[%s28]]
  %s30 = scalar_lea.smem %s0, 15
  %s31 = sld [smem:[%s30]]
  %s32 = scalar_lea.smem %s0, 16
  %s33 = sld [smem:[%s32]]
  %s34 = scalar_lea.smem %s0, 17
  %s35 = sld [smem:[%s34]]
  %s36 = scalar_lea.smem %s0, 18
  %s37 = sld [smem:[%s36]]
  %s38 = scalar_lea.smem %s0, 19
  %s39 = sld [smem:[%s38]]
  %s40 = scalar_lea.smem %s0, 20
  %s41 = sld [smem:[%s40]]
  %s42 = scalar_lea.smem %s0, 21
  %s43 = sld [smem:[%s42]]
  %s44 = scalar_lea.smem %s0, 22
  %s45 = sld [smem:[%s44]]
  %s46 = scalar_lea.smem %s0, 23
  %s47 = sld [smem:[%s46]]
  %s48 = scalar_lea.smem %s0, 24
  %s49 = sld [smem:[%s48]]
  %s50 = scalar_lea.smem %s0, 25
  %s51 = sld [smem:[%s50]]
  %s52 = scalar_lea.smem %s0, 26
  %s53 = sld [smem:[%s52]]
  %s54 = scalar_lea.smem %s0, 27
  %s55 = sld [smem:[%s54]]
  %s56 = scalar_lea.smem %s0, 28
  %s57 = sld [smem:[%s56]]
  %s58 = scalar_lea.smem %s0, 29
  %s59 = sld [smem:[%s58]]
  %s60 = sld [smem:[#allocation0]]
  $region237: #{tpu_custom_call.1} parent=0
    _
  %s62 = ssub.s32 1, %s60
  %s63 = scalar_select 0, %s62, %s60
  $region1: #{tpu_custom_call.1} parent=0
    #allocation3 [shape = 'u8[4096]{0}', space=vmem, size = 0x1000, scoped, tag = 'input window, operand 1, single buffered']
    #allocation4 [shape = 's32[2]{0}', space=sflag, size = 0x8, scoped, tag = 'scoped memory for tpu_custom_call.1']
    #allocation5 [shape = 's32[2]{0}', space=sflag, size = 0x8, scoped, tag = 'scoped memory for tpu_custom_call.1']
    #allocation6 [shape = 'u8[2048]{0}', space=vmem, size = 0x800, scoped, tag = 'input window, operand 2, single buffered']
    #allocation7 [shape = 's32[1]{0}', space=sflag, size = 0x4, scoped, tag = 'scoped memory for tpu_custom_call.1']
    #allocation8 [shape = 'u8[4096]{0}', space=vmem, size = 0x1000, scoped, tag = 'input window, operand 4, single buffered']
    #allocation9 [shape = 'u8[4096]{0}', space=vmem, size = 0x1000, scoped, tag = 'input window, operand 5, single buffered']
    #allocation10 [shape = 's32[1]{0}', space=sflag, size = 0x4, scoped, tag = 'scoped memory for tpu_custom_call.1']
    #allocation11 [shape = 'u8[4096]{0}', space=vmem, size = 0x1000, scoped, tag = 'input window, operand 6, single buffered']
    #allocation12 [shape = 'u8[1024]{0}', space=vmem, size = 0x400, scoped, tag = 'input window, operand 10']
    #allocation13 [shape = 's32[2]{0}', space=sflag, size = 0x8, scoped, tag = 'scoped memory for tpu_custom_call.1']
    #allocation14 [shape = 'u8[1024]{0}', space=vmem, size = 0x400, scoped, tag = 'input window, operand 11']
    #allocation15 [shape = 'u8[1024]{0}', space=vmem, size = 0x400, scoped, tag = 'input window, operand 12']
    #allocation16 [shape = 's32[2]{0}', space=sflag, size = 0x8, scoped, tag = 'scoped memory for tpu_custom_call.1']
    #allocation17 [shape = 'u8[1024]{0}', space=vmem, size = 0x400, scoped, tag = 'input window, operand 14']
    #allocation18 [shape = 'u8[32768]{0}', space=vmem, size = 0x8000, scoped, tag = 'input window, operand 15']
    #allocation19 [shape = 's32[2]{0}', space=sflag, size = 0x8, scoped, tag = 'scoped memory for tpu_custom_call.1']
    #allocation20 [shape = 'u8[1024]{0}', space=vmem, size = 0x400, scoped, tag = 'input window, operand 16']
    #allocation21 [shape = 'u8[32768]{0}', space=vmem, size = 0x8000, scoped, tag = 'input window, operand 17']
    #allocation22 [shape = 's32[2]{0}', space=sflag, size = 0x8, scoped, tag = 'scoped memory for tpu_custom_call.1']
    #allocation23 [shape = 'u8[1024]{0}', space=vmem, size = 0x400, scoped, tag = 'input window, operand 18']
    #allocation24 [shape = 'u8[1024]{0}', space=vmem, size = 0x400, scoped, tag = 'input window, operand 19']
    #allocation25 [shape = 's32[2]{0}', space=sflag, size = 0x8, scoped, tag = 'scoped memory for tpu_custom_call.1']
    #allocation26 [shape = 'u8[1024]{0}', space=vmem, size = 0x400, scoped, tag = 'input window, operand 20']
    #allocation27 [shape = 'u8[32768]{0}', space=vmem, size = 0x8000, scoped, tag = 'input window, operand 21']
    #allocation28 [shape = 's32[2]{0}', space=sflag, size = 0x8, scoped, tag = 'scoped memory for tpu_custom_call.1']
    #allocation29 [shape = 'u8[1024]{0}', space=vmem, size = 0x400, scoped, tag = 'input window, operand 22']
    #allocation30 [shape = 'u8[1024]{0}', space=vmem, size = 0x400, scoped, tag = 'input window, operand 24']
    #allocation31 [shape = 's32[2]{0}', space=sflag, size = 0x8, scoped, tag = 'scoped memory for tpu_custom_call.1']
    #allocation32 [shape = 'u8[1024]{0}', space=vmem, size = 0x400, scoped, tag = 'input window, operand 25']
    #allocation33 [shape = 'u8[1024]{0}', space=vmem, size = 0x400, scoped, tag = 'input window, operand 26']
    #allocation34 [shape = 's32[2]{0}', space=sflag, size = 0x8, scoped, tag = 'scoped memory for tpu_custom_call.1']
    #allocation35 [shape = 'u8[1024]{0}', space=vmem, size = 0x400, scoped, tag = 'output window, operand 0, single buffered']
    %64 = vsyncpa [#allocation4], 0
    %65 = vsyncpa [#allocation7], 0
    %66 = vsyncpa [#allocation10], 0
    %67 = vsyncpa [#allocation13], 0
    %s68 = scalar_lea.sflag [#allocation13], 1
    %69 = vsyncpa %s68, 0
    %70 = vsyncpa [#allocation16], 0
    %s71 = scalar_lea.sflag [#allocation16], 1
    %72 = vsyncpa %s71, 0
    %73 = vsyncpa [#allocation19], 0
    %s74 = scalar_lea.sflag [#allocation19], 1
    %75 = vsyncpa %s74, 0
    %76 = vsyncpa [#allocation22], 0
    %s77 = scalar_lea.sflag [#allocation22], 1
    %78 = vsyncpa %s77, 0
    %79 = vsyncpa [#allocation25], 0
    %s80 = scalar_lea.sflag [#allocation25], 1
    %81 = vsyncpa %s80, 0
    %82 = vsyncpa [#allocation28], 0
    %s83 = scalar_lea.sflag [#allocation28], 1
    %84 = vsyncpa %s83, 0
    %85 = vsyncpa [#allocation31], 0
    %s86 = scalar_lea.sflag [#allocation31], 1
    %87 = vsyncpa %s86, 0
    %88 = vsyncpa [#allocation34], 0
    %s89 = scalar_lea.sflag [#allocation34], 1
    %90 = vsyncpa %s89, 0
    %91 = vsyncpa [#allocation5], 0
    loop: start=0, step=1, limit=4
    $region2: #{tpu_custom_call.1} parent=1 // loop_pre_header
      _
    $region3: #{tpu_custom_call.1} parent=1 // loop_header
      %s93 = sphi 0, %s97
      %p94 = scmp.ge.s32.totalorder %s93, 4
      %s101 = sphi 0, %s101
      %s103 = sphi 0, %s101
      %s104 = sphi 0, %s103
      %s118 = sphi 0, %s104
      %s122 = sphi 0, %s122
      %s124 = sphi 0, %s122
      %s125 = sphi 0, %s124
      %s139 = sphi 0, %s125
      %s143 = sphi 0, %s143
      %s145 = sphi 0, %s143
      %s146 = sphi 0, %s145
      %s160 = sphi 0, %s146
      %s164 = sphi 0, %s164
      %s166 = sphi 0, %s164
      %s167 = sphi 0, %s166
      %s181 = sphi 0, %s167
      %s185 = sphi 0, %s185
      %s187 = sphi 0, %s185
      %s188 = sphi 0, %s187
      %s202 = sphi 0, %s188
      %s206 = sphi 0, %s206
      %s208 = sphi 0, %s206
      %s209 = sphi 0, %s208
      %s223 = sphi 0, %s209
      %s227 = sphi 0, %s227
      %s229 = sphi 0, %s227
      %s230 = sphi 0, %s229
      %s244 = sphi 0, %s230
      %s250 = sphi 0, %s252
      %s253 = sphi 0, %s250
      %s254 = sphi 0, %s253
      %s270 = sphi 0, %s254
      %s276 = sphi 0, %s278
      %s279 = sphi 0, %s276
      %s280 = sphi 0, %s279
      %s296 = sphi 0, %s280
      %s302 = sphi 0, %s304
      %s305 = sphi 0, %s302
      %s306 = sphi 0, %s305
      %s322 = sphi 0, %s306
      %s328 = sphi 0, %s330
      %s331 = sphi 0, %s328
      %s332 = sphi 0, %s331
      %s348 = sphi 0, %s332
      %s354 = sphi 0, %s356
      %s357 = sphi 0, %s354
      %s358 = sphi 0, %s357
      %s374 = sphi 0, %s358
      %s380 = sphi 0, %s382
      %s383 = sphi 0, %s380
      %s384 = sphi 0, %s383
      %s400 = sphi 0, %s384
      %s406 = sphi 0, %s408
      %s409 = sphi 0, %s406
      %s410 = sphi 0, %s409
      %s426 = sphi 0, %s410
      %s432 = sphi 0, %s434
      %s435 = sphi 0, %s432
      %s436 = sphi 0, %s435
      %s452 = sphi 0, %s436
      %s458 = sphi 0, %s460
      %s461 = sphi 0, %s458
      %s462 = sphi 0, %s461
      %s478 = sphi 0, %s462
      %s484 = sphi 0, %s486
      %s487 = sphi 0, %s484
      %s488 = sphi 0, %s487
      %s504 = sphi 0, %s488
      %s510 = sphi 0, %s512
      %s513 = sphi 0, %s510
      %s514 = sphi 0, %s513
      %s530 = sphi 0, %s514
      %s536 = sphi 0, %s538
      %s539 = sphi 0, %s536
      %s540 = sphi 0, %s539
      %s556 = sphi 0, %s540
      %s562 = sphi 0, %s564
      %s565 = sphi 0, %s562
      %s566 = sphi 0, %s565
      %s582 = sphi 0, %s566
      %s588 = sphi 0, %s590
      %s591 = sphi 0, %s588
      %s592 = sphi 0, %s591
      %s608 = sphi 0, %s592
      %s614 = sphi 0, %s616
      %s617 = sphi 0, %s614
      %s618 = sphi 0, %s617
      %s634 = sphi 0, %s618
      %s640 = sphi 0, %s642
      %s643 = sphi 0, %s640
      %s644 = sphi 0, %s643
      %s660 = sphi 0, %s644
      %s666 = sphi 0, %s668
      %s669 = sphi 0, %s666
      %s670 = sphi 0, %s669
      %s686 = sphi 0, %s670
      %s692 = sphi 0, %s694
      %s695 = sphi 0, %s692
      %s696 = sphi 0, %s695
      %s712 = sphi 0, %s696
      %s718 = sphi 0, %s720
      %s721 = sphi 0, %s718
      %s722 = sphi 0, %s721
      %s738 = sphi 0, %s722
      %s744 = sphi 0, %s746
      %s747 = sphi 0, %s744
      %s748 = sphi 0, %s747
      %s764 = sphi 0, %s748
      %s768 = sphi 0, %s768
      %s770 = sphi 0, %s768
      %s771 = sphi 0, %s770
      %s785 = sphi 0, %s771
      %s789 = sphi 0, %s789
      %s791 = sphi 0, %s789
      %s792 = sphi 0, %s791
      %s806 = sphi 0, %s792
      %s810 = sphi 0, %s810
      %s812 = sphi 0, %s810
      %s813 = sphi 0, %s812
      %s827 = sphi 0, %s813
    $region4: #{tpu_custom_call.1} parent=1 // loop_header_branch
      %96 = sbr.rel (%p94) target = $region8
    $region5: #{tpu_custom_call.1} parent=1 // loop_body
      %s98 = ssub.s32 %s93, 1
      %s99 = ssub.s32 %s93, 2
      %s100 = sadd.s32 %s93, 1
      %s102 = sadd.s32 %s101, 1
      %p105 = scmp.eq.s32.totalorder %s93, 1
      %p106 = scmp.ne.s32.totalorder %s101, %s103
      %p107 = scmp.eq.s32.totalorder %s93, 0
      %p108 = por %p106, %p107
      %p109 = scmp.ne.s32.totalorder %s101, %s103
      %p110 = scmp.eq.s32.totalorder %s98, 1
      %p111 = por %p109, %p110
      %p112 = scmp.ne.s32.totalorder %s103, %s104
      %p113 = scmp.eq.s32.totalorder %s98, 0
      %p114 = por %p112, %p113
      %p115 = scmp.ne.s32.totalorder %s103, %s104
      %p116 = scmp.eq.s32.totalorder %s99, 1
      %p117 = por %p115, %p116
      %p119 = scmp.ne.s32.totalorder %s104, %s118
      %p120 = scmp.eq.s32.totalorder %s99, 0
      %p121 = por %p119, %p120
      %s123 = sadd.s32 %s122, 1
      %p126 = scmp.eq.s32.totalorder %s93, 1
      %p127 = scmp.ne.s32.totalorder %s122, %s124
      %p128 = scmp.eq.s32.totalorder %s93, 0
      %p129 = por %p127, %p128
      %p130 = scmp.ne.s32.totalorder %s122, %s124
      %p131 = scmp.eq.s32.totalorder %s98, 1
      %p132 = por %p130, %p131
      %p133 = scmp.ne.s32.totalorder %s124, %s125
      %p134 = scmp.eq.s32.totalorder %s98, 0
      %p135 = por %p133, %p134
      %p136 = scmp.ne.s32.totalorder %s124, %s125
      %p137 = scmp.eq.s32.totalorder %s99, 1
      %p138 = por %p136, %p137
      %p140 = scmp.ne.s32.totalorder %s125, %s139
      %p141 = scmp.eq.s32.totalorder %s99, 0
      %p142 = por %p140, %p141
      %s144 = sadd.s32 %s143, 1
      %p147 = scmp.eq.s32.totalorder %s93, 1
      %p148 = scmp.ne.s32.totalorder %s143, %s145
      %p149 = scmp.eq.s32.totalorder %s93, 0
      %p150 = por %p148, %p149
      %p151 = scmp.ne.s32.totalorder %s143, %s145
      %p152 = scmp.eq.s32.totalorder %s98, 1
      %p153 = por %p151, %p152
      %p154 = scmp.ne.s32.totalorder %s145, %s146
      %p155 = scmp.eq.s32.totalorder %s98, 0
      %p156 = por %p154, %p155
      %p157 = scmp.ne.s32.totalorder %s145, %s146
      %p158 = scmp.eq.s32.totalorder %s99, 1
      %p159 = por %p157, %p158
      %p161 = scmp.ne.s32.totalorder %s146, %s160
      %p162 = scmp.eq.s32.totalorder %s99, 0
      %p163 = por %p161, %p162
      %s165 = sadd.s32 %s164, 1
      %p168 = scmp.eq.s32.totalorder %s93, 1
      %p169 = scmp.ne.s32.totalorder %s164, %s166
      %p170 = scmp.eq.s32.totalorder %s93, 0
      %p171 = por %p169, %p170
      %p172 = scmp.ne.s32.totalorder %s164, %s166
      %p173 = scmp.eq.s32.totalorder %s98, 1
      %p174 = por %p172, %p173
      %p175 = scmp.ne.s32.totalorder %s166, %s167
      %p176 = scmp.eq.s32.totalorder %s98, 0
      %p177 = por %p175, %p176
      %p178 = scmp.ne.s32.totalorder %s166, %s167
      %p179 = scmp.eq.s32.totalorder %s99, 1
      %p180 = por %p178, %p179
      %p182 = scmp.ne.s32.totalorder %s167, %s181
      %p183 = scmp.eq.s32.totalorder %s99, 0
      %p184 = por %p182, %p183
      %s186 = sadd.s32 %s185, 1
      %p189 = scmp.eq.s32.totalorder %s93, 1
      %p190 = scmp.ne.s32.totalorder %s185, %s187
      %p191 = scmp.eq.s32.totalorder %s93, 0
      %p192 = por %p190, %p191
      %p193 = scmp.ne.s32.totalorder %s185, %s187
      %p194 = scmp.eq.s32.totalorder %s98, 1
      %p195 = por %p193, %p194
      %p196 = scmp.ne.s32.totalorder %s187, %s188
      %p197 = scmp.eq.s32.totalorder %s98, 0
      %p198 = por %p196, %p197
      %p199 = scmp.ne.s32.totalorder %s187, %s188
      %p200 = scmp.eq.s32.totalorder %s99, 1
      %p201 = por %p199, %p200
      %p203 = scmp.ne.s32.totalorder %s188, %s202
      %p204 = scmp.eq.s32.totalorder %s99, 0
      %p205 = por %p203, %p204
      %s207 = sadd.s32 %s206, 1
      %p210 = scmp.eq.s32.totalorder %s93, 1
      %p211 = scmp.ne.s32.totalorder %s206, %s208
      %p212 = scmp.eq.s32.totalorder %s93, 0
      %p213 = por %p211, %p212
      %p214 = scmp.ne.s32.totalorder %s206, %s208
      %p215 = scmp.eq.s32.totalorder %s98, 1
      %p216 = por %p214, %p215
      %p217 = scmp.ne.s32.totalorder %s208, %s209
      %p218 = scmp.eq.s32.totalorder %s98, 0
      %p219 = por %p217, %p218
      %p220 = scmp.ne.s32.totalorder %s208, %s209
      %p221 = scmp.eq.s32.totalorder %s99, 1
      %p222 = por %p220, %p221
      %p224 = scmp.ne.s32.totalorder %s209, %s223
      %p225 = scmp.eq.s32.totalorder %s99, 0
      %p226 = por %p224, %p225
      %s228 = sadd.s32 %s227, 1
      %p231 = scmp.eq.s32.totalorder %s93, 1
      %p232 = scmp.ne.s32.totalorder %s227, %s229
      %p233 = scmp.eq.s32.totalorder %s93, 0
      %p234 = por %p232, %p233
      %p235 = scmp.ne.s32.totalorder %s227, %s229
      %p236 = scmp.eq.s32.totalorder %s98, 1
      %p237 = por %p235, %p236
      %p238 = scmp.ne.s32.totalorder %s229, %s230
      %p239 = scmp.eq.s32.totalorder %s98, 0
      %p240 = por %p238, %p239
      %p241 = scmp.ne.s32.totalorder %s229, %s230
      %p242 = scmp.eq.s32.totalorder %s99, 1
      %p243 = por %p241, %p242
      %p245 = scmp.ne.s32.totalorder %s230, %s244
      %p246 = scmp.eq.s32.totalorder %s99, 0
      %p247 = por %p245, %p246
      %s248 = ssub.s32 %s93, %s100
      %p249 = scmp.eq.s32.totalorder %s248, 0
      %s251 = sadd.s32 %s250, 1
      %s252 = scalar_select %p249, %s250, %s251
      %p255 = pneg %p249
      %p256 = scmp.eq.s32.totalorder %s93, 1
      %p257 = por %p255, %p256
      %p258 = scmp.ne.s32.totalorder %s250, %s253
      %p259 = scmp.eq.s32.totalorder %s93, 0
      %p260 = por %p258, %p259
      %p261 = scmp.ne.s32.totalorder %s250, %s253
      %p262 = scmp.eq.s32.totalorder %s98, 1
      %p263 = por %p261, %p262
      %p264 = scmp.ne.s32.totalorder %s253, %s254
      %p265 = scmp.eq.s32.totalorder %s98, 0
      %p266 = por %p264, %p265
      %p267 = scmp.ne.s32.totalorder %s253, %s254
      %p268 = scmp.eq.s32.totalorder %s99, 1
      %p269 = por %p267, %p268
      %p271 = scmp.ne.s32.totalorder %s254, %s270
      %p272 = scmp.eq.s32.totalorder %s99, 0
      %p273 = por %p271, %p272
      %s274 = ssub.s32 %s93, %s100
      %p275 = scmp.eq.s32.totalorder %s274, 0
      %s277 = sadd.s32 %s276, 1
      %s278 = scalar_select %p275, %s276, %s277
      %p281 = pneg %p275
      %p282 = scmp.eq.s32.totalorder %s93, 1
      %p283 = por %p281, %p282
      %p284 = scmp.ne.s32.totalorder %s276, %s279
      %p285 = scmp.eq.s32.totalorder %s93, 0
      %p286 = por %p284, %p285
      %p287 = scmp.ne.s32.totalorder %s276, %s279
      %p288 = scmp.eq.s32.totalorder %s98, 1
      %p289 = por %p287, %p288
      %p290 = scmp.ne.s32.totalorder %s279, %s280
      %p291 = scmp.eq.s32.totalorder %s98, 0
      %p292 = por %p290, %p291
      %p293 = scmp.ne.s32.totalorder %s279, %s280
      %p294 = scmp.eq.s32.totalorder %s99, 1
      %p295 = por %p293, %p294
      %p297 = scmp.ne.s32.totalorder %s280, %s296
      %p298 = scmp.eq.s32.totalorder %s99, 0
      %p299 = por %p297, %p298
      %s300 = ssub.s32 %s93, %s100
      %p301 = scmp.eq.s32.totalorder %s300, 0
      %s303 = sadd.s32 %s302, 1
      %s304 = scalar_select %p301, %s302, %s303
      %p307 = pneg %p301
      %p308 = scmp.eq.s32.totalorder %s93, 1
      %p309 = por %p307, %p308
      %p310 = scmp.ne.s32.totalorder %s302, %s305
      %p311 = scmp.eq.s32.totalorder %s93, 0
      %p312 = por %p310, %p311
      %p313 = scmp.ne.s32.totalorder %s302, %s305
      %p314 = scmp.eq.s32.totalorder %s98, 1
      %p315 = por %p313, %p314
      %p316 = scmp.ne.s32.totalorder %s305, %s306
      %p317 = scmp.eq.s32.totalorder %s98, 0
      %p318 = por %p316, %p317
      %p319 = scmp.ne.s32.totalorder %s305, %s306
      %p320 = scmp.eq.s32.totalorder %s99, 1
      %p321 = por %p319, %p320
      %p323 = scmp.ne.s32.totalorder %s306, %s322
      %p324 = scmp.eq.s32.totalorder %s99, 0
      %p325 = por %p323, %p324
      %s326 = ssub.s32 %s93, %s100
      %p327 = scmp.eq.s32.totalorder %s326, 0
      %s329 = sadd.s32 %s328, 1
      %s330 = scalar_select %p327, %s328, %s329
      %p333 = pneg %p327
      %p334 = scmp.eq.s32.totalorder %s93, 1
      %p335 = por %p333, %p334
      %p336 = scmp.ne.s32.totalorder %s328, %s331
      %p337 = scmp.eq.s32.totalorder %s93, 0
      %p338 = por %p336, %p337
      %p339 = scmp.ne.s32.totalorder %s328, %s331
      %p340 = scmp.eq.s32.totalorder %s98, 1
      %p341 = por %p339, %p340
      %p342 = scmp.ne.s32.totalorder %s331, %s332
      %p343 = scmp.eq.s32.totalorder %s98, 0
      %p344 = por %p342, %p343
      %p345 = scmp.ne.s32.totalorder %s331, %s332
      %p346 = scmp.eq.s32.totalorder %s99, 1
      %p347 = por %p345, %p346
      %p349 = scmp.ne.s32.totalorder %s332, %s348
      %p350 = scmp.eq.s32.totalorder %s99, 0
      %p351 = por %p349, %p350
      %s352 = ssub.s32 %s93, %s100
      %p353 = scmp.eq.s32.totalorder %s352, 0
      %s355 = sadd.s32 %s354, 1
      %s356 = scalar_select %p353, %s354, %s355
      %p359 = pneg %p353
      %p360 = scmp.eq.s32.totalorder %s93, 1
      %p361 = por %p359, %p360
      %p362 = scmp.ne.s32.totalorder %s354, %s357
      %p363 = scmp.eq.s32.totalorder %s93, 0
      %p364 = por %p362, %p363
      %p365 = scmp.ne.s32.totalorder %s354, %s357
      %p366 = scmp.eq.s32.totalorder %s98, 1
      %p367 = por %p365, %p366
      %p368 = scmp.ne.s32.totalorder %s357, %s358
      %p369 = scmp.eq.s32.totalorder %s98, 0
      %p370 = por %p368, %p369
      %p371 = scmp.ne.s32.totalorder %s357, %s358
      %p372 = scmp.eq.s32.totalorder %s99, 1
      %p373 = por %p371, %p372
      %p375 = scmp.ne.s32.totalorder %s358, %s374
      %p376 = scmp.eq.s32.totalorder %s99, 0
      %p377 = por %p375, %p376
      %s378 = ssub.s32 %s93, %s100
      %p379 = scmp.eq.s32.totalorder %s378, 0
      %s381 = sadd.s32 %s380, 1
      %s382 = scalar_select %p379, %s380, %s381
      %p385 = pneg %p379
      %p386 = scmp.eq.s32.totalorder %s93, 1
      %p387 = por %p385, %p386
      %p388 = scmp.ne.s32.totalorder %s380, %s383
      %p389 = scmp.eq.s32.totalorder %s93, 0
      %p390 = por %p388, %p389
      %p391 = scmp.ne.s32.totalorder %s380, %s383
      %p392 = scmp.eq.s32.totalorder %s98, 1
      %p393 = por %p391, %p392
      %p394 = scmp.ne.s32.totalorder %s383, %s384
      %p395 = scmp.eq.s32.totalorder %s98, 0
      %p396 = por %p394, %p395
      %p397 = scmp.ne.s32.totalorder %s383, %s384
      %p398 = scmp.eq.s32.totalorder %s99, 1
      %p399 = por %p397, %p398
      %p401 = scmp.ne.s32.totalorder %s384, %s400
      %p402 = scmp.eq.s32.totalorder %s99, 0
      %p403 = por %p401, %p402
      %s404 = ssub.s32 %s93, %s100
      %p405 = scmp.eq.s32.totalorder %s404, 0
      %s407 = sadd.s32 %s406, 1
      %s408 = scalar_select %p405, %s406, %s407
      %p411 = pneg %p405
      %p412 = scmp.eq.s32.totalorder %s93, 1
      %p413 = por %p411, %p412
      %p414 = scmp.ne.s32.totalorder %s406, %s409
      %p415 = scmp.eq.s32.totalorder %s93, 0
      %p416 = por %p414, %p415
      %p417 = scmp.ne.s32.totalorder %s406, %s409
      %p418 = scmp.eq.s32.totalorder %s98, 1
      %p419 = por %p417, %p418
      %p420 = scmp.ne.s32.totalorder %s409, %s410
      %p421 = scmp.eq.s32.totalorder %s98, 0
      %p422 = por %p420, %p421
      %p423 = scmp.ne.s32.totalorder %s409, %s410
      %p424 = scmp.eq.s32.totalorder %s99, 1
      %p425 = por %p423, %p424
      %p427 = scmp.ne.s32.totalorder %s410, %s426
      %p428 = scmp.eq.s32.totalorder %s99, 0
      %p429 = por %p427, %p428
      %s430 = ssub.s32 %s93, %s100
      %p431 = scmp.eq.s32.totalorder %s430, 0
      %s433 = sadd.s32 %s432, 1
      %s434 = scalar_select %p431, %s432, %s433
      %p437 = pneg %p431
      %p438 = scmp.eq.s32.totalorder %s93, 1
      %p439 = por %p437, %p438
      %p440 = scmp.ne.s32.totalorder %s432, %s435
      %p441 = scmp.eq.s32.totalorder %s93, 0
      %p442 = por %p440, %p441
      %p443 = scmp.ne.s32.totalorder %s432, %s435
      %p444 = scmp.eq.s32.totalorder %s98, 1
      %p445 = por %p443, %p444
      %p446 = scmp.ne.s32.totalorder %s435, %s436
      %p447 = scmp.eq.s32.totalorder %s98, 0
      %p448 = por %p446, %p447
      %p449 = scmp.ne.s32.totalorder %s435, %s436
      %p450 = scmp.eq.s32.totalorder %s99, 1
      %p451 = por %p449, %p450
      %p453 = scmp.ne.s32.totalorder %s436, %s452
      %p454 = scmp.eq.s32.totalorder %s99, 0
      %p455 = por %p453, %p454
      %s456 = ssub.s32 %s93, %s100
      %p457 = scmp.eq.s32.totalorder %s456, 0
      %s459 = sadd.s32 %s458, 1
      %s460 = scalar_select %p457, %s458, %s459
      %p463 = pneg %p457
      %p464 = scmp.eq.s32.totalorder %s93, 1
      %p465 = por %p463, %p464
      %p466 = scmp.ne.s32.totalorder %s458, %s461
      %p467 = scmp.eq.s32.totalorder %s93, 0
      %p468 = por %p466, %p467
      %p469 = scmp.ne.s32.totalorder %s458, %s461
      %p470 = scmp.eq.s32.totalorder %s98, 1
      %p471 = por %p469, %p470
      %p472 = scmp.ne.s32.totalorder %s461, %s462
      %p473 = scmp.eq.s32.totalorder %s98, 0
      %p474 = por %p472, %p473
      %p475 = scmp.ne.s32.totalorder %s461, %s462
      %p476 = scmp.eq.s32.totalorder %s99, 1
      %p477 = por %p475, %p476
      %p479 = scmp.ne.s32.totalorder %s462, %s478
      %p480 = scmp.eq.s32.totalorder %s99, 0
      %p481 = por %p479, %p480
      %s482 = ssub.s32 %s93, %s100
      %p483 = scmp.eq.s32.totalorder %s482, 0
      %s485 = sadd.s32 %s484, 1
      %s486 = scalar_select %p483, %s484, %s485
      %p489 = pneg %p483
      %p490 = scmp.eq.s32.totalorder %s93, 1
      %p491 = por %p489, %p490
      %p492 = scmp.ne.s32.totalorder %s484, %s487
      %p493 = scmp.eq.s32.totalorder %s93, 0
      %p494 = por %p492, %p493
      %p495 = scmp.ne.s32.totalorder %s484, %s487
      %p496 = scmp.eq.s32.totalorder %s98, 1
      %p497 = por %p495, %p496
      %p498 = scmp.ne.s32.totalorder %s487, %s488
      %p499 = scmp.eq.s32.totalorder %s98, 0
      %p500 = por %p498, %p499
      %p501 = scmp.ne.s32.totalorder %s487, %s488
      %p502 = scmp.eq.s32.totalorder %s99, 1
      %p503 = por %p501, %p502
      %p505 = scmp.ne.s32.totalorder %s488, %s504
      %p506 = scmp.eq.s32.totalorder %s99, 0
      %p507 = por %p505, %p506
      %s508 = ssub.s32 %s93, %s100
      %p509 = scmp.eq.s32.totalorder %s508, 0
      %s511 = sadd.s32 %s510, 1
      %s512 = scalar_select %p509, %s510, %s511
      %p515 = pneg %p509
      %p516 = scmp.eq.s32.totalorder %s93, 1
      %p517 = por %p515, %p516
      %p518 = scmp.ne.s32.totalorder %s510, %s513
      %p519 = scmp.eq.s32.totalorder %s93, 0
      %p520 = por %p518, %p519
      %p521 = scmp.ne.s32.totalorder %s510, %s513
      %p522 = scmp.eq.s32.totalorder %s98, 1
      %p523 = por %p521, %p522
      %p524 = scmp.ne.s32.totalorder %s513, %s514
      %p525 = scmp.eq.s32.totalorder %s98, 0
      %p526 = por %p524, %p525
      %p527 = scmp.ne.s32.totalorder %s513, %s514
      %p528 = scmp.eq.s32.totalorder %s99, 1
      %p529 = por %p527, %p528
      %p531 = scmp.ne.s32.totalorder %s514, %s530
      %p532 = scmp.eq.s32.totalorder %s99, 0
      %p533 = por %p531, %p532
      %s534 = ssub.s32 %s93, %s100
      %p535 = scmp.eq.s32.totalorder %s534, 0
      %s537 = sadd.s32 %s536, 1
      %s538 = scalar_select %p535, %s536, %s537
      %p541 = pneg %p535
      %p542 = scmp.eq.s32.totalorder %s93, 1
      %p543 = por %p541, %p542
      %p544 = scmp.ne.s32.totalorder %s536, %s539
      %p545 = scmp.eq.s32.totalorder %s93, 0
      %p546 = por %p544, %p545
      %p547 = scmp.ne.s32.totalorder %s536, %s539
      %p548 = scmp.eq.s32.totalorder %s98, 1
      %p549 = por %p547, %p548
      %p550 = scmp.ne.s32.totalorder %s539, %s540
      %p551 = scmp.eq.s32.totalorder %s98, 0
      %p552 = por %p550, %p551
      %p553 = scmp.ne.s32.totalorder %s539, %s540
      %p554 = scmp.eq.s32.totalorder %s99, 1
      %p555 = por %p553, %p554
      %p557 = scmp.ne.s32.totalorder %s540, %s556
      %p558 = scmp.eq.s32.totalorder %s99, 0
      %p559 = por %p557, %p558
      %s560 = ssub.s32 %s93, %s100
      %p561 = scmp.eq.s32.totalorder %s560, 0
      %s563 = sadd.s32 %s562, 1
      %s564 = scalar_select %p561, %s562, %s563
      %p567 = pneg %p561
      %p568 = scmp.eq.s32.totalorder %s93, 1
      %p569 = por %p567, %p568
      %p570 = scmp.ne.s32.totalorder %s562, %s565
      %p571 = scmp.eq.s32.totalorder %s93, 0
      %p572 = por %p570, %p571
      %p573 = scmp.ne.s32.totalorder %s562, %s565
      %p574 = scmp.eq.s32.totalorder %s98, 1
      %p575 = por %p573, %p574
      %p576 = scmp.ne.s32.totalorder %s565, %s566
      %p577 = scmp.eq.s32.totalorder %s98, 0
      %p578 = por %p576, %p577
      %p579 = scmp.ne.s32.totalorder %s565, %s566
      %p580 = scmp.eq.s32.totalorder %s99, 1
      %p581 = por %p579, %p580
      %p583 = scmp.ne.s32.totalorder %s566, %s582
      %p584 = scmp.eq.s32.totalorder %s99, 0
      %p585 = por %p583, %p584
      %s586 = ssub.s32 %s93, %s100
      %p587 = scmp.eq.s32.totalorder %s586, 0
      %s589 = sadd.s32 %s588, 1
      %s590 = scalar_select %p587, %s588, %s589
      %p593 = pneg %p587
      %p594 = scmp.eq.s32.totalorder %s93, 1
      %p595 = por %p593, %p594
      %p596 = scmp.ne.s32.totalorder %s588, %s591
      %p597 = scmp.eq.s32.totalorder %s93, 0
      %p598 = por %p596, %p597
      %p599 = scmp.ne.s32.totalorder %s588, %s591
      %p600 = scmp.eq.s32.totalorder %s98, 1
      %p601 = por %p599, %p600
      %p602 = scmp.ne.s32.totalorder %s591, %s592
      %p603 = scmp.eq.s32.totalorder %s98, 0
      %p604 = por %p602, %p603
      %p605 = scmp.ne.s32.totalorder %s591, %s592
      %p606 = scmp.eq.s32.totalorder %s99, 1
      %p607 = por %p605, %p606
      %p609 = scmp.ne.s32.totalorder %s592, %s608
      %p610 = scmp.eq.s32.totalorder %s99, 0
      %p611 = por %p609, %p610
      %s612 = ssub.s32 %s93, %s100
      %p613 = scmp.eq.s32.totalorder %s612, 0
      %s615 = sadd.s32 %s614, 1
      %s616 = scalar_select %p613, %s614, %s615
      %p619 = pneg %p613
      %p620 = scmp.eq.s32.totalorder %s93, 1
      %p621 = por %p619, %p620
      %p622 = scmp.ne.s32.totalorder %s614, %s617
      %p623 = scmp.eq.s32.totalorder %s93, 0
      %p624 = por %p622, %p623
      %p625 = scmp.ne.s32.totalorder %s614, %s617
      %p626 = scmp.eq.s32.totalorder %s98, 1
      %p627 = por %p625, %p626
      %p628 = scmp.ne.s32.totalorder %s617, %s618
      %p629 = scmp.eq.s32.totalorder %s98, 0
      %p630 = por %p628, %p629
      %p631 = scmp.ne.s32.totalorder %s617, %s618
      %p632 = scmp.eq.s32.totalorder %s99, 1
      %p633 = por %p631, %p632
      %p635 = scmp.ne.s32.totalorder %s618, %s634
      %p636 = scmp.eq.s32.totalorder %s99, 0
      %p637 = por %p635, %p636
      %s638 = ssub.s32 %s93, %s100
      %p639 = scmp.eq.s32.totalorder %s638, 0
      %s641 = sadd.s32 %s640, 1
      %s642 = scalar_select %p639, %s640, %s641
      %p645 = pneg %p639
      %p646 = scmp.eq.s32.totalorder %s93, 1
      %p647 = por %p645, %p646
      %p648 = scmp.ne.s32.totalorder %s640, %s643
      %p649 = scmp.eq.s32.totalorder %s93, 0
      %p650 = por %p648, %p649
      %p651 = scmp.ne.s32.totalorder %s640, %s643
      %p652 = scmp.eq.s32.totalorder %s98, 1
      %p653 = por %p651, %p652
      %p654 = scmp.ne.s32.totalorder %s643, %s644
      %p655 = scmp.eq.s32.totalorder %s98, 0
      %p656 = por %p654, %p655
      %p657 = scmp.ne.s32.totalorder %s643, %s644
      %p658 = scmp.eq.s32.totalorder %s99, 1
      %p659 = por %p657, %p658
      %p661 = scmp.ne.s32.totalorder %s644, %s660
      %p662 = scmp.eq.s32.totalorder %s99, 0
      %p663 = por %p661, %p662
      %s664 = ssub.s32 %s93, %s100
      %p665 = scmp.eq.s32.totalorder %s664, 0
      %s667 = sadd.s32 %s666, 1
      %s668 = scalar_select %p665, %s666, %s667
      %p671 = pneg %p665
      %p672 = scmp.eq.s32.totalorder %s93, 1
      %p673 = por %p671, %p672
      %p674 = scmp.ne.s32.totalorder %s666, %s669
      %p675 = scmp.eq.s32.totalorder %s93, 0
      %p676 = por %p674, %p675
      %p677 = scmp.ne.s32.totalorder %s666, %s669
      %p678 = scmp.eq.s32.totalorder %s98, 1
      %p679 = por %p677, %p678
      %p680 = scmp.ne.s32.totalorder %s669, %s670
      %p681 = scmp.eq.s32.totalorder %s98, 0
      %p682 = por %p680, %p681
      %p683 = scmp.ne.s32.totalorder %s669, %s670
      %p684 = scmp.eq.s32.totalorder %s99, 1
      %p685 = por %p683, %p684
      %p687 = scmp.ne.s32.totalorder %s670, %s686
      %p688 = scmp.eq.s32.totalorder %s99, 0
      %p689 = por %p687, %p688
      %s690 = ssub.s32 %s93, %s100
      %p691 = scmp.eq.s32.totalorder %s690, 0
      %s693 = sadd.s32 %s692, 1
      %s694 = scalar_select %p691, %s692, %s693
      %p697 = pneg %p691
      %p698 = scmp.eq.s32.totalorder %s93, 1
      %p699 = por %p697, %p698
      %p700 = scmp.ne.s32.totalorder %s692, %s695
      %p701 = scmp.eq.s32.totalorder %s93, 0
      %p702 = por %p700, %p701
      %p703 = scmp.ne.s32.totalorder %s692, %s695
      %p704 = scmp.eq.s32.totalorder %s98, 1
      %p705 = por %p703, %p704
      %p706 = scmp.ne.s32.totalorder %s695, %s696
      %p707 = scmp.eq.s32.totalorder %s98, 0
      %p708 = por %p706, %p707
      %p709 = scmp.ne.s32.totalorder %s695, %s696
      %p710 = scmp.eq.s32.totalorder %s99, 1
      %p711 = por %p709, %p710
      %p713 = scmp.ne.s32.totalorder %s696, %s712
      %p714 = scmp.eq.s32.totalorder %s99, 0
      %p715 = por %p713, %p714
      %s716 = ssub.s32 %s93, %s100
      %p717 = scmp.eq.s32.totalorder %s716, 0
      %s719 = sadd.s32 %s718, 1
      %s720 = scalar_select %p717, %s718, %s719
      %p723 = pneg %p717
      %p724 = scmp.eq.s32.totalorder %s93, 1
      %p725 = por %p723, %p724
      %p726 = scmp.ne.s32.totalorder %s718, %s721
      %p727 = scmp.eq.s32.totalorder %s93, 0
      %p728 = por %p726, %p727
      %p729 = scmp.ne.s32.totalorder %s718, %s721
      %p730 = scmp.eq.s32.totalorder %s98, 1
      %p731 = por %p729, %p730
      %p732 = scmp.ne.s32.totalorder %s721, %s722
      %p733 = scmp.eq.s32.totalorder %s98, 0
      %p734 = por %p732, %p733
      %p735 = scmp.ne.s32.totalorder %s721, %s722
      %p736 = scmp.eq.s32.totalorder %s99, 1
      %p737 = por %p735, %p736
      %p739 = scmp.ne.s32.totalorder %s722, %s738
      %p740 = scmp.eq.s32.totalorder %s99, 0
      %p741 = por %p739, %p740
      %s742 = ssub.s32 %s93, %s100
      %p743 = scmp.eq.s32.totalorder %s742, 0
      %s745 = sadd.s32 %s744, 1
      %s746 = scalar_select %p743, %s744, %s745
      %p749 = pneg %p743
      %p750 = scmp.eq.s32.totalorder %s93, 1
      %p751 = por %p749, %p750
      %p752 = scmp.ne.s32.totalorder %s744, %s747
      %p753 = scmp.eq.s32.totalorder %s93, 0
      %p754 = por %p752, %p753
      %p755 = scmp.ne.s32.totalorder %s744, %s747
      %p756 = scmp.eq.s32.totalorder %s98, 1
      %p757 = por %p755, %p756
      %p758 = scmp.ne.s32.totalorder %s747, %s748
      %p759 = scmp.eq.s32.totalorder %s98, 0
      %p760 = por %p758, %p759
      %p761 = scmp.ne.s32.totalorder %s747, %s748
      %p762 = scmp.eq.s32.totalorder %s99, 1
      %p763 = por %p761, %p762
      %p765 = scmp.ne.s32.totalorder %s748, %s764
      %p766 = scmp.eq.s32.totalorder %s99, 0
      %p767 = por %p765, %p766
      %s769 = sadd.s32 %s768, 1
      %p772 = scmp.eq.s32.totalorder %s93, 1
      %p773 = scmp.ne.s32.totalorder %s768, %s770
      %p774 = scmp.eq.s32.totalorder %s93, 0
      %p775 = por %p773, %p774
      %p776 = scmp.ne.s32.totalorder %s768, %s770
      %p777 = scmp.eq.s32.totalorder %s98, 1
      %p778 = por %p776, %p777
      %p779 = scmp.ne.s32.totalorder %s770, %s771
      %p780 = scmp.eq.s32.totalorder %s98, 0
      %p781 = por %p779, %p780
      %p782 = scmp.ne.s32.totalorder %s770, %s771
      %p783 = scmp.eq.s32.totalorder %s99, 1
      %p784 = por %p782, %p783
      %p786 = scmp.ne.s32.totalorder %s771, %s785
      %p787 = scmp.eq.s32.totalorder %s99, 0
      %p788 = por %p786, %p787
      %s790 = sadd.s32 %s789, 1
      %p793 = scmp.eq.s32.totalorder %s93, 1
      %p794 = scmp.ne.s32.totalorder %s789, %s791
      %p795 = scmp.eq.s32.totalorder %s93, 0
      %p796 = por %p794, %p795
      %p797 = scmp.ne.s32.totalorder %s789, %s791
      %p798 = scmp.eq.s32.totalorder %s98, 1
      %p799 = por %p797, %p798
      %p800 = scmp.ne.s32.totalorder %s791, %s792
      %p801 = scmp.eq.s32.totalorder %s98, 0
      %p802 = por %p800, %p801
      %p803 = scmp.ne.s32.totalorder %s791, %s792
      %p804 = scmp.eq.s32.totalorder %s99, 1
      %p805 = por %p803, %p804
      %p807 = scmp.ne.s32.totalorder %s792, %s806
      %p808 = scmp.eq.s32.totalorder %s99, 0
      %p809 = por %p807, %p808
      %s811 = sadd.s32 %s810, 1
      %p814 = scmp.eq.s32.totalorder %s93, 1
      %p815 = scmp.ne.s32.totalorder %s810, %s812
      %p816 = scmp.eq.s32.totalorder %s93, 0
      %p817 = por %p815, %p816
      %p818 = scmp.ne.s32.totalorder %s810, %s812
      %p819 = scmp.eq.s32.totalorder %s98, 1
      %p820 = por %p818, %p819
      %p821 = scmp.ne.s32.totalorder %s812, %s813
      %p822 = scmp.eq.s32.totalorder %s98, 0
      %p823 = por %p821, %p822
      %p824 = scmp.ne.s32.totalorder %s812, %s813
      %p825 = scmp.eq.s32.totalorder %s99, 1
      %p826 = por %p824, %p825
      %p828 = scmp.ne.s32.totalorder %s813, %s827
      %p829 = scmp.eq.s32.totalorder %s99, 0
      %p830 = por %p828, %p829
      %p831 = scmp.le.s32.totalorder 1, %s93
      %p832 = scmp.lt.s32.totalorder %s93, 3
      %p833 = pnand %p831, %p832
      %p834 = pneg %p833
      // Predicated region
      $region9: #{tpu_custom_call.1} parent=5 // pred_check
        _
      $region10: #{tpu_custom_call.1} parent=5 // pred_check_branch
        %836 = sbr.rel (%p833) target = $region12
      $region11: #{tpu_custom_call.1} parent=5 // pred_region
        %s837 = ssub.s32 %s93, 1
        // Predicated region
        $region13: #{tpu_custom_call.1} parent=11 // pred_check
          %p838 = pneg %p114
        $region14: #{tpu_custom_call.1} parent=11 // pred_check_branch
          %840 = sbr.rel (%p838) target = $region16
        $region15: #{tpu_custom_call.1} parent=11 // pred_region
          _
        $region16: #{tpu_custom_call.1} parent=11 // pred_fallthru
          _
        // Predicated region
        $region17: #{tpu_custom_call.1} parent=11 // pred_check
          %p841 = pneg %p135
        $region18: #{tpu_custom_call.1} parent=11 // pred_check_branch
          %843 = sbr.rel (%p841) target = $region20
        $region19: #{tpu_custom_call.1} parent=11 // pred_region
          %845 = vsyncadd [#allocation4], 0
          %s847 = sshll.u32 %s3, 4
          %s848 = int_to_ptr.hbm [resolvable:$true] %s847
          %s849 = sshll.u32 [#allocation3], 4
          %s850 = int_to_ptr.vmem [resolvable:$true] %s849
          %852 = dma.hbm_to_vmem [thread:$0]  %s848, 128, %s850, [#allocation4]
        $region20: #{tpu_custom_call.1} parent=11 // pred_fallthru
          _
        // Predicated region
        $region21: #{tpu_custom_call.1} parent=11 // pred_check
          %p853 = pneg %p156
        $region22: #{tpu_custom_call.1} parent=11 // pred_check_branch
          %855 = sbr.rel (%p853) target = $region24
        $region23: #{tpu_custom_call.1} parent=11 // pred_region
          %857 = vsyncadd [#allocation7], 0
          %s859 = sshll.u32 %s5, 4
          %s860 = int_to_ptr.hbm [resolvable:$true] %s859
          %s861 = sshll.u32 [#allocation6], 4
          %s862 = int_to_ptr.vmem [resolvable:$true] %s861
          %864 = dma.hbm_to_vmem [thread:$0]  %s860, 64, %s862, [#allocation7]
        $region24: #{tpu_custom_call.1} parent=11 // pred_fallthru
          _
        // Predicated region
        $region25: #{tpu_custom_call.1} parent=11 // pred_check
          %p865 = pneg %p177
        $region26: #{tpu_custom_call.1} parent=11 // pred_check_branch
          %867 = sbr.rel (%p865) target = $region28
        $region27: #{tpu_custom_call.1} parent=11 // pred_region
          _
        $region28: #{tpu_custom_call.1} parent=11 // pred_fallthru
          _
        // Predicated region
        $region29: #{tpu_custom_call.1} parent=11 // pred_check
          %p868 = pneg %p198
        $region30: #{tpu_custom_call.1} parent=11 // pred_check_branch
          %870 = sbr.rel (%p868) target = $region32
        $region31: #{tpu_custom_call.1} parent=11 // pred_region
          %872 = vsyncadd [#allocation7], 0
          %s874 = sshll.u32 %s9, 4
          %s875 = int_to_ptr.hbm [resolvable:$true] %s874
          %s876 = sshll.u32 [#allocation8], 4
          %s877 = int_to_ptr.vmem [resolvable:$true] %s876
          %879 = dma.hbm_to_vmem [thread:$0]  %s875, 128, %s877, [#allocation7]
        $region32: #{tpu_custom_call.1} parent=11 // pred_fallthru
          _
        // Predicated region
        $region33: #{tpu_custom_call.1} parent=11 // pred_check
          %p880 = pneg %p219
        $region34: #{tpu_custom_call.1} parent=11 // pred_check_branch
          %882 = sbr.rel (%p880) target = $region36
        $region35: #{tpu_custom_call.1} parent=11 // pred_region
          %884 = vsyncadd [#allocation10], 0
          %s886 = sshll.u32 %s11, 4
          %s887 = int_to_ptr.hbm [resolvable:$true] %s886
          %s888 = sshll.u32 [#allocation9], 4
          %s889 = int_to_ptr.vmem [resolvable:$true] %s888
          %891 = dma.hbm_to_vmem [thread:$0]  %s887, 128, %s889, [#allocation10]
        $region36: #{tpu_custom_call.1} parent=11 // pred_fallthru
          _
        // Predicated region
        $region37: #{tpu_custom_call.1} parent=11 // pred_check
          %p892 = pneg %p240
        $region38: #{tpu_custom_call.1} parent=11 // pred_check_branch
          %894 = sbr.rel (%p892) target = $region40
        $region39: #{tpu_custom_call.1} parent=11 // pred_region
          %896 = vsyncadd [#allocation10], 0
          %s898 = sshll.u32 %s13, 4
          %s899 = int_to_ptr.hbm [resolvable:$true] %s898
          %s900 = sshll.u32 [#allocation11], 4
          %s901 = int_to_ptr.vmem [resolvable:$true] %s900
          %903 = dma.hbm_to_vmem [thread:$0]  %s899, 128, %s901, [#allocation10]
        $region40: #{tpu_custom_call.1} parent=11 // pred_fallthru
          _
        // Predicated region
        $region41: #{tpu_custom_call.1} parent=11 // pred_check
          %p904 = pneg %p781
        $region42: #{tpu_custom_call.1} parent=11 // pred_check_branch
          %906 = sbr.rel (%p904) target = $region44
        $region43: #{tpu_custom_call.1} parent=11 // pred_region
          _
        $region44: #{tpu_custom_call.1} parent=11 // pred_fallthru
          _
        // Predicated region
        $region45: #{tpu_custom_call.1} parent=11 // pred_check
          %p907 = pneg %p802
        $region46: #{tpu_custom_call.1} parent=11 // pred_check_branch
          %909 = sbr.rel (%p907) target = $region48
        $region47: #{tpu_custom_call.1} parent=11 // pred_region
          _
        $region48: #{tpu_custom_call.1} parent=11 // pred_fallthru
          _
      $region12: #{tpu_custom_call.1} parent=5 // pred_fallthru
        _
      %p910 = scmp.lt.s32.totalorder %s93, 2
      // Predicated region
      $region49: #{tpu_custom_call.1} parent=5 // pred_check
        %p911 = pneg %p910
      $region50: #{tpu_custom_call.1} parent=5 // pred_check_branch
        %913 = sbr.rel (%p911) target = $region52
      $region51: #{tpu_custom_call.1} parent=5 // pred_region
        // Predicated region
        $region53: #{tpu_custom_call.1} parent=51 // pred_check
          %p914 = pneg %p260
        $region54: #{tpu_custom_call.1} parent=51 // pred_check_branch
          %916 = sbr.rel (%p914) target = $region56
        $region55: #{tpu_custom_call.1} parent=51 // pred_region
          %p917 = scmp.lt.s32.totalorder %s93, 1
          %s918 = scalar_select %p917, %s93, 1
          %s919 = smul.addr %s918, 4
          %s920 = smul.addr %s919, 8
          %s921 = scalar_lea.vmem %s15, %s920
        $region56: #{tpu_custom_call.1} parent=51 // pred_fallthru
          _
        // Predicated region
        $region57: #{tpu_custom_call.1} parent=51 // pred_check
          %p922 = pneg %p286
        $region58: #{tpu_custom_call.1} parent=51 // pred_check_branch
          %924 = sbr.rel (%p922) target = $region60
        $region59: #{tpu_custom_call.1} parent=51 // pred_region
          %p925 = scmp.lt.s32.totalorder %s93, 1
          %s926 = scalar_select %p925, %s93, 1
          %s927 = scalar_lea.vmem %s17, %s926
        $region60: #{tpu_custom_call.1} parent=51 // pred_fallthru
          _
        // Predicated region
        $region61: #{tpu_custom_call.1} parent=51 // pred_check
          %p928 = pneg %p312
        $region62: #{tpu_custom_call.1} parent=51 // pred_check_branch
          %930 = sbr.rel (%p928) target = $region64
        $region63: #{tpu_custom_call.1} parent=51 // pred_region
          %p931 = scmp.lt.s32.totalorder %s93, 1
          %s932 = scalar_select %p931, %s93, 1
          %s933 = smul.addr %s932, 4
          %s934 = smul.addr %s933, 8
          %s935 = scalar_lea.vmem %s19, %s934
        $region64: #{tpu_custom_call.1} parent=51 // pred_fallthru
          _
        // Predicated region
        $region65: #{tpu_custom_call.1} parent=51 // pred_check
          %p936 = pneg %p338
        $region66: #{tpu_custom_call.1} parent=51 // pred_check_branch
          %938 = sbr.rel (%p936) target = $region68
        $region67: #{tpu_custom_call.1} parent=51 // pred_region
          %s939 = sand.u32 %s93, 1
          %s940 = scalar_lea.sflag [#allocation13], %s939
          %s941 = sand.u32 %s328, 1
          %s942 = scalar_lea.vmem [#allocation12], %s941
          %944 = vsyncadd %s940, 0
          %s945 = scalar_lea.hbm %s21, %s93
          %s947 = sshll.u32 %s945, 4
          %s948 = int_to_ptr.hbm [resolvable:$true] %s947
          %s949 = sshll.u32 %s942, 4
          %s950 = int_to_ptr.vmem [resolvable:$true] %s949
          %952 = dma.hbm_to_vmem [thread:$0]  %s948, 16, %s950, %s940
        $region68: #{tpu_custom_call.1} parent=51 // pred_fallthru
          _
        // Predicated region
        $region69: #{tpu_custom_call.1} parent=51 // pred_check
          %p953 = pneg %p364
        $region70: #{tpu_custom_call.1} parent=51 // pred_check_branch
          %955 = sbr.rel (%p953) target = $region72
        $region71: #{tpu_custom_call.1} parent=51 // pred_region
          %s956 = sand.u32 %s93, 1
          %s957 = scalar_lea.sflag [#allocation13], %s956
          %s958 = sand.u32 %s354, 1
          %s959 = scalar_lea.vmem [#allocation14], %s958
          %961 = vsyncadd %s957, 0
          %s962 = scalar_lea.hbm %s23, %s93
          %s964 = sshll.u32 %s962, 4
          %s965 = int_to_ptr.hbm [resolvable:$true] %s964
          %s966 = sshll.u32 %s959, 4
          %s967 = int_to_ptr.vmem [resolvable:$true] %s966
          %969 = dma.hbm_to_vmem [thread:$0]  %s965, 16, %s967, %s957
        $region72: #{tpu_custom_call.1} parent=51 // pred_fallthru
          _
        // Predicated region
        $region73: #{tpu_custom_call.1} parent=51 // pred_check
          %p970 = pneg %p390
        $region74: #{tpu_custom_call.1} parent=51 // pred_check_branch
          %972 = sbr.rel (%p970) target = $region76
        $region75: #{tpu_custom_call.1} parent=51 // pred_region
          %s973 = sand.u32 %s93, 1
          %s974 = scalar_lea.sflag [#allocation16], %s973
          %s975 = sand.u32 %s380, 1
          %s976 = scalar_lea.vmem [#allocation15], %s975
          %978 = vsyncadd %s974, 0
          %s979 = scalar_lea.hbm %s25, %s93
          %s981 = sshll.u32 %s979, 4
          %s982 = int_to_ptr.hbm [resolvable:$true] %s981
          %s983 = sshll.u32 %s976, 4
          %s984 = int_to_ptr.vmem [resolvable:$true] %s983
          %986 = dma.hbm_to_vmem [thread:$0]  %s982, 16, %s984, %s974
        $region76: #{tpu_custom_call.1} parent=51 // pred_fallthru
          _
        // Predicated region
        $region77: #{tpu_custom_call.1} parent=51 // pred_check
          %p987 = pneg %p416
        $region78: #{tpu_custom_call.1} parent=51 // pred_check_branch
          %989 = sbr.rel (%p987) target = $region80
        $region79: #{tpu_custom_call.1} parent=51 // pred_region
          %p990 = scmp.lt.s32.totalorder %s93, 1
          %s991 = scalar_select %p990, %s93, 1
          %s992 = smul.addr %s991, 4
          %s993 = smul.addr %s992, 8
          %s994 = scalar_lea.vmem %s27, %s993
        $region80: #{tpu_custom_call.1} parent=51 // pred_fallthru
          _
        // Predicated region
        $region81: #{tpu_custom_call.1} parent=51 // pred_check
          %p995 = pneg %p442
        $region82: #{tpu_custom_call.1} parent=51 // pred_check_branch
          %997 = sbr.rel (%p995) target = $region84
        $region83: #{tpu_custom_call.1} parent=51 // pred_region
          %s998 = sand.u32 %s93, 1
          %s999 = scalar_lea.sflag [#allocation16], %s998
          %s1000 = sand.u32 %s432, 1
          %s1001 = scalar_lea.vmem [#allocation17], %s1000
          %1003 = vsyncadd %s999, 0
          %s1004 = scalar_lea.hbm %s29, %s93
          %s1006 = sshll.u32 %s1004, 4
          %s1007 = int_to_ptr.hbm [resolvable:$true] %s1006
          %s1008 = sshll.u32 %s1001, 4
          %s1009 = int_to_ptr.vmem [resolvable:$true] %s1008
          %1011 = dma.hbm_to_vmem [thread:$0]  %s1007, 16, %s1009, %s999
        $region84: #{tpu_custom_call.1} parent=51 // pred_fallthru
          _
        // Predicated region
        $region85: #{tpu_custom_call.1} parent=51 // pred_check
          %p1012 = pneg %p468
        $region86: #{tpu_custom_call.1} parent=51 // pred_check_branch
          %1014 = sbr.rel (%p1012) target = $region88
        $region87: #{tpu_custom_call.1} parent=51 // pred_region
          %s1015 = sand.u32 %s93, 1
          %s1016 = scalar_lea.sflag [#allocation19], %s1015
          %s1017 = sand.u32 %s458, 1
          %s1018 = smul.addr %s1017, 32
          %s1019 = scalar_lea.vmem [#allocation18], %s1018
          %1021 = vsyncadd %s1016, 0
          %s1022 = smul.addr %s93, 4
          %s1023 = smul.addr %s1022, 8
          %s1024 = scalar_lea.hbm %s31, %s1023
          %s1025 = sshll.u32 %s1024, 4
          %s1026 = int_to_ptr.hbm [resolvable:$true] %s1025
          %s1027 = sshll.u32 %s1019, 4
          %s1028 = int_to_ptr.vmem [resolvable:$true] %s1027
          %1033 = dma.hbm_to_vmem [thread:$0]  %s1026, 512, %s1028, %s1016, 128, 128, 8
        $region88: #{tpu_custom_call.1} parent=51 // pred_fallthru
          _
        // Predicated region
        $region89: #{tpu_custom_call.1} parent=51 // pred_check
          %p1034 = pneg %p494
        $region90: #{tpu_custom_call.1} parent=51 // pred_check_branch
          %1036 = sbr.rel (%p1034) target = $region92
        $region91: #{tpu_custom_call.1} parent=51 // pred_region
          %s1037 = sand.u32 %s93, 1
          %s1038 = scalar_lea.sflag [#allocation19], %s1037
          %s1039 = sand.u32 %s484, 1
          %s1040 = scalar_lea.vmem [#allocation20], %s1039
          %1042 = vsyncadd %s1038, 0
          %s1043 = scalar_lea.hbm %s33, %s93
          %s1045 = sshll.u32 %s1043, 4
          %s1046 = int_to_ptr.hbm [resolvable:$true] %s1045
          %s1047 = sshll.u32 %s1040, 4
          %s1048 = int_to_ptr.vmem [resolvable:$true] %s1047
          %1050 = dma.hbm_to_vmem [thread:$0]  %s1046, 16, %s1048, %s1038
        $region92: #{tpu_custom_call.1} parent=51 // pred_fallthru
          _
        // Predicated region
        $region93: #{tpu_custom_call.1} parent=51 // pred_check
          %p1051 = pneg %p520
        $region94: #{tpu_custom_call.1} parent=51 // pred_check_branch
          %1053 = sbr.rel (%p1051) target = $region96
        $region95: #{tpu_custom_call.1} parent=51 // pred_region
          %s1054 = sand.u32 %s93, 1
          %s1055 = scalar_lea.sflag [#allocation22], %s1054
          %s1056 = sand.u32 %s510, 1
          %s1057 = smul.addr %s1056, 32
          %s1058 = scalar_lea.vmem [#allocation21], %s1057
          %1060 = vsyncadd %s1055, 0
          %s1061 = smul.addr %s93, 4
          %s1062 = smul.addr %s1061, 8
          %s1063 = scalar_lea.hbm %s35, %s1062
          %s1064 = sshll.u32 %s1063, 4
          %s1065 = int_to_ptr.hbm [resolvable:$true] %s1064
          %s1066 = sshll.u32 %s1058, 4
          %s1067 = int_to_ptr.vmem [resolvable:$true] %s1066
          %1072 = dma.hbm_to_vmem [thread:$0]  %s1065, 512, %s1067, %s1055, 128, 128, 8
        $region96: #{tpu_custom_call.1} parent=51 // pred_fallthru
          _
        // Predicated region
        $region97: #{tpu_custom_call.1} parent=51 // pred_check
          %p1073 = pneg %p546
        $region98: #{tpu_custom_call.1} parent=51 // pred_check_branch
          %1075 = sbr.rel (%p1073) target = $region100
        $region99: #{tpu_custom_call.1} parent=51 // pred_region
          %s1076 = sand.u32 %s93, 1
          %s1077 = scalar_lea.sflag [#allocation22], %s1076
          %s1078 = sand.u32 %s536, 1
          %s1079 = scalar_lea.vmem [#allocation23], %s1078
          %1081 = vsyncadd %s1077, 0
          %s1082 = scalar_lea.hbm %s37, %s93
          %s1084 = sshll.u32 %s1082, 4
          %s1085 = int_to_ptr.hbm [resolvable:$true] %s1084
          %s1086 = sshll.u32 %s1079, 4
          %s1087 = int_to_ptr.vmem [resolvable:$true] %s1086
          %1089 = dma.hbm_to_vmem [thread:$0]  %s1085, 16, %s1087, %s1077
        $region100: #{tpu_custom_call.1} parent=51 // pred_fallthru
          _
        // Predicated region
        $region101: #{tpu_custom_call.1} parent=51 // pred_check
          %p1090 = pneg %p572
        $region102: #{tpu_custom_call.1} parent=51 // pred_check_branch
          %1092 = sbr.rel (%p1090) target = $region104
        $region103: #{tpu_custom_call.1} parent=51 // pred_region
          %s1093 = sand.u32 %s93, 1
          %s1094 = scalar_lea.sflag [#allocation25], %s1093
          %s1095 = sand.u32 %s562, 1
          %s1096 = scalar_lea.vmem [#allocation24], %s1095
          %1098 = vsyncadd %s1094, 0
          %s1099 = scalar_lea.hbm %s39, %s93
          %s1101 = sshll.u32 %s1099, 4
          %s1102 = int_to_ptr.hbm [resolvable:$true] %s1101
          %s1103 = sshll.u32 %s1096, 4
          %s1104 = int_to_ptr.vmem [resolvable:$true] %s1103
          %1106 = dma.hbm_to_vmem [thread:$0]  %s1102, 16, %s1104, %s1094
        $region104: #{tpu_custom_call.1} parent=51 // pred_fallthru
          _
        // Predicated region
        $region105: #{tpu_custom_call.1} parent=51 // pred_check
          %p1107 = pneg %p598
        $region106: #{tpu_custom_call.1} parent=51 // pred_check_branch
          %1109 = sbr.rel (%p1107) target = $region108
        $region107: #{tpu_custom_call.1} parent=51 // pred_region
          %s1110 = sand.u32 %s93, 1
          %s1111 = scalar_lea.sflag [#allocation25], %s1110
          %s1112 = sand.u32 %s588, 1
          %s1113 = scalar_lea.vmem [#allocation26], %s1112
          %1115 = vsyncadd %s1111, 0
          %s1116 = scalar_lea.hbm %s41, %s93
          %s1118 = sshll.u32 %s1116, 4
          %s1119 = int_to_ptr.hbm [resolvable:$true] %s1118
          %s1120 = sshll.u32 %s1113, 4
          %s1121 = int_to_ptr.vmem [resolvable:$true] %s1120
          %1123 = dma.hbm_to_vmem [thread:$0]  %s1119, 16, %s1121, %s1111
        $region108: #{tpu_custom_call.1} parent=51 // pred_fallthru
          _
        // Predicated region
        $region109: #{tpu_custom_call.1} parent=51 // pred_check
          %p1124 = pneg %p624
        $region110: #{tpu_custom_call.1} parent=51 // pred_check_branch
          %1126 = sbr.rel (%p1124) target = $region112
        $region111: #{tpu_custom_call.1} parent=51 // pred_region
          %s1127 = sand.u32 %s93, 1
          %s1128 = scalar_lea.sflag [#allocation28], %s1127
          %s1129 = sand.u32 %s614, 1
          %s1130 = smul.addr %s1129, 32
          %s1131 = scalar_lea.vmem [#allocation27], %s1130
          %1133 = vsyncadd %s1128, 0
          %s1134 = smul.addr %s93, 4
          %s1135 = smul.addr %s1134, 8
          %s1136 = scalar_lea.hbm %s43, %s1135
          %s1137 = sshll.u32 %s1136, 4
          %s1138 = int_to_ptr.hbm [resolvable:$true] %s1137
          %s1139 = sshll.u32 %s1131, 4
          %s1140 = int_to_ptr.vmem [resolvable:$true] %s1139
          %1145 = dma.hbm_to_vmem [thread:$0]  %s1138, 512, %s1140, %s1128, 128, 128, 8
        $region112: #{tpu_custom_call.1} parent=51 // pred_fallthru
          _
        // Predicated region
        $region113: #{tpu_custom_call.1} parent=51 // pred_check
          %p1146 = pneg %p650
        $region114: #{tpu_custom_call.1} parent=51 // pred_check_branch
          %1148 = sbr.rel (%p1146) target = $region116
        $region115: #{tpu_custom_call.1} parent=51 // pred_region
          %s1149 = sand.u32 %s93, 1
          %s1150 = scalar_lea.sflag [#allocation28], %s1149
          %s1151 = sand.u32 %s640, 1
          %s1152 = scalar_lea.vmem [#allocation29], %s1151
          %1154 = vsyncadd %s1150, 0
          %s1155 = scalar_lea.hbm %s45, %s93
          %s1157 = sshll.u32 %s1155, 4
          %s1158 = int_to_ptr.hbm [resolvable:$true] %s1157
          %s1159 = sshll.u32 %s1152, 4
          %s1160 = int_to_ptr.vmem [resolvable:$true] %s1159
          %1162 = dma.hbm_to_vmem [thread:$0]  %s1158, 16, %s1160, %s1150
        $region116: #{tpu_custom_call.1} parent=51 // pred_fallthru
          _
        // Predicated region
        $region117: #{tpu_custom_call.1} parent=51 // pred_check
          %p1163 = pneg %p676
        $region118: #{tpu_custom_call.1} parent=51 // pred_check_branch
          %1165 = sbr.rel (%p1163) target = $region120
        $region119: #{tpu_custom_call.1} parent=51 // pred_region
          %p1166 = scmp.lt.s32.totalorder %s93, 1
          %s1167 = scalar_select %p1166, %s93, 1
          %s1168 = smul.addr %s1167, 8
          %s1169 = smul.addr %s1168, 8
          %s1170 = scalar_lea.vmem %s47, %s1169
        $region120: #{tpu_custom_call.1} parent=51 // pred_fallthru
          _
        // Predicated region
        $region121: #{tpu_custom_call.1} parent=51 // pred_check
          %p1171 = pneg %p702
        $region122: #{tpu_custom_call.1} parent=51 // pred_check_branch
          %1173 = sbr.rel (%p1171) target = $region124
        $region123: #{tpu_custom_call.1} parent=51 // pred_region
          %s1174 = sand.u32 %s93, 1
          %s1175 = scalar_lea.sflag [#allocation31], %s1174
          %s1176 = sand.u32 %s692, 1
          %s1177 = scalar_lea.vmem [#allocation30], %s1176
          %1179 = vsyncadd %s1175, 0
          %s1180 = scalar_lea.hbm %s49, %s93
          %s1182 = sshll.u32 %s1180, 4
          %s1183 = int_to_ptr.hbm [resolvable:$true] %s1182
          %s1184 = sshll.u32 %s1177, 4
          %s1185 = int_to_ptr.vmem [resolvable:$true] %s1184
          %1187 = dma.hbm_to_vmem [thread:$0]  %s1183, 16, %s1185, %s1175
        $region124: #{tpu_custom_call.1} parent=51 // pred_fallthru
          _
        // Predicated region
        $region125: #{tpu_custom_call.1} parent=51 // pred_check
          %p1188 = pneg %p728
        $region126: #{tpu_custom_call.1} parent=51 // pred_check_branch
          %1190 = sbr.rel (%p1188) target = $region128
        $region127: #{tpu_custom_call.1} parent=51 // pred_region
          %s1191 = sand.u32 %s93, 1
          %s1192 = scalar_lea.sflag [#allocation31], %s1191
          %s1193 = sand.u32 %s718, 1
          %s1194 = scalar_lea.vmem [#allocation32], %s1193
          %1196 = vsyncadd %s1192, 0
          %s1197 = scalar_lea.hbm %s51, %s93
          %s1199 = sshll.u32 %s1197, 4
          %s1200 = int_to_ptr.hbm [resolvable:$true] %s1199
          %s1201 = sshll.u32 %s1194, 4
          %s1202 = int_to_ptr.vmem [resolvable:$true] %s1201
          %1204 = dma.hbm_to_vmem [thread:$0]  %s1200, 16, %s1202, %s1192
        $region128: #{tpu_custom_call.1} parent=51 // pred_fallthru
          _
        // Predicated region
        $region129: #{tpu_custom_call.1} parent=51 // pred_check
          %p1205 = pneg %p754
        $region130: #{tpu_custom_call.1} parent=51 // pred_check_branch
          %1207 = sbr.rel (%p1205) target = $region132
        $region131: #{tpu_custom_call.1} parent=51 // pred_region
          %s1208 = sand.u32 %s744, 1
          %s1209 = scalar_lea.sflag [#allocation34], %s1208
          %s1210 = sand.u32 %s744, 1
          %s1211 = scalar_lea.vmem [#allocation33], %s1210
          %1213 = vsyncadd %s1209, 0
          %s1214 = scalar_lea.hbm %s53, %s93
          %s1216 = sshll.u32 %s1214, 4
          %s1217 = int_to_ptr.hbm [resolvable:$true] %s1216
          %s1218 = sshll.u32 %s1211, 4
          %s1219 = int_to_ptr.vmem [resolvable:$true] %s1218
          %1221 = dma.hbm_to_vmem [thread:$0]  %s1217, 16, %s1219, %s1209
        $region132: #{tpu_custom_call.1} parent=51 // pred_fallthru
          _
      $region52: #{tpu_custom_call.1} parent=5 // pred_fallthru
        _
      %p1222 = scmp.le.s32.totalorder 1, %s93
      %p1223 = scmp.lt.s32.totalorder %s93, 3
      %p1224 = pnand %p1222, %p1223
      %p1225 = pneg %p1224
      // Predicated region
      $region133: #{tpu_custom_call.1} parent=5 // pred_check
        _
      $region134: #{tpu_custom_call.1} parent=5 // pred_check_branch
        %1227 = sbr.rel (%p1224) target = $region136
      $region135: #{tpu_custom_call.1} parent=5 // pred_region
        %s1228 = ssub.s32 %s93, 1
        // Predicated region
        $region137: #{tpu_custom_call.1} parent=135 // pred_check
          %p1229 = pneg %p135
        $region138: #{tpu_custom_call.1} parent=135 // pred_check_branch
          %1231 = sbr.rel (%p1229) target = $region140
        $region139: #{tpu_custom_call.1} parent=135 // pred_region
          %1233 = dma.done [#allocation4], 128
        $region140: #{tpu_custom_call.1} parent=135 // pred_fallthru
          _
        // Predicated region
        $region141: #{tpu_custom_call.1} parent=135 // pred_check
          %p1234 = pneg %p156
        $region142: #{tpu_custom_call.1} parent=135 // pred_check_branch
          %1236 = sbr.rel (%p1234) target = $region144
        $region143: #{tpu_custom_call.1} parent=135 // pred_region
          %1238 = dma.done [#allocation7], 64
        $region144: #{tpu_custom_call.1} parent=135 // pred_fallthru
          _
        // Predicated region
        $region145: #{tpu_custom_call.1} parent=135 // pred_check
          %p1239 = pneg %p198
        $region146: #{tpu_custom_call.1} parent=135 // pred_check_branch
          %1241 = sbr.rel (%p1239) target = $region148
        $region147: #{tpu_custom_call.1} parent=135 // pred_region
          %1243 = dma.done [#allocation7], 128
        $region148: #{tpu_custom_call.1} parent=135 // pred_fallthru
          _
        // Predicated region
        $region149: #{tpu_custom_call.1} parent=135 // pred_check
          %p1244 = pneg %p219
        $region150: #{tpu_custom_call.1} parent=135 // pred_check_branch
          %1246 = sbr.rel (%p1244) target = $region152
        $region151: #{tpu_custom_call.1} parent=135 // pred_region
          %1248 = dma.done [#allocation10], 128
        $region152: #{tpu_custom_call.1} parent=135 // pred_fallthru
          _
        // Predicated region
        $region153: #{tpu_custom_call.1} parent=135 // pred_check
          %p1249 = pneg %p240
        $region154: #{tpu_custom_call.1} parent=135 // pred_check_branch
          %1251 = sbr.rel (%p1249) target = $region156
        $region155: #{tpu_custom_call.1} parent=135 // pred_region
          %1253 = dma.done [#allocation10], 128
        $region156: #{tpu_custom_call.1} parent=135 // pred_fallthru
          _
        %s1254 = sand.u32 %s98, 1
        %s1255 = scalar_lea.sflag [#allocation13], %s1254
        %s1256 = sand.u32 %s331, 1
        %s1257 = scalar_lea.vmem [#allocation12], %s1256
        // Predicated region
        $region157: #{tpu_custom_call.1} parent=135 // pred_check
          %p1258 = pneg %p344
        $region158: #{tpu_custom_call.1} parent=135 // pred_check_branch
          %1260 = sbr.rel (%p1258) target = $region160
        $region159: #{tpu_custom_call.1} parent=135 // pred_region
          %1262 = dma.done %s1255, 16
        $region160: #{tpu_custom_call.1} parent=135 // pred_fallthru
          _
        %s1263 = sand.u32 %s98, 1
        %s1264 = scalar_lea.sflag [#allocation13], %s1263
        %s1265 = sand.u32 %s357, 1
        %s1266 = scalar_lea.vmem [#allocation14], %s1265
        // Predicated region
        $region161: #{tpu_custom_call.1} parent=135 // pred_check
          %p1267 = pneg %p370
        $region162: #{tpu_custom_call.1} parent=135 // pred_check_branch
          %1269 = sbr.rel (%p1267) target = $region164
        $region163: #{tpu_custom_call.1} parent=135 // pred_region
          %1271 = dma.done %s1264, 16
        $region164: #{tpu_custom_call.1} parent=135 // pred_fallthru
          _
        %s1272 = sand.u32 %s98, 1
        %s1273 = scalar_lea.sflag [#allocation16], %s1272
        %s1274 = sand.u32 %s383, 1
        %s1275 = scalar_lea.vmem [#allocation15], %s1274
        // Predicated region
        $region165: #{tpu_custom_call.1} parent=135 // pred_check
          %p1276 = pneg %p396
        $region166: #{tpu_custom_call.1} parent=135 // pred_check_branch
          %1278 = sbr.rel (%p1276) target = $region168
        $region167: #{tpu_custom_call.1} parent=135 // pred_region
          %1280 = dma.done %s1273, 16
        $region168: #{tpu_custom_call.1} parent=135 // pred_fallthru
          _
        %s1281 = sand.u32 %s98, 1
        %s1282 = scalar_lea.sflag [#allocation16], %s1281
        %s1283 = sand.u32 %s435, 1
        %s1284 = scalar_lea.vmem [#allocation17], %s1283
        // Predicated region
        $region169: #{tpu_custom_call.1} parent=135 // pred_check
          %p1285 = pneg %p448
        $region170: #{tpu_custom_call.1} parent=135 // pred_check_branch
          %1287 = sbr.rel (%p1285) target = $region172
        $region171: #{tpu_custom_call.1} parent=135 // pred_region
          %1289 = dma.done %s1282, 16
        $region172: #{tpu_custom_call.1} parent=135 // pred_fallthru
          _
        %s1290 = sand.u32 %s98, 1
        %s1291 = scalar_lea.sflag [#allocation19], %s1290
        %s1292 = sand.u32 %s461, 1
        %s1293 = smul.addr %s1292, 32
        %s1294 = scalar_lea.vmem [#allocation18], %s1293
        // Predicated region
        $region173: #{tpu_custom_call.1} parent=135 // pred_check
          %p1295 = pneg %p474
        $region174: #{tpu_custom_call.1} parent=135 // pred_check_branch
          %1297 = sbr.rel (%p1295) target = $region176
        $region175: #{tpu_custom_call.1} parent=135 // pred_region
          %1299 = dma.done %s1291, 512
        $region176: #{tpu_custom_call.1} parent=135 // pred_fallthru
          _
        %s1300 = sand.u32 %s98, 1
        %s1301 = scalar_lea.sflag [#allocation19], %s1300
        %s1302 = sand.u32 %s487, 1
        %s1303 = scalar_lea.vmem [#allocation20], %s1302
        // Predicated region
        $region177: #{tpu_custom_call.1} parent=135 // pred_check
          %p1304 = pneg %p500
        $region178: #{tpu_custom_call.1} parent=135 // pred_check_branch
          %1306 = sbr.rel (%p1304) target = $region180
        $region179: #{tpu_custom_call.1} parent=135 // pred_region
          %1308 = dma.done %s1301, 16
        $region180: #{tpu_custom_call.1} parent=135 // pred_fallthru
          _
        %s1309 = sand.u32 %s98, 1
        %s1310 = scalar_lea.sflag [#allocation22], %s1309
        %s1311 = sand.u32 %s513, 1
        %s1312 = smul.addr %s1311, 32
        %s1313 = scalar_lea.vmem [#allocation21], %s1312
        // Predicated region
        $region181: #{tpu_custom_call.1} parent=135 // pred_check
          %p1314 = pneg %p526
        $region182: #{tpu_custom_call.1} parent=135 // pred_check_branch
          %1316 = sbr.rel (%p1314) target = $region184
        $region183: #{tpu_custom_call.1} parent=135 // pred_region
          %1318 = dma.done %s1310, 512
        $region184: #{tpu_custom_call.1} parent=135 // pred_fallthru
          _
        %s1319 = sand.u32 %s98, 1
        %s1320 = scalar_lea.sflag [#allocation22], %s1319
        %s1321 = sand.u32 %s539, 1
        %s1322 = scalar_lea.vmem [#allocation23], %s1321
        // Predicated region
        $region185: #{tpu_custom_call.1} parent=135 // pred_check
          %p1323 = pneg %p552
        $region186: #{tpu_custom_call.1} parent=135 // pred_check_branch
          %1325 = sbr.rel (%p1323) target = $region188
        $region187: #{tpu_custom_call.1} parent=135 // pred_region
          %1327 = dma.done %s1320, 16
        $region188: #{tpu_custom_call.1} parent=135 // pred_fallthru
          _
        %s1328 = sand.u32 %s98, 1
        %s1329 = scalar_lea.sflag [#allocation25], %s1328
        %s1330 = sand.u32 %s565, 1
        %s1331 = scalar_lea.vmem [#allocation24], %s1330
        // Predicated region
        $region189: #{tpu_custom_call.1} parent=135 // pred_check
          %p1332 = pneg %p578
        $region190: #{tpu_custom_call.1} parent=135 // pred_check_branch
          %1334 = sbr.rel (%p1332) target = $region192
        $region191: #{tpu_custom_call.1} parent=135 // pred_region
          %1336 = dma.done %s1329, 16
        $region192: #{tpu_custom_call.1} parent=135 // pred_fallthru
          _
        %s1337 = sand.u32 %s98, 1
        %s1338 = scalar_lea.sflag [#allocation25], %s1337
        %s1339 = sand.u32 %s591, 1
        %s1340 = scalar_lea.vmem [#allocation26], %s1339
        // Predicated region
        $region193: #{tpu_custom_call.1} parent=135 // pred_check
          %p1341 = pneg %p604
        $region194: #{tpu_custom_call.1} parent=135 // pred_check_branch
          %1343 = sbr.rel (%p1341) target = $region196
        $region195: #{tpu_custom_call.1} parent=135 // pred_region
          %1345 = dma.done %s1338, 16
        $region196: #{tpu_custom_call.1} parent=135 // pred_fallthru
          _
        %s1346 = sand.u32 %s98, 1
        %s1347 = scalar_lea.sflag [#allocation28], %s1346
        %s1348 = sand.u32 %s617, 1
        %s1349 = smul.addr %s1348, 32
        %s1350 = scalar_lea.vmem [#allocation27], %s1349
        // Predicated region
        $region197: #{tpu_custom_call.1} parent=135 // pred_check
          %p1351 = pneg %p630
        $region198: #{tpu_custom_call.1} parent=135 // pred_check_branch
          %1353 = sbr.rel (%p1351) target = $region200
        $region199: #{tpu_custom_call.1} parent=135 // pred_region
          %1355 = dma.done %s1347, 512
        $region200: #{tpu_custom_call.1} parent=135 // pred_fallthru
          _
        %s1356 = sand.u32 %s98, 1
        %s1357 = scalar_lea.sflag [#allocation28], %s1356
        %s1358 = sand.u32 %s643, 1
        %s1359 = scalar_lea.vmem [#allocation29], %s1358
        // Predicated region
        $region201: #{tpu_custom_call.1} parent=135 // pred_check
          %p1360 = pneg %p656
        $region202: #{tpu_custom_call.1} parent=135 // pred_check_branch
          %1362 = sbr.rel (%p1360) target = $region204
        $region203: #{tpu_custom_call.1} parent=135 // pred_region
          %1364 = dma.done %s1357, 16
        $region204: #{tpu_custom_call.1} parent=135 // pred_fallthru
          _
        %s1365 = sand.u32 %s98, 1
        %s1366 = scalar_lea.sflag [#allocation31], %s1365
        %s1367 = sand.u32 %s695, 1
        %s1368 = scalar_lea.vmem [#allocation30], %s1367
        // Predicated region
        $region205: #{tpu_custom_call.1} parent=135 // pred_check
          %p1369 = pneg %p708
        $region206: #{tpu_custom_call.1} parent=135 // pred_check_branch
          %1371 = sbr.rel (%p1369) target = $region208
        $region207: #{tpu_custom_call.1} parent=135 // pred_region
          %1373 = dma.done %s1366, 16
        $region208: #{tpu_custom_call.1} parent=135 // pred_fallthru
          _
        %s1374 = sand.u32 %s98, 1
        %s1375 = scalar_lea.sflag [#allocation31], %s1374
        %s1376 = sand.u32 %s721, 1
        %s1377 = scalar_lea.vmem [#allocation32], %s1376
        // Predicated region
        $region209: #{tpu_custom_call.1} parent=135 // pred_check
          %p1378 = pneg %p734
        $region210: #{tpu_custom_call.1} parent=135 // pred_check_branch
          %1380 = sbr.rel (%p1378) target = $region212
        $region211: #{tpu_custom_call.1} parent=135 // pred_region
          %1382 = dma.done %s1375, 16
        $region212: #{tpu_custom_call.1} parent=135 // pred_fallthru
          _
        %s1383 = sand.u32 %s747, 1
        %s1384 = scalar_lea.sflag [#allocation34], %s1383
        %s1385 = sand.u32 %s747, 1
        %s1386 = scalar_lea.vmem [#allocation33], %s1385
        // Predicated region
        $region213: #{tpu_custom_call.1} parent=135 // pred_check
          %p1387 = pneg %p760
        $region214: #{tpu_custom_call.1} parent=135 // pred_check_branch
          %1389 = sbr.rel (%p1387) target = $region216
        $region215: #{tpu_custom_call.1} parent=135 // pred_region
          %1391 = dma.done %s1384, 16
        $region216: #{tpu_custom_call.1} parent=135 // pred_fallthru
          _
        %p1392 = pneg %p114
        %p1393 = pneg %p111
        %p1394 = pneg %p135
        %p1395 = pneg %p132
        %p1396 = pneg %p156
        %p1397 = pneg %p153
        %p1398 = pneg %p177
        %p1399 = pneg %p174
        %p1400 = pneg %p198
        %p1401 = pneg %p195
        %p1402 = pneg %p219
        %p1403 = pneg %p216
        %p1404 = pneg %p240
        %p1405 = pneg %p237
        %p1406 = scmp.lt.s32.totalorder %s98, 1
        %s1407 = scalar_select %p1406, %s98, 1
        %s1408 = smul.addr %s1407, 4
        %s1409 = smul.addr %s1408, 8
        %s1410 = scalar_lea.vmem %s15, %s1409
        %p1411 = pneg %p266
        %p1412 = pneg %p263
        %p1413 = scmp.lt.s32.totalorder %s98, 1
        %s1414 = scalar_select %p1413, %s98, 1
        %s1415 = scalar_lea.vmem %s17, %s1414
        %p1416 = pneg %p292
        %p1417 = pneg %p289
        %p1418 = scmp.lt.s32.totalorder %s98, 1
        %s1419 = scalar_select %p1418, %s98, 1
        %s1420 = smul.addr %s1419, 4
        %s1421 = smul.addr %s1420, 8
        %s1422 = scalar_lea.vmem %s19, %s1421
        %p1423 = pneg %p318
        %p1424 = pneg %p315
        %s1425 = sand.u32 %s98, 1
        %s1426 = scalar_lea.sflag [#allocation13], %s1425
        %s1427 = sand.u32 %s331, 1
        %s1428 = scalar_lea.vmem [#allocation12], %s1427
        %p1429 = pneg %p344
        %p1430 = pneg %p341
        %s1431 = sand.u32 %s98, 1
        %s1432 = scalar_lea.sflag [#allocation13], %s1431
        %s1433 = sand.u32 %s357, 1
        %s1434 = scalar_lea.vmem [#allocation14], %s1433
        %p1435 = pneg %p370
        %p1436 = pneg %p367
        %s1437 = sand.u32 %s98, 1
        %s1438 = scalar_lea.sflag [#allocation16], %s1437
        %s1439 = sand.u32 %s383, 1
        %s1440 = scalar_lea.vmem [#allocation15], %s1439
        %p1441 = pneg %p396
        %p1442 = pneg %p393
        %p1443 = scmp.lt.s32.totalorder %s98, 1
        %s1444 = scalar_select %p1443, %s98, 1
        %s1445 = smul.addr %s1444, 4
        %s1446 = smul.addr %s1445, 8
        %s1447 = scalar_lea.vmem %s27, %s1446
        %p1448 = pneg %p422
        %p1449 = pneg %p419
        %s1450 = sand.u32 %s98, 1
        %s1451 = scalar_lea.sflag [#allocation16], %s1450
        %s1452 = sand.u32 %s435, 1
        %s1453 = scalar_lea.vmem [#allocation17], %s1452
        %p1454 = pneg %p448
        %p1455 = pneg %p445
        %s1456 = sand.u32 %s98, 1
        %s1457 = scalar_lea.sflag [#allocation19], %s1456
        %s1458 = sand.u32 %s461, 1
        %s1459 = smul.addr %s1458, 32
        %s1460 = scalar_lea.vmem [#allocation18], %s1459
        %p1461 = pneg %p474
        %p1462 = pneg %p471
        %s1463 = sand.u32 %s98, 1
        %s1464 = scalar_lea.sflag [#allocation19], %s1463
        %s1465 = sand.u32 %s487, 1
        %s1466 = scalar_lea.vmem [#allocation20], %s1465
        %p1467 = pneg %p500
        %p1468 = pneg %p497
        %s1469 = sand.u32 %s98, 1
        %s1470 = scalar_lea.sflag [#allocation22], %s1469
        %s1471 = sand.u32 %s513, 1
        %s1472 = smul.addr %s1471, 32
        %s1473 = scalar_lea.vmem [#allocation21], %s1472
        %p1474 = pneg %p526
        %p1475 = pneg %p523
        %s1476 = sand.u32 %s98, 1
        %s1477 = scalar_lea.sflag [#allocation22], %s1476
        %s1478 = sand.u32 %s539, 1
        %s1479 = scalar_lea.vmem [#allocation23], %s1478
        %p1480 = pneg %p552
        %p1481 = pneg %p549
        %s1482 = sand.u32 %s98, 1
        %s1483 = scalar_lea.sflag [#allocation25], %s1482
        %s1484 = sand.u32 %s565, 1
        %s1485 = scalar_lea.vmem [#allocation24], %s1484
        %p1486 = pneg %p578
        %p1487 = pneg %p575
        %s1488 = sand.u32 %s98, 1
        %s1489 = scalar_lea.sflag [#allocation25], %s1488
        %s1490 = sand.u32 %s591, 1
        %s1491 = scalar_lea.vmem [#allocation26], %s1490
        %p1492 = pneg %p604
        %p1493 = pneg %p601
        %s1494 = sand.u32 %s98, 1
        %s1495 = scalar_lea.sflag [#allocation28], %s1494
        %s1496 = sand.u32 %s617, 1
        %s1497 = smul.addr %s1496, 32
        %s1498 = scalar_lea.vmem [#allocation27], %s1497
        %p1499 = pneg %p630
        %p1500 = pneg %p627
        %s1501 = sand.u32 %s98, 1
        %s1502 = scalar_lea.sflag [#allocation28], %s1501
        %s1503 = sand.u32 %s643, 1
        %s1504 = scalar_lea.vmem [#allocation29], %s1503
        %p1505 = pneg %p656
        %p1506 = pneg %p653
        %p1507 = scmp.lt.s32.totalorder %s98, 1
        %s1508 = scalar_select %p1507, %s98, 1
        %s1509 = smul.addr %s1508, 8
        %s1510 = smul.addr %s1509, 8
        %s1511 = scalar_lea.vmem %s47, %s1510
        %p1512 = pneg %p682
        %p1513 = pneg %p679
        %s1514 = sand.u32 %s98, 1
        %s1515 = scalar_lea.sflag [#allocation31], %s1514
        %s1516 = sand.u32 %s695, 1
        %s1517 = scalar_lea.vmem [#allocation30], %s1516
        %p1518 = pneg %p708
        %p1519 = pneg %p705
        %s1520 = sand.u32 %s98, 1
        %s1521 = scalar_lea.sflag [#allocation31], %s1520
        %s1522 = sand.u32 %s721, 1
        %s1523 = scalar_lea.vmem [#allocation32], %s1522
        %p1524 = pneg %p734
        %p1525 = pneg %p731
        %s1526 = sand.u32 %s747, 1
        %s1527 = scalar_lea.sflag [#allocation34], %s1526
        %s1528 = sand.u32 %s747, 1
        %s1529 = scalar_lea.vmem [#allocation33], %s1528
        %p1530 = pneg %p760
        %p1531 = pneg %p757
        %p1532 = pneg %p781
        %p1533 = pneg %p778
        %p1534 = pneg %p802
        %p1535 = pneg %p799
        %p1536 = pneg %p823
        %p1537 = pneg %p820
        %p1538 = scmp.lt.s32.totalorder %s98, 1
        %s1539 = scalar_select %p1538, %s98, 1
        %s1540 = smul.addr %s1539, 4
        %s1541 = smul.addr %s1540, 8
        %s1542 = scalar_lea.vmem %s15, %s1541
        %p1543 = scmp.lt.s32.totalorder %s98, 1
        %s1544 = scalar_select %p1543, %s98, 1
        %s1545 = scalar_lea.vmem %s17, %s1544
        %p1546 = scmp.lt.s32.totalorder %s98, 1
        %s1547 = scalar_select %p1546, %s98, 1
        %s1548 = smul.addr %s1547, 4
        %s1549 = smul.addr %s1548, 8
        %s1550 = scalar_lea.vmem %s19, %s1549
        %p1551 = scmp.lt.s32.totalorder %s98, 1
        %s1552 = scalar_select %p1551, %s98, 1
        %s1553 = smul.addr %s1552, 4
        %s1554 = smul.addr %s1553, 8
        %s1555 = scalar_lea.vmem %s27, %s1554
        %p1556 = scmp.lt.s32.totalorder %s98, 1
        %s1557 = scalar_select %p1556, %s98, 1
        %s1558 = smul.addr %s1557, 8
        %s1559 = smul.addr %s1558, 8
        %s1560 = scalar_lea.vmem %s47, %s1559
        %p1561 = scmp.eq.s32.totalorder %s98, 0
        // Predicated region
        $region217: #{tpu_custom_call.1} parent=135 // pred_check
          %p1562 = pneg %p1561
        $region218: #{tpu_custom_call.1} parent=135 // pred_check_branch
          %1564 = sbr.rel (%p1562) target = $region220
        $region219: #{tpu_custom_call.1} parent=135 // pred_region
          %v1565 = vld [vmem:[%s1] sm:$0xff]
          %v1566 = vld [vmem:[#allocation6] sm:$0xf]
          %v1567 = vld [vmem:[%s7] sm:$0x1]
          %v1569 = vperm.slane %v1567, 0
          %vm1571 = vcmask 31744
          %v1573 = vsel %vm1571, %v1565, 0
          %vm1575 = vcmask 1043456
          %v1577 = vsel %vm1575, %v1566, 0
          %1579 = vmatpush.msra.mxu0 0.0
          %1580 = vmatpush.msra.mxu0 0.0
          %1581 = vmatpush.msra.mxu0 0.0
          %1582 = vmatpush.msra.mxu0 0.0
          %1583 = vmatpush.msra.mxu0 0.0
          %1584 = vmatpush.msra.mxu0 0.0
          %1585 = vmatpush.msra.mxu0 0.0
          %1586 = vmatpush.msra.mxu0 0.0
          %1587 = vmatpush.msra.mxu0 0.0
          %1588 = vmatpush.msra.mxu0 0.0
          %1589 = vmatpush.msra.mxu0 0.0
          %1590 = vmatpush.msra.mxu0 0.0
          %1591 = vmatpush.msra.mxu0 0.0
          %1592 = vmatpush.msra.mxu0 0.0
          %1593 = vmatpush.msra.mxu0 0.0
          %1594 = vmatpush.msra.mxu0 %v1577
          %1595 = vmatmul.f32.gmra.mxu0 %v1573
          %v1596 = vpop.f32.mrf.mxu0
          %v1597 = vadd.f32 %v1569, %v1596
          %1598 = vdwg.mxu0
          %v1599 = vld [vmem:[#allocation3] sm:$0xff]
          %v1600 = vadd.f32 %v1597, %v1599
          %vm1601 = vcmask 261120
          %1602 = vst.msk [vmem:[#allocation2] sm:$0xff] %vm1601, %v1600
        $region220: #{tpu_custom_call.1} parent=135 // pred_fallthru
          _
        %v1603 = vld [vmem:[#allocation2] sm:$0xff]
        %v1604 = vld [vmem:[#allocation8] sm:$0xff]
        %v1605 = vld [vmem:[%s1542] sm:$0xff]
        %v1606 = vld [vmem:[%s1542 + $0x8] sm:$0xff]
        %v1607 = vld [vmem:[%s1542 + $0x10] sm:$0xff]
        %v1608 = vld [vmem:[%s1542 + $0x18] sm:$0xff]
        %v1609 = vld [vmem:[%s1545] sm:$0x1]
        %v1611 = vperm.slane %v1609, 0
        %vm1613 = vcmask 261120
        %v1615 = vsel %vm1613, %v1603, 0
        %1617 = vmatpush.msra.mxu0 0.0
        %1618 = vmatpush.msra.mxu0 0.0
        %1619 = vmatpush.msra.mxu0 0.0
        %1620 = vmatpush.msra.mxu0 0.0
        %1621 = vmatpush.msra.mxu0 0.0
        %1622 = vmatpush.msra.mxu0 0.0
        %1623 = vmatpush.msra.mxu0 0.0
        %1624 = vmatpush.msra.mxu0 0.0
        %1625 = vmatpush.msra.mxu0 0.0
        %1626 = vmatpush.msra.mxu0 0.0
        %1627 = vmatpush.msra.mxu0 0.0
        %1628 = vmatpush.msra.mxu0 0.0
        %1629 = vmatpush.msra.mxu0 %v1608
        %1630 = vmatpush.msra.mxu0 %v1607
        %1631 = vmatpush.msra.mxu0 %v1606
        %1632 = vmatpush.msra.mxu0 %v1605
        %1633 = vmatmul.f32.gmra.mxu0 %v1615
        %v1634 = vpop.f32.mrf.mxu0
        %v1635 = vadd.f32 %v1611, %v1634
        %1636 = vdwg.mxu0
        %v1637 = vld [vmem:[#allocation9] sm:$0xff]
        %v1638 = vmul.f32 %v1635, 0.35355338
        %1640 = vrot.lane.b32.xlu0 %v1638, 120
        %v1641 = vpop.permute.xlu0 %1640
        %1642 = vrot.lane.b32.xlu0 %v1638, 112
        %v1643 = vpop.permute.xlu0 %1642
        %1644 = vrot.lane.b32.xlu0 %v1638, 104
        %v1645 = vpop.permute.xlu0 %1644
        %1647 = vrot.lane.b32.xlu0 %v1635, 120
        %v1648 = vpop.permute.xlu0 %1647
        %1649 = vrot.lane.b32.xlu0 %v1635, 112
        %v1650 = vpop.permute.xlu0 %1649
        %1651 = vrot.lane.b32.xlu0 %v1635, 104
        %v1652 = vpop.permute.xlu0 %1651
        %1653 = vrot.lane.b32.xlu0 %v1635, 96
        %v1654 = vpop.permute.xlu0 %1653
        %1655 = vrot.lane.b32.xlu0 %v1648, 96
        %v1656 = vpop.permute.xlu0 %1655
        %1657 = vrot.lane.b32.xlu0 %v1650, 96
        %v1658 = vpop.permute.xlu0 %1657
        %1659 = vrot.lane.b32.xlu0 %v1652, 96
        %v1660 = vpop.permute.xlu0 %1659
        %1665 = vxpose.xlu0.b32.start [1/16] %v1654, 128
        %1666 = vxpose.xlu0.b32.cont [2/16] 0.0, 128
        %1667 = vxpose.xlu0.b32.cont [3/16] 0.0, 128
        %1668 = vxpose.xlu0.b32.cont [4/16] 0.0, 128
        %1669 = vxpose.xlu0.b32.cont [5/16] 0.0, 128
        %1670 = vxpose.xlu0.b32.cont [6/16] 0.0, 128
        %1671 = vxpose.xlu0.b32.cont [7/16] 0.0, 128
        %1672 = vxpose.xlu0.b32.cont [8/16] 0.0, 128
        %1673 = vxpose.xlu0.b32.cont [9/16] 0.0, 128
        %1674 = vxpose.xlu0.b32.cont [10/16] 0.0, 128
        %1675 = vxpose.xlu0.b32.cont [11/16] 0.0, 128
        %1676 = vxpose.xlu0.b32.cont [12/16] 0.0, 128
        %1677 = vxpose.xlu0.b32.cont [13/16] 0.0, 128
        %1678 = vxpose.xlu0.b32.cont [14/16] 0.0, 128
        %1679 = vxpose.xlu0.b32.cont [15/16] 0.0, 128
        %1680 = vxpose.xlu0.b32.end [16/16] 0.0, 128
        %v1681 = vpop.trf.xlu0
        %v1682 = vpop.trf.xlu0
        %v1683 = vpop.trf.xlu0
        %v1684 = vpop.trf.xlu0
        %v1685 = vpop.trf.xlu0
        %v1686 = vpop.trf.xlu0
        %v1687 = vpop.trf.xlu0
        %v1688 = vpop.trf.xlu0
        %v1689 = vpop.trf.xlu0
        %v1690 = vpop.trf.xlu0
        %v1691 = vpop.trf.xlu0
        %v1692 = vpop.trf.xlu0
        %v1693 = vpop.trf.xlu0
        %v1694 = vpop.trf.xlu0
        %v1695 = vpop.trf.xlu0
        %v1696 = vpop.trf.xlu0
        %1697 = vxpose.xlu0.b32.start [1/16] %v1656, 128
        %1698 = vxpose.xlu0.b32.cont [2/16] 0.0, 128
        %1699 = vxpose.xlu0.b32.cont [3/16] 0.0, 128
        %1700 = vxpose.xlu0.b32.cont [4/16] 0.0, 128
        %1701 = vxpose.xlu0.b32.cont [5/16] 0.0, 128
        %1702 = vxpose.xlu0.b32.cont [6/16] 0.0, 128
        %1703 = vxpose.xlu0.b32.cont [7/16] 0.0, 128
        %1704 = vxpose.xlu0.b32.cont [8/16] 0.0, 128
        %1705 = vxpose.xlu0.b32.cont [9/16] 0.0, 128
        %1706 = vxpose.xlu0.b32.cont [10/16] 0.0, 128
        %1707 = vxpose.xlu0.b32.cont [11/16] 0.0, 128
        %1708 = vxpose.xlu0.b32.cont [12/16] 0.0, 128
        %1709 = vxpose.xlu0.b32.cont [13/16] 0.0, 128
        %1710 = vxpose.xlu0.b32.cont [14/16] 0.0, 128
        %1711 = vxpose.xlu0.b32.cont [15/16] 0.0, 128
        %1712 = vxpose.xlu0.b32.end [16/16] 0.0, 128
        %v1713 = vpop.trf.xlu0
        %v1714 = vpop.trf.xlu0
        %v1715 = vpop.trf.xlu0
        %v1716 = vpop.trf.xlu0
        %v1717 = vpop.trf.xlu0
        %v1718 = vpop.trf.xlu0
        %v1719 = vpop.trf.xlu0
        %v1720 = vpop.trf.xlu0
        %v1721 = vpop.trf.xlu0
        %v1722 = vpop.trf.xlu0
        %v1723 = vpop.trf.xlu0
        %v1724 = vpop.trf.xlu0
        %v1725 = vpop.trf.xlu0
        %v1726 = vpop.trf.xlu0
        %v1727 = vpop.trf.xlu0
        %v1728 = vpop.trf.xlu0
        %1729 = vxpose.xlu0.b32.start [1/16] %v1658, 128
        %1730 = vxpose.xlu0.b32.cont [2/16] 0.0, 128
        %1731 = vxpose.xlu0.b32.cont [3/16] 0.0, 128
        %1732 = vxpose.xlu0.b32.cont [4/16] 0.0, 128
        %1733 = vxpose.xlu0.b32.cont [5/16] 0.0, 128
        %1734 = vxpose.xlu0.b32.cont [6/16] 0.0, 128
        %1735 = vxpose.xlu0.b32.cont [7/16] 0.0, 128
        %1736 = vxpose.xlu0.b32.cont [8/16] 0.0, 128
        %1737 = vxpose.xlu0.b32.cont [9/16] 0.0, 128
        %1738 = vxpose.xlu0.b32.cont [10/16] 0.0, 128
        %1739 = vxpose.xlu0.b32.cont [11/16] 0.0, 128
        %1740 = vxpose.xlu0.b32.cont [12/16] 0.0, 128
        %1741 = vxpose.xlu0.b32.cont [13/16] 0.0, 128
        %1742 = vxpose.xlu0.b32.cont [14/16] 0.0, 128
        %1743 = vxpose.xlu0.b32.cont [15/16] 0.0, 128
        %1744 = vxpose.xlu0.b32.end [16/16] 0.0, 128
        %v1745 = vpop.trf.xlu0
        %v1746 = vpop.trf.xlu0
        %v1747 = vpop.trf.xlu0
        %v1748 = vpop.trf.xlu0
        %v1749 = vpop.trf.xlu0
        %v1750 = vpop.trf.xlu0
        %v1751 = vpop.trf.xlu0
        %v1752 = vpop.trf.xlu0
        %v1753 = vpop.trf.xlu0
        %v1754 = vpop.trf.xlu0
        %v1755 = vpop.trf.xlu0
        %v1756 = vpop.trf.xlu0
        %v1757 = vpop.trf.xlu0
        %v1758 = vpop.trf.xlu0
        %v1759 = vpop.trf.xlu0
        %v1760 = vpop.trf.xlu0
        %1761 = vxpose.xlu0.b32.start [1/16] %v1660, 128
        %1762 = vxpose.xlu0.b32.cont [2/16] 0.0, 128
        %1763 = vxpose.xlu0.b32.cont [3/16] 0.0, 128
        %1764 = vxpose.xlu0.b32.cont [4/16] 0.0, 128
        %1765 = vxpose.xlu0.b32.cont [5/16] 0.0, 128
        %1766 = vxpose.xlu0.b32.cont [6/16] 0.0, 128
        %1767 = vxpose.xlu0.b32.cont [7/16] 0.0, 128
        %1768 = vxpose.xlu0.b32.cont [8/16] 0.0, 128
        %1769 = vxpose.xlu0.b32.cont [9/16] 0.0, 128
        %1770 = vxpose.xlu0.b32.cont [10/16] 0.0, 128
        %1771 = vxpose.xlu0.b32.cont [11/16] 0.0, 128
        %1772 = vxpose.xlu0.b32.cont [12/16] 0.0, 128
        %1773 = vxpose.xlu0.b32.cont [13/16] 0.0, 128
        %1774 = vxpose.xlu0.b32.cont [14/16] 0.0, 128
        %1775 = vxpose.xlu0.b32.cont [15/16] 0.0, 128
        %1776 = vxpose.xlu0.b32.end [16/16] 0.0, 128
        %v1777 = vpop.trf.xlu0
        %v1778 = vpop.trf.xlu0
        %v1779 = vpop.trf.xlu0
        %v1780 = vpop.trf.xlu0
        %v1781 = vpop.trf.xlu0
        %v1782 = vpop.trf.xlu0
        %v1783 = vpop.trf.xlu0
        %v1784 = vpop.trf.xlu0
        %v1785 = vpop.trf.xlu0
        %v1786 = vpop.trf.xlu0
        %v1787 = vpop.trf.xlu0
        %v1788 = vpop.trf.xlu0
        %v1789 = vpop.trf.xlu0
        %v1790 = vpop.trf.xlu0
        %v1791 = vpop.trf.xlu0
        %v1792 = vpop.trf.xlu0
        %vm1793 = vcmask 64512
        %v1794 = vsel %vm1793, %v1638, 0
        %1796 = vmatpush.msra.mxu0 0.0
        %1797 = vmatpush.msra.mxu0 0.0
        %1798 = vmatpush.msra.mxu0 0.0
        %1799 = vmatpush.msra.mxu0 0.0
        %1800 = vmatpush.msra.mxu0 0.0
        %1801 = vmatpush.msra.mxu0 0.0
        %1802 = vmatpush.msra.mxu0 0.0
        %1803 = vmatpush.msra.mxu0 0.0
        %1804 = vmatpush.msra.mxu0 0.0
        %1805 = vmatpush.msra.mxu0 0.0
        %1806 = vmatpush.msra.mxu0 0.0
        %1807 = vmatpush.msra.mxu0 0.0
        %1808 = vmatpush.msra.mxu0 0.0
        %1809 = vmatpush.msra.mxu0 0.0
        %1810 = vmatpush.msra.mxu0 0.0
        %1811 = vmatpush.msra.mxu0 %v1681
        %1812 = vmatmul.f32.gmra.mxu0 %v1794
        %v1813 = vpop.f32.mrf.mxu0
        %v1814 = vadd.f32 %v1637, %v1813
        %1815 = vdwg.mxu0
        %v1816 = vsel %vm1793, %v1641, 0
        %1818 = vmatpush.msra.mxu0 0.0
        %1819 = vmatpush.msra.mxu0 0.0
        %1820 = vmatpush.msra.mxu0 0.0
        %1821 = vmatpush.msra.mxu0 0.0
        %1822 = vmatpush.msra.mxu0 0.0
        %1823 = vmatpush.msra.mxu0 0.0
        %1824 = vmatpush.msra.mxu0 0.0
        %1825 = vmatpush.msra.mxu0 0.0
        %1826 = vmatpush.msra.mxu0 0.0
        %1827 = vmatpush.msra.mxu0 0.0
        %1828 = vmatpush.msra.mxu0 0.0
        %1829 = vmatpush.msra.mxu0 0.0
        %1830 = vmatpush.msra.mxu0 0.0
        %1831 = vmatpush.msra.mxu0 0.0
        %1832 = vmatpush.msra.mxu0 0.0
        %1833 = vmatpush.msra.mxu0 %v1713
        %1834 = vmatmul.f32.gmra.mxu0 %v1816
        %v1835 = vpop.f32.mrf.mxu0
        %v1836 = vadd.f32 %v1637, %v1835
        %1837 = vdwg.mxu0
        %v1838 = vsel %vm1793, %v1643, 0
        %1840 = vmatpush.msra.mxu0 0.0
        %1841 = vmatpush.msra.mxu0 0.0
        %1842 = vmatpush.msra.mxu0 0.0
        %1843 = vmatpush.msra.mxu0 0.0
        %1844 = vmatpush.msra.mxu0 0.0
        %1845 = vmatpush.msra.mxu0 0.0
        %1846 = vmatpush.msra.mxu0 0.0
        %1847 = vmatpush.msra.mxu0 0.0
        %1848 = vmatpush.msra.mxu0 0.0
        %1849 = vmatpush.msra.mxu0 0.0
        %1850 = vmatpush.msra.mxu0 0.0
        %1851 = vmatpush.msra.mxu0 0.0
        %1852 = vmatpush.msra.mxu0 0.0
        %1853 = vmatpush.msra.mxu0 0.0
        %1854 = vmatpush.msra.mxu0 0.0
        %1855 = vmatpush.msra.mxu0 %v1745
        %1856 = vmatmul.f32.gmra.mxu0 %v1838
        %v1857 = vpop.f32.mrf.mxu0
        %v1858 = vadd.f32 %v1637, %v1857
        %1859 = vdwg.mxu0
        %v1860 = vsel %vm1793, %v1645, 0
        %1862 = vmatpush.msra.mxu0 0.0
        %1863 = vmatpush.msra.mxu0 0.0
        %1864 = vmatpush.msra.mxu0 0.0
        %1865 = vmatpush.msra.mxu0 0.0
        %1866 = vmatpush.msra.mxu0 0.0
        %1867 = vmatpush.msra.mxu0 0.0
        %1868 = vmatpush.msra.mxu0 0.0
        %1869 = vmatpush.msra.mxu0 0.0
        %1870 = vmatpush.msra.mxu0 0.0
        %1871 = vmatpush.msra.mxu0 0.0
        %1872 = vmatpush.msra.mxu0 0.0
        %1873 = vmatpush.msra.mxu0 0.0
        %1874 = vmatpush.msra.mxu0 0.0
        %1875 = vmatpush.msra.mxu0 0.0
        %1876 = vmatpush.msra.mxu0 0.0
        %1877 = vmatpush.msra.mxu0 %v1777
        %1878 = vmatmul.f32.gmra.mxu0 %v1860
        %v1879 = vpop.f32.mrf.mxu0
        %v1880 = vadd.f32 %v1637, %v1879
        %1881 = vdwg.mxu0
        %v1882 = vsel %vm1793, %v1814, -inf
        %1883 = vmax.xlane.f32.xlu0 %v1882
        %v1884 = vpop.xlane.xlu0 %1883
        %v1885 = vsel %vm1793, %v1836, -inf
        %1886 = vmax.xlane.f32.xlu0 %v1885
        %v1887 = vpop.xlane.xlu0 %1886
        %v1888 = vsel %vm1793, %v1858, -inf
        %1889 = vmax.xlane.f32.xlu0 %v1888
        %v1890 = vpop.xlane.xlu0 %1889
        %v1891 = vsel %vm1793, %v1880, -inf
        %1892 = vmax.xlane.f32.xlu0 %v1891
        %v1893 = vpop.xlane.xlu0 %1892
        %v1894 = vmax.f32 %v1884, -1e+30
        %v1895 = vmax.f32 %v1887, -1e+30
        %v1896 = vmax.f32 %v1890, -1e+30
        %v1897 = vmax.f32 %v1893, -1e+30
        %v1898 = vsub.f32 %v1814, %v1894
        %v1899 = vsub.f32 %v1836, %v1895
        %v1900 = vsub.f32 %v1858, %v1896
        %v1901 = vsub.f32 %v1880, %v1897
        %v1902 = vmul.f32 %v1898, 1.442695
        %v1903 = vpow.pop %v1902
        %v1904 = vmul.f32 %v1899, 1.442695
        %v1905 = vpow.pop %v1904
        %v1906 = vmul.f32 %v1900, 1.442695
        %v1907 = vpow.pop %v1906
        %v1908 = vmul.f32 %v1901, 1.442695
        %v1909 = vpow.pop %v1908
        %v1910 = vsel %vm1793, %v1903, 0.0
        %1911 = vadd.xlane.f32.xlu0 %v1910
        %v1912 = vpop.xlane.xlu0 %1911
        %v1913 = vsel %vm1793, %v1905, 0.0
        %1914 = vadd.xlane.f32.xlu0 %v1913
        %v1915 = vpop.xlane.xlu0 %1914
        %v1916 = vsel %vm1793, %v1907, 0.0
        %1917 = vadd.xlane.f32.xlu0 %v1916
        %v1918 = vpop.xlane.xlu0 %1917
        %v1919 = vsel %vm1793, %v1909, 0.0
        %1920 = vadd.xlane.f32.xlu0 %v1919
        %v1921 = vpop.xlane.xlu0 %1920
        %v1922 = vmax.f32 %v1912, 1e-30
        %v1923 = vmax.f32 %v1915, 1e-30
        %v1924 = vmax.f32 %v1918, 1e-30
        %v1925 = vmax.f32 %v1921, 1e-30
        %v1926 = vrcp.pop %v1922
        %v1927 = vrcp.pop %v1923
        %v1928 = vrcp.pop %v1924
        %v1929 = vrcp.pop %v1925
        %v1930 = vmul.f32 %v1903, %v1926
        %v1931 = vmul.f32 %v1905, %v1927
        %v1932 = vmul.f32 %v1907, %v1928
        %v1933 = vmul.f32 %v1909, %v1929
        %1934 = vrot.lane.b32.xlu0 %v1635, 64
        %v1935 = vpop.permute.xlu0 %1934
        %1936 = vrot.lane.b32.xlu0 %v1648, 64
        %v1937 = vpop.permute.xlu0 %1936
        %1938 = vrot.lane.b32.xlu0 %v1650, 64
        %v1939 = vpop.permute.xlu0 %1938
        %1940 = vrot.lane.b32.xlu0 %v1652, 64
        %v1941 = vpop.permute.xlu0 %1940
        %1946 = vxpose.xlu0.b32.start [1/16] %v1935, 128
        %1947 = vxpose.xlu0.b32.cont [2/16] 0.0, 128
        %1948 = vxpose.xlu0.b32.cont [3/16] 0.0, 128
        %1949 = vxpose.xlu0.b32.cont [4/16] 0.0, 128
        %1950 = vxpose.xlu0.b32.cont [5/16] 0.0, 128
        %1951 = vxpose.xlu0.b32.cont [6/16] 0.0, 128
        %1952 = vxpose.xlu0.b32.cont [7/16] 0.0, 128
        %1953 = vxpose.xlu0.b32.cont [8/16] 0.0, 128
        %1954 = vxpose.xlu0.b32.cont [9/16] 0.0, 128
        %1955 = vxpose.xlu0.b32.cont [10/16] 0.0, 128
        %1956 = vxpose.xlu0.b32.cont [11/16] 0.0, 128
        %1957 = vxpose.xlu0.b32.cont [12/16] 0.0, 128
        %1958 = vxpose.xlu0.b32.cont [13/16] 0.0, 128
        %1959 = vxpose.xlu0.b32.cont [14/16] 0.0, 128
        %1960 = vxpose.xlu0.b32.cont [15/16] 0.0, 128
        %1961 = vxpose.xlu0.b32.end [16/16] 0.0, 128
        %v1962 = vpop.trf.xlu0
        %v1963 = vpop.trf.xlu0
        %v1964 = vpop.trf.xlu0
        %v1965 = vpop.trf.xlu0
        %v1966 = vpop.trf.xlu0
        %v1967 = vpop.trf.xlu0
        %v1968 = vpop.trf.xlu0
        %v1969 = vpop.trf.xlu0
        %v1970 = vpop.trf.xlu0
        %v1971 = vpop.trf.xlu0
        %v1972 = vpop.trf.xlu0
        %v1973 = vpop.trf.xlu0
        %v1974 = vpop.trf.xlu0
        %v1975 = vpop.trf.xlu0
        %v1976 = vpop.trf.xlu0
        %v1977 = vpop.trf.xlu0
        %1978 = vxpose.xlu0.b32.start [1/16] %v1937, 128
        %1979 = vxpose.xlu0.b32.cont [2/16] 0.0, 128
        %1980 = vxpose.xlu0.b32.cont [3/16] 0.0, 128
        %1981 = vxpose.xlu0.b32.cont [4/16] 0.0, 128
        %1982 = vxpose.xlu0.b32.cont [5/16] 0.0, 128
        %1983 = vxpose.xlu0.b32.cont [6/16] 0.0, 128
        %1984 = vxpose.xlu0.b32.cont [7/16] 0.0, 128
        %1985 = vxpose.xlu0.b32.cont [8/16] 0.0, 128
        %1986 = vxpose.xlu0.b32.cont [9/16] 0.0, 128
        %1987 = vxpose.xlu0.b32.cont [10/16] 0.0, 128
        %1988 = vxpose.xlu0.b32.cont [11/16] 0.0, 128
        %1989 = vxpose.xlu0.b32.cont [12/16] 0.0, 128
        %1990 = vxpose.xlu0.b32.cont [13/16] 0.0, 128
        %1991 = vxpose.xlu0.b32.cont [14/16] 0.0, 128
        %1992 = vxpose.xlu0.b32.cont [15/16] 0.0, 128
        %1993 = vxpose.xlu0.b32.end [16/16] 0.0, 128
        %v1994 = vpop.trf.xlu0
        %v1995 = vpop.trf.xlu0
        %v1996 = vpop.trf.xlu0
        %v1997 = vpop.trf.xlu0
        %v1998 = vpop.trf.xlu0
        %v1999 = vpop.trf.xlu0
        %v2000 = vpop.trf.xlu0
        %v2001 = vpop.trf.xlu0
        %v2002 = vpop.trf.xlu0
        %v2003 = vpop.trf.xlu0
        %v2004 = vpop.trf.xlu0
        %v2005 = vpop.trf.xlu0
        %v2006 = vpop.trf.xlu0
        %v2007 = vpop.trf.xlu0
        %v2008 = vpop.trf.xlu0
        %v2009 = vpop.trf.xlu0
        %2010 = vxpose.xlu0.b32.start [1/16] %v1939, 128
        %2011 = vxpose.xlu0.b32.cont [2/16] 0.0, 128
        %2012 = vxpose.xlu0.b32.cont [3/16] 0.0, 128
        %2013 = vxpose.xlu0.b32.cont [4/16] 0.0, 128
        %2014 = vxpose.xlu0.b32.cont [5/16] 0.0, 128
        %2015 = vxpose.xlu0.b32.cont [6/16] 0.0, 128
        %2016 = vxpose.xlu0.b32.cont [7/16] 0.0, 128
        %2017 = vxpose.xlu0.b32.cont [8/16] 0.0, 128
        %2018 = vxpose.xlu0.b32.cont [9/16] 0.0, 128
        %2019 = vxpose.xlu0.b32.cont [10/16] 0.0, 128
        %2020 = vxpose.xlu0.b32.cont [11/16] 0.0, 128
        %2021 = vxpose.xlu0.b32.cont [12/16] 0.0, 128
        %2022 = vxpose.xlu0.b32.cont [13/16] 0.0, 128
        %2023 = vxpose.xlu0.b32.cont [14/16] 0.0, 128
        %2024 = vxpose.xlu0.b32.cont [15/16] 0.0, 128
        %2025 = vxpose.xlu0.b32.end [16/16] 0.0, 128
        %v2026 = vpop.trf.xlu0
        %v2027 = vpop.trf.xlu0
        %v2028 = vpop.trf.xlu0
        %v2029 = vpop.trf.xlu0
        %v2030 = vpop.trf.xlu0
        %v2031 = vpop.trf.xlu0
        %v2032 = vpop.trf.xlu0
        %v2033 = vpop.trf.xlu0
        %v2034 = vpop.trf.xlu0
        %v2035 = vpop.trf.xlu0
        %v2036 = vpop.trf.xlu0
        %v2037 = vpop.trf.xlu0
        %v2038 = vpop.trf.xlu0
        %v2039 = vpop.trf.xlu0
        %v2040 = vpop.trf.xlu0
        %v2041 = vpop.trf.xlu0
        %2042 = vxpose.xlu0.b32.start [1/16] %v1941, 128
        %2043 = vxpose.xlu0.b32.cont [2/16] 0.0, 128
        %2044 = vxpose.xlu0.b32.cont [3/16] 0.0, 128
        %2045 = vxpose.xlu0.b32.cont [4/16] 0.0, 128
        %2046 = vxpose.xlu0.b32.cont [5/16] 0.0, 128
        %2047 = vxpose.xlu0.b32.cont [6/16] 0.0, 128
        %2048 = vxpose.xlu0.b32.cont [7/16] 0.0, 128
        %2049 = vxpose.xlu0.b32.cont [8/16] 0.0, 128
        %2050 = vxpose.xlu0.b32.cont [9/16] 0.0, 128
        %2051 = vxpose.xlu0.b32.cont [10/16] 0.0, 128
        %2052 = vxpose.xlu0.b32.cont [11/16] 0.0, 128
        %2053 = vxpose.xlu0.b32.cont [12/16] 0.0, 128
        %2054 = vxpose.xlu0.b32.cont [13/16] 0.0, 128
        %2055 = vxpose.xlu0.b32.cont [14/16] 0.0, 128
        %2056 = vxpose.xlu0.b32.cont [15/16] 0.0, 128
        %2057 = vxpose.xlu0.b32.end [16/16] 0.0, 128
        %v2058 = vpop.trf.xlu0
        %v2059 = vpop.trf.xlu0
        %v2060 = vpop.trf.xlu0
        %v2061 = vpop.trf.xlu0
        %v2062 = vpop.trf.xlu0
        %v2063 = vpop.trf.xlu0
        %v2064 = vpop.trf.xlu0
        %v2065 = vpop.trf.xlu0
        %v2066 = vpop.trf.xlu0
        %v2067 = vpop.trf.xlu0
        %v2068 = vpop.trf.xlu0
        %v2069 = vpop.trf.xlu0
        %v2070 = vpop.trf.xlu0
        %v2071 = vpop.trf.xlu0
        %v2072 = vpop.trf.xlu0
        %v2073 = vpop.trf.xlu0
        %v2075 = vsel %vm1793, %v1962, 0
        %v2078 = vsel %vm1793, %v1930, 0
        %2080 = vmatpush.xpose.msra.mxu0 0.0
        %2081 = vmatpush.xpose.msra.mxu0 0.0
        %2082 = vmatpush.xpose.msra.mxu0 0.0
        %2083 = vmatpush.xpose.msra.mxu0 0.0
        %2084 = vmatpush.xpose.msra.mxu0 0.0
        %2085 = vmatpush.xpose.msra.mxu0 0.0
        %2086 = vmatpush.xpose.msra.mxu0 0.0
        %2087 = vmatpush.xpose.msra.mxu0 0.0
        %2088 = vmatpush.xpose.msra.mxu0 0.0
        %2089 = vmatpush.xpose.msra.mxu0 0.0
        %2090 = vmatpush.xpose.msra.mxu0 0.0
        %2091 = vmatpush.xpose.msra.mxu0 0.0
        %2092 = vmatpush.xpose.msra.mxu0 0.0
        %2093 = vmatpush.xpose.msra.mxu0 0.0
        %2094 = vmatpush.xpose.msra.mxu0 0.0
        %2095 = vmatpush.xpose.msra.mxu0 %v2078
        %2096 = vmatmul.f32.gmra.mxu0 %v2075
        %v2097 = vpop.f32.mrf.mxu0
        %v2098 = vadd.f32 0.0, %v2097
        %2099 = vdwg.mxu0
        %v2101 = vsel %vm1793, %v1994, 0
        %v2104 = vsel %vm1793, %v1931, 0
        %2106 = vmatpush.xpose.msra.mxu0 0.0
        %2107 = vmatpush.xpose.msra.mxu0 0.0
        %2108 = vmatpush.xpose.msra.mxu0 0.0
        %2109 = vmatpush.xpose.msra.mxu0 0.0
        %2110 = vmatpush.xpose.msra.mxu0 0.0
        %2111 = vmatpush.xpose.msra.mxu0 0.0
        %2112 = vmatpush.xpose.msra.mxu0 0.0
        %2113 = vmatpush.xpose.msra.mxu0 0.0
        %2114 = vmatpush.xpose.msra.mxu0 0.0
        %2115 = vmatpush.xpose.msra.mxu0 0.0
        %2116 = vmatpush.xpose.msra.mxu0 0.0
        %2117 = vmatpush.xpose.msra.mxu0 0.0
        %2118 = vmatpush.xpose.msra.mxu0 0.0
        %2119 = vmatpush.xpose.msra.mxu0 0.0
        %2120 = vmatpush.xpose.msra.mxu0 0.0
        %2121 = vmatpush.xpose.msra.mxu0 %v2104
        %2122 = vmatmul.f32.gmra.mxu0 %v2101
        %v2123 = vpop.f32.mrf.mxu0
        %v2124 = vadd.f32 0.0, %v2123
        %2125 = vdwg.mxu0
        %v2127 = vsel %vm1793, %v2026, 0
        %v2130 = vsel %vm1793, %v1932, 0
        %2132 = vmatpush.xpose.msra.mxu0 0.0
        %2133 = vmatpush.xpose.msra.mxu0 0.0
        %2134 = vmatpush.xpose.msra.mxu0 0.0
        %2135 = vmatpush.xpose.msra.mxu0 0.0
        %2136 = vmatpush.xpose.msra.mxu0 0.0
        %2137 = vmatpush.xpose.msra.mxu0 0.0
        %2138 = vmatpush.xpose.msra.mxu0 0.0
        %2139 = vmatpush.xpose.msra.mxu0 0.0
        %2140 = vmatpush.xpose.msra.mxu0 0.0
        %2141 = vmatpush.xpose.msra.mxu0 0.0
        %2142 = vmatpush.xpose.msra.mxu0 0.0
        %2143 = vmatpush.xpose.msra.mxu0 0.0
        %2144 = vmatpush.xpose.msra.mxu0 0.0
        %2145 = vmatpush.xpose.msra.mxu0 0.0
        %2146 = vmatpush.xpose.msra.mxu0 0.0
        %2147 = vmatpush.xpose.msra.mxu0 %v2130
        %2148 = vmatmul.f32.gmra.mxu0 %v2127
        %v2149 = vpop.f32.mrf.mxu0
        %v2150 = vadd.f32 0.0, %v2149
        %2151 = vdwg.mxu0
        %v2153 = vsel %vm1793, %v2058, 0
        %v2156 = vsel %vm1793, %v1933, 0
        %2158 = vmatpush.xpose.msra.mxu0 0.0
        %2159 = vmatpush.xpose.msra.mxu0 0.0
        %2160 = vmatpush.xpose.msra.mxu0 0.0
        %2161 = vmatpush.xpose.msra.mxu0 0.0
        %2162 = vmatpush.xpose.msra.mxu0 0.0
        %2163 = vmatpush.xpose.msra.mxu0 0.0
        %2164 = vmatpush.xpose.msra.mxu0 0.0
        %2165 = vmatpush.xpose.msra.mxu0 0.0
        %2166 = vmatpush.xpose.msra.mxu0 0.0
        %2167 = vmatpush.xpose.msra.mxu0 0.0
        %2168 = vmatpush.xpose.msra.mxu0 0.0
        %2169 = vmatpush.xpose.msra.mxu0 0.0
        %2170 = vmatpush.xpose.msra.mxu0 0.0
        %2171 = vmatpush.xpose.msra.mxu0 0.0
        %2172 = vmatpush.xpose.msra.mxu0 0.0
        %2173 = vmatpush.xpose.msra.mxu0 %v2156
        %2174 = vmatmul.f32.gmra.mxu0 %v2153
        %v2175 = vpop.f32.mrf.mxu0
        %v2176 = vadd.f32 0.0, %v2175
        %2177 = vdwg.mxu0
        %2178 = vxpose.xlu0.b32.start [1/16] %v2098, 128
        %2179 = vxpose.xlu0.b32.cont [2/16] 0.0, 128
        %2180 = vxpose.xlu0.b32.cont [3/16] 0.0, 128
        %2181 = vxpose.xlu0.b32.cont [4/16] 0.0, 128
        %2182 = vxpose.xlu0.b32.cont [5/16] 0.0, 128
        %2183 = vxpose.xlu0.b32.cont [6/16] 0.0, 128
        %2184 = vxpose.xlu0.b32.cont [7/16] 0.0, 128
        %2185 = vxpose.xlu0.b32.cont [8/16] 0.0, 128
        %2186 = vxpose.xlu0.b32.cont [9/16] 0.0, 128
        %2187 = vxpose.xlu0.b32.cont [10/16] 0.0, 128
        %2188 = vxpose.xlu0.b32.cont [11/16] 0.0, 128
        %2189 = vxpose.xlu0.b32.cont [12/16] 0.0, 128
        %2190 = vxpose.xlu0.b32.cont [13/16] 0.0, 128
        %2191 = vxpose.xlu0.b32.cont [14/16] 0.0, 128
        %2192 = vxpose.xlu0.b32.cont [15/16] 0.0, 128
        %2193 = vxpose.xlu0.b32.end [16/16] 0.0, 128
        %v2194 = vpop.trf.xlu0
        %v2195 = vpop.trf.xlu0
        %v2196 = vpop.trf.xlu0
        %v2197 = vpop.trf.xlu0
        %v2198 = vpop.trf.xlu0
        %v2199 = vpop.trf.xlu0
        %v2200 = vpop.trf.xlu0
        %v2201 = vpop.trf.xlu0
        %v2202 = vpop.trf.xlu0
        %v2203 = vpop.trf.xlu0
        %v2204 = vpop.trf.xlu0
        %v2205 = vpop.trf.xlu0
        %v2206 = vpop.trf.xlu0
        %v2207 = vpop.trf.xlu0
        %v2208 = vpop.trf.xlu0
        %v2209 = vpop.trf.xlu0
        %2210 = vxpose.xlu0.b32.start [1/16] %v2124, 128
        %2211 = vxpose.xlu0.b32.cont [2/16] 0.0, 128
        %2212 = vxpose.xlu0.b32.cont [3/16] 0.0, 128
        %2213 = vxpose.xlu0.b32.cont [4/16] 0.0, 128
        %2214 = vxpose.xlu0.b32.cont [5/16] 0.0, 128
        %2215 = vxpose.xlu0.b32.cont [6/16] 0.0, 128
        %2216 = vxpose.xlu0.b32.cont [7/16] 0.0, 128
        %2217 = vxpose.xlu0.b32.cont [8/16] 0.0, 128
        %2218 = vxpose.xlu0.b32.cont [9/16] 0.0, 128
        %2219 = vxpose.xlu0.b32.cont [10/16] 0.0, 128
        %2220 = vxpose.xlu0.b32.cont [11/16] 0.0, 128
        %2221 = vxpose.xlu0.b32.cont [12/16] 0.0, 128
        %2222 = vxpose.xlu0.b32.cont [13/16] 0.0, 128
        %2223 = vxpose.xlu0.b32.cont [14/16] 0.0, 128
        %2224 = vxpose.xlu0.b32.cont [15/16] 0.0, 128
        %2225 = vxpose.xlu0.b32.end [16/16] 0.0, 128
        %v2226 = vpop.trf.xlu0
        %v2227 = vpop.trf.xlu0
        %v2228 = vpop.trf.xlu0
        %v2229 = vpop.trf.xlu0
        %v2230 = vpop.trf.xlu0
        %v2231 = vpop.trf.xlu0
        %v2232 = vpop.trf.xlu0
        %v2233 = vpop.trf.xlu0
        %v2234 = vpop.trf.xlu0
        %v2235 = vpop.trf.xlu0
        %v2236 = vpop.trf.xlu0
        %v2237 = vpop.trf.xlu0
        %v2238 = vpop.trf.xlu0
        %v2239 = vpop.trf.xlu0
        %v2240 = vpop.trf.xlu0
        %v2241 = vpop.trf.xlu0
        %2242 = vxpose.xlu0.b32.start [1/16] %v2150, 128
        %2243 = vxpose.xlu0.b32.cont [2/16] 0.0, 128
        %2244 = vxpose.xlu0.b32.cont [3/16] 0.0, 128
        %2245 = vxpose.xlu0.b32.cont [4/16] 0.0, 128
        %2246 = vxpose.xlu0.b32.cont [5/16] 0.0, 128
        %2247 = vxpose.xlu0.b32.cont [6/16] 0.0, 128
        %2248 = vxpose.xlu0.b32.cont [7/16] 0.0, 128
        %2249 = vxpose.xlu0.b32.cont [8/16] 0.0, 128
        %2250 = vxpose.xlu0.b32.cont [9/16] 0.0, 128
        %2251 = vxpose.xlu0.b32.cont [10/16] 0.0, 128
        %2252 = vxpose.xlu0.b32.cont [11/16] 0.0, 128
        %2253 = vxpose.xlu0.b32.cont [12/16] 0.0, 128
        %2254 = vxpose.xlu0.b32.cont [13/16] 0.0, 128
        %2255 = vxpose.xlu0.b32.cont [14/16] 0.0, 128
        %2256 = vxpose.xlu0.b32.cont [15/16] 0.0, 128
        %2257 = vxpose.xlu0.b32.end [16/16] 0.0, 128
        %v2258 = vpop.trf.xlu0
        %v2259 = vpop.trf.xlu0
        %v2260 = vpop.trf.xlu0
        %v2261 = vpop.trf.xlu0
        %v2262 = vpop.trf.xlu0
        %v2263 = vpop.trf.xlu0
        %v2264 = vpop.trf.xlu0
        %v2265 = vpop.trf.xlu0
        %v2266 = vpop.trf.xlu0
        %v2267 = vpop.trf.xlu0
        %v2268 = vpop.trf.xlu0
        %v2269 = vpop.trf.xlu0
        %v2270 = vpop.trf.xlu0
        %v2271 = vpop.trf.xlu0
        %v2272 = vpop.trf.xlu0
        %v2273 = vpop.trf.xlu0
        %2274 = vxpose.xlu0.b32.start [1/16] %v2176, 128
        %2275 = vxpose.xlu0.b32.cont [2/16] 0.0, 128
        %2276 = vxpose.xlu0.b32.cont [3/16] 0.0, 128
        %2277 = vxpose.xlu0.b32.cont [4/16] 0.0, 128
        %2278 = vxpose.xlu0.b32.cont [5/16] 0.0, 128
        %2279 = vxpose.xlu0.b32.cont [6/16] 0.0, 128
        %2280 = vxpose.xlu0.b32.cont [7/16] 0.0, 128
        %2281 = vxpose.xlu0.b32.cont [8/16] 0.0, 128
        %2282 = vxpose.xlu0.b32.cont [9/16] 0.0, 128
        %2283 = vxpose.xlu0.b32.cont [10/16] 0.0, 128
        %2284 = vxpose.xlu0.b32.cont [11/16] 0.0, 128
        %2285 = vxpose.xlu0.b32.cont [12/16] 0.0, 128
        %2286 = vxpose.xlu0.b32.cont [13/16] 0.0, 128
        %2287 = vxpose.xlu0.b32.cont [14/16] 0.0, 128
        %2288 = vxpose.xlu0.b32.cont [15/16] 0.0, 128
        %2289 = vxpose.xlu0.b32.end [16/16] 0.0, 128
        %v2290 = vpop.trf.xlu0
        %v2291 = vpop.trf.xlu0
        %v2292 = vpop.trf.xlu0
        %v2293 = vpop.trf.xlu0
        %v2294 = vpop.trf.xlu0
        %v2295 = vpop.trf.xlu0
        %v2296 = vpop.trf.xlu0
        %v2297 = vpop.trf.xlu0
        %v2298 = vpop.trf.xlu0
        %v2299 = vpop.trf.xlu0
        %v2300 = vpop.trf.xlu0
        %v2301 = vpop.trf.xlu0
        %v2302 = vpop.trf.xlu0
        %v2303 = vpop.trf.xlu0
        %v2304 = vpop.trf.xlu0
        %v2305 = vpop.trf.xlu0
        %v2306 = vrot.slane %v2258, 4
        %vm2307 = vcmask 1047556
        %v2308 = vsel %vm2307, %v2306, %v2194
        %v2309 = vrot.slane %v2194, 4
        %v2310 = vsel %vm2307, %v2258, %v2309
        %v2312 = vunpack.c.l.s4 1983009808
        %v2313 = vunpack.c.0.s8 %v2312
        %v2314 = vperm.slane %v2308, %v2313
        %v2316 = vunpack.c.l.s4 1983009808
        %v2317 = vunpack.c.0.s8 %v2316
        %v2318 = vperm.slane %v2310, %v2317
        %v2319 = vrot.slane %v2290, 4
        %v2320 = vsel %vm2307, %v2319, %v2226
        %v2321 = vrot.slane %v2226, 4
        %v2322 = vsel %vm2307, %v2290, %v2321
        %v2324 = vunpack.c.l.s4 1983009808
        %v2325 = vunpack.c.0.s8 %v2324
        %v2326 = vperm.slane %v2320, %v2325
        %v2328 = vunpack.c.l.s4 1983009808
        %v2329 = vunpack.c.0.s8 %v2328
        %v2330 = vperm.slane %v2322, %v2329
        %v2331 = vrot.slane %v2326, 4
        %v2332 = vsel %vm2307, %v2331, %v2314
        %v2333 = vrot.slane %v2314, 4
        %v2334 = vsel %vm2307, %v2326, %v2333
        %v2336 = vunpack.c.l.s4 1934713408
        %v2337 = vunpack.c.0.s8 %v2336
        %v2338 = vperm.slane %v2332, %v2337
        %v2340 = vunpack.c.l.s4 1934713408
        %v2341 = vunpack.c.0.s8 %v2340
        %v2342 = vperm.slane %v2334, %v2341
        %v2343 = vrot.slane %v2330, 4
        %v2344 = vsel %vm2307, %v2343, %v2318
        %v2345 = vrot.slane %v2318, 4
        %v2346 = vsel %vm2307, %v2330, %v2345
        %v2348 = vunpack.c.l.s4 1934713408
        %v2349 = vunpack.c.0.s8 %v2348
        %v2350 = vperm.slane %v2344, %v2349
        %v2352 = vunpack.c.l.s4 1934713408
        %v2353 = vunpack.c.0.s8 %v2352
        %v2354 = vperm.slane %v2346, %v2353
        %v2355 = vrot.slane %v2338, 4
        %v2356 = vsel %vm2307, 0.0, %v2355
        %v2357 = vrot.slane %v2342, 4
        %v2358 = vsel %vm2307, 0.0, %v2357
        %v2359 = vrot.slane %v2350, 4
        %v2360 = vsel %vm2307, 0.0, %v2359
        %v2361 = vrot.slane %v2354, 4
        %v2362 = vsel %vm2307, 0.0, %v2361
        %v2363 = vsel %vm2307, %v2357, %v2338
        %v2365 = vunpack.c.l.s4 1983009808
        %v2366 = vunpack.c.0.s8 %v2365
        %v2367 = vperm.slane %v2363, %v2366
        %v2368 = vrot.slane %v2358, 4
        %v2369 = vsel %vm2307, %v2368, %v2356
        %v2371 = vunpack.c.l.s4 1983009808
        %v2372 = vunpack.c.0.s8 %v2371
        %v2373 = vperm.slane %v2369, %v2372
        %v2374 = vsel %vm2307, %v2361, %v2350
        %v2376 = vunpack.c.l.s4 1983009808
        %v2377 = vunpack.c.0.s8 %v2376
        %v2378 = vperm.slane %v2374, %v2377
        %v2379 = vrot.slane %v2362, 4
        %v2380 = vsel %vm2307, %v2379, %v2360
        %v2382 = vunpack.c.l.s4 1983009808
        %v2383 = vunpack.c.0.s8 %v2382
        %v2384 = vperm.slane %v2380, %v2383
        %v2385 = vrot.slane %v2373, 4
        %v2386 = vsel %vm2307, %v2385, %v2367
        %v2387 = vrot.slane %v2367, 4
        %v2388 = vsel %vm2307, %v2373, %v2387
        %v2390 = vunpack.c.l.s4 1934713408
        %v2391 = vunpack.c.0.s8 %v2390
        %v2392 = vperm.slane %v2386, %v2391
        %v2394 = vunpack.c.l.s4 1934713408
        %v2395 = vunpack.c.0.s8 %v2394
        %v2396 = vperm.slane %v2388, %v2395
        %v2397 = vrot.slane %v2384, 4
        %v2398 = vsel %vm2307, %v2397, %v2378
        %v2399 = vrot.slane %v2378, 4
        %v2400 = vsel %vm2307, %v2384, %v2399
        %v2402 = vunpack.c.l.s4 1934713408
        %v2403 = vunpack.c.0.s8 %v2402
        %v2404 = vperm.slane %v2398, %v2403
        %v2406 = vunpack.c.l.s4 1934713408
        %v2407 = vunpack.c.0.s8 %v2406
        %v2408 = vperm.slane %v2400, %v2407
        %v2409 = vrot.slane %v2404, 4
        %v2410 = vsel %vm2307, %v2409, %v2392
        %v2411 = vrot.slane %v2392, 4
        %v2412 = vsel %vm2307, %v2404, %v2411
        %v2413 = vrot.slane %v2408, 4
        %v2414 = vsel %vm2307, %v2413, %v2396
        %v2415 = vrot.slane %v2396, 4
        %v2416 = vsel %vm2307, %v2408, %v2415
        %2418 = vrot.lane.b32.xlu0 %v2412, 8
        %v2419 = vpop.permute.xlu0 %2418
        %2422 = vrot.lane.b32.xlu0 %v2414, 16
        %v2423 = vpop.permute.xlu0 %2422
        %2426 = vrot.lane.b32.xlu0 %v2416, 24
        %v2427 = vpop.permute.xlu0 %2426
        %v2429 = vsel %vm1793, %v2410, %v2419
        %vm2430 = vcmask 130048
        %v2431 = vsel %vm2430, %v2429, %v2423
        %vm2432 = vcmask 195584
        %v2433 = vsel %vm2432, %v2431, %v2427
        %v2434 = vld [vmem:[%s1550] sm:$0xff]
        %v2435 = vld [vmem:[%s1550 + $0x8] sm:$0xff]
        %v2436 = vld [vmem:[%s1550 + $0x10] sm:$0xff]
        %v2437 = vld [vmem:[%s1550 + $0x18] sm:$0xff]
        %v2439 = vsel %vm1613, %v2433, 0
        %2441 = vmatpush.msra.mxu0 0.0
        %2442 = vmatpush.msra.mxu0 0.0
        %2443 = vmatpush.msra.mxu0 0.0
        %2444 = vmatpush.msra.mxu0 0.0
        %2445 = vmatpush.msra.mxu0 0.0
        %2446 = vmatpush.msra.mxu0 0.0
        %2447 = vmatpush.msra.mxu0 0.0
        %2448 = vmatpush.msra.mxu0 0.0
        %2449 = vmatpush.msra.mxu0 0.0
        %2450 = vmatpush.msra.mxu0 0.0
        %2451 = vmatpush.msra.mxu0 0.0
        %2452 = vmatpush.msra.mxu0 0.0
        %2453 = vmatpush.msra.mxu0 %v2437
        %2454 = vmatpush.msra.mxu0 %v2436
        %2455 = vmatpush.msra.mxu0 %v2435
        %2456 = vmatpush.msra.mxu0 %v2434
        %2457 = vmatmul.f32.gmra.mxu0 %v2439
        %v2458 = vpop.f32.mrf.mxu0
        %v2459 = vadd.f32 0.0, %v2458
        %2460 = vdwg.mxu0
        %v2461 = vadd.f32 %v1603, %v2459
        %v2462 = vld [vmem:[%s1257] sm:$0x1]
        %v2464 = vperm.slane %v2462, 0
        %v2466 = vadd.f32 %v2461, %v2464
        %v2467 = vld [vmem:[%s1266] sm:$0x1]
        %v2468 = vld [vmem:[%s1275] sm:$0x1]
        %v2469 = vsel %vm1613, %v2466, 0.0
        %2470 = vadd.xlane.f32.xlu0 %v2469
        %v2471 = vpop.xlane.xlu0 %2470
        %v2472 = vrcp.pop 32.0
        %v2473 = vmul.f32 32.0, %v2472
        %v2474 = vsub.f32 1.0, %v2473
        %v2475 = vmul.f32 %v2472, %v2474
        %v2476 = vadd.f32 %v2472, %v2475
        %vm2477 = vweird.f32 %v2472
        %v2478 = vsel %vm2477, %v2472, %v2476
        %v2479 = vmul.f32 %v2471, %v2478
        %v2480 = vmul.f32 %v2466, %v2466
        %v2481 = vsel %vm1613, %v2480, 0.0
        %2482 = vadd.xlane.f32.xlu0 %v2481
        %v2483 = vpop.xlane.xlu0 %2482
        %v2484 = vmul.f32 %v2483, %v2478
        %v2485 = vmul.f32 %v2479, %v2479
        %v2486 = vsub.f32 %v2484, %v2485
        %v2487 = vsub.f32 %v2466, %v2479
        %v2488 = vadd.f32 %v2486, 1e-05
        %v2489 = vrsqrt.pop %v2488
        %v2490 = vmul.f32 %v2489, %v2488
        %v2491 = vmul.f32 %v2490, %v2489
        %v2492 = vmul.f32 0.5, %v2491
        %v2493 = vsub.f32 1.5, %v2492
        %v2494 = vmul.f32 %v2489, %v2493
        %vm2495 = vweird.f32 %v2488
        %vm2496 = vweird.f32 %v2489
        %vm2497 = vmor %vm2495, %vm2496
        %v2498 = vsel %vm2497, %v2489, %v2494
        %v2499 = vmul.f32 %v2487, %v2498
        %v2501 = vperm.slane %v2467, 0
        %v2503 = vmul.f32 %v2499, %v2501
        %v2505 = vperm.slane %v2468, 0
        %v2507 = vadd.f32 %v2503, %v2505
        %v2508 = vld [vmem:[%s1555] sm:$0xff]
        %v2509 = vld [vmem:[%s1555 + $0x8] sm:$0xff]
        %v2510 = vld [vmem:[%s1555 + $0x10] sm:$0xff]
        %v2511 = vld [vmem:[%s1555 + $0x18] sm:$0xff]
        %v2512 = vld [vmem:[%s1284] sm:$0x1]
        %v2514 = vperm.slane %v2512, 0
        %v2517 = vsel %vm1613, %v2507, 0
        %2519 = vmatpush.msra.mxu0 0.0
        %2520 = vmatpush.msra.mxu0 0.0
        %2521 = vmatpush.msra.mxu0 0.0
        %2522 = vmatpush.msra.mxu0 0.0
        %2523 = vmatpush.msra.mxu0 0.0
        %2524 = vmatpush.msra.mxu0 0.0
        %2525 = vmatpush.msra.mxu0 0.0
        %2526 = vmatpush.msra.mxu0 0.0
        %2527 = vmatpush.msra.mxu0 0.0
        %2528 = vmatpush.msra.mxu0 0.0
        %2529 = vmatpush.msra.mxu0 0.0
        %2530 = vmatpush.msra.mxu0 0.0
        %2531 = vmatpush.msra.mxu0 %v2511
        %2532 = vmatpush.msra.mxu0 %v2510
        %2533 = vmatpush.msra.mxu0 %v2509
        %2534 = vmatpush.msra.mxu0 %v2508
        %2535 = vmatmul.f32.gmra.mxu0 %v2517
        %v2536 = vpop.f32.mrf.mxu0
        %v2537 = vadd.f32 %v2514, %v2536
        %2538 = vdwg.mxu0
        %v2539 = vld [vmem:[%s1294] sm:$0xff]
        %v2540 = vld [vmem:[%s1294 + $0x8] sm:$0xff]
        %v2541 = vld [vmem:[%s1294 + $0x10] sm:$0xff]
        %v2542 = vld [vmem:[%s1294 + $0x18] sm:$0xff]
        %v2543 = vld [vmem:[%s1303] sm:$0x1]
        %v2545 = vperm.slane %v2543, 0
        %v2548 = vsel %vm1613, %v1604, 0
        %2550 = vmatpush.msra.mxu0 0.0
        %2551 = vmatpush.msra.mxu0 0.0
        %2552 = vmatpush.msra.mxu0 0.0
        %2553 = vmatpush.msra.mxu0 0.0
        %2554 = vmatpush.msra.mxu0 0.0
        %2555 = vmatpush.msra.mxu0 0.0
        %2556 = vmatpush.msra.mxu0 0.0
        %2557 = vmatpush.msra.mxu0 0.0
        %2558 = vmatpush.msra.mxu0 0.0
        %2559 = vmatpush.msra.mxu0 0.0
        %2560 = vmatpush.msra.mxu0 0.0
        %2561 = vmatpush.msra.mxu0 0.0
        %2562 = vmatpush.msra.mxu0 %v2542
        %2563 = vmatpush.msra.mxu0 %v2541
        %2564 = vmatpush.msra.mxu0 %v2540
        %2565 = vmatpush.msra.mxu0 %v2539
        %2566 = vmatmul.f32.gmra.mxu0 %v2548
        %v2567 = vpop.f32.mrf.mxu0
        %v2568 = vadd.f32 %v2545, %v2567
        %2569 = vdwg.mxu0
        %v2570 = vld [vmem:[#allocation11] sm:$0xff]
        %v2571 = vmul.f32 %v2537, 0.35355338
        %2573 = vrot.lane.b32.xlu0 %v2571, 120
        %v2574 = vpop.permute.xlu0 %2573
        %2575 = vrot.lane.b32.xlu0 %v2571, 112
        %v2576 = vpop.permute.xlu0 %2575
        %2577 = vrot.lane.b32.xlu0 %v2571, 104
        %v2578 = vpop.permute.xlu0 %2577
        %2580 = vrot.lane.b32.xlu0 %v2568, 120
        %v2581 = vpop.permute.xlu0 %2580
        %2583 = vrot.lane.b32.xlu0 %v2568, 112
        %v2584 = vpop.permute.xlu0 %2583
        %2586 = vrot.lane.b32.xlu0 %v2568, 104
        %v2587 = vpop.permute.xlu0 %2586
        %2589 = vxpose.xlu0.b32.start [1/16] %v2568, 128
        %2590 = vxpose.xlu0.b32.cont [2/16] 0.0, 128
        %2591 = vxpose.xlu0.b32.cont [3/16] 0.0, 128
        %2592 = vxpose.xlu0.b32.cont [4/16] 0.0, 128
        %2593 = vxpose.xlu0.b32.cont [5/16] 0.0, 128
        %2594 = vxpose.xlu0.b32.cont [6/16] 0.0, 128
        %2595 = vxpose.xlu0.b32.cont [7/16] 0.0, 128
        %2596 = vxpose.xlu0.b32.cont [8/16] 0.0, 128
        %2597 = vxpose.xlu0.b32.cont [9/16] 0.0, 128
        %2598 = vxpose.xlu0.b32.cont [10/16] 0.0, 128
        %2599 = vxpose.xlu0.b32.cont [11/16] 0.0, 128
        %2600 = vxpose.xlu0.b32.cont [12/16] 0.0, 128
        %2601 = vxpose.xlu0.b32.cont [13/16] 0.0, 128
        %2602 = vxpose.xlu0.b32.cont [14/16] 0.0, 128
        %2603 = vxpose.xlu0.b32.cont [15/16] 0.0, 128
        %2604 = vxpose.xlu0.b32.end [16/16] 0.0, 128
        %v2605 = vpop.trf.xlu0
        %v2606 = vpop.trf.xlu0
        %v2607 = vpop.trf.xlu0
        %v2608 = vpop.trf.xlu0
        %v2609 = vpop.trf.xlu0
        %v2610 = vpop.trf.xlu0
        %v2611 = vpop.trf.xlu0
        %v2612 = vpop.trf.xlu0
        %v2613 = vpop.trf.xlu0
        %v2614 = vpop.trf.xlu0
        %v2615 = vpop.trf.xlu0
        %v2616 = vpop.trf.xlu0
        %v2617 = vpop.trf.xlu0
        %v2618 = vpop.trf.xlu0
        %v2619 = vpop.trf.xlu0
        %v2620 = vpop.trf.xlu0
        %2621 = vxpose.xlu0.b32.start [1/16] %v2581, 128
        %2622 = vxpose.xlu0.b32.cont [2/16] 0.0, 128
        %2623 = vxpose.xlu0.b32.cont [3/16] 0.0, 128
        %2624 = vxpose.xlu0.b32.cont [4/16] 0.0, 128
        %2625 = vxpose.xlu0.b32.cont [5/16] 0.0, 128
        %2626 = vxpose.xlu0.b32.cont [6/16] 0.0, 128
        %2627 = vxpose.xlu0.b32.cont [7/16] 0.0, 128
        %2628 = vxpose.xlu0.b32.cont [8/16] 0.0, 128
        %2629 = vxpose.xlu0.b32.cont [9/16] 0.0, 128
        %2630 = vxpose.xlu0.b32.cont [10/16] 0.0, 128
        %2631 = vxpose.xlu0.b32.cont [11/16] 0.0, 128
        %2632 = vxpose.xlu0.b32.cont [12/16] 0.0, 128
        %2633 = vxpose.xlu0.b32.cont [13/16] 0.0, 128
        %2634 = vxpose.xlu0.b32.cont [14/16] 0.0, 128
        %2635 = vxpose.xlu0.b32.cont [15/16] 0.0, 128
        %2636 = vxpose.xlu0.b32.end [16/16] 0.0, 128
        %v2637 = vpop.trf.xlu0
        %v2638 = vpop.trf.xlu0
        %v2639 = vpop.trf.xlu0
        %v2640 = vpop.trf.xlu0
        %v2641 = vpop.trf.xlu0
        %v2642 = vpop.trf.xlu0
        %v2643 = vpop.trf.xlu0
        %v2644 = vpop.trf.xlu0
        %v2645 = vpop.trf.xlu0
        %v2646 = vpop.trf.xlu0
        %v2647 = vpop.trf.xlu0
        %v2648 = vpop.trf.xlu0
        %v2649 = vpop.trf.xlu0
        %v2650 = vpop.trf.xlu0
        %v2651 = vpop.trf.xlu0
        %v2652 = vpop.trf.xlu0
        %2653 = vxpose.xlu0.b32.start [1/16] %v2584, 128
        %2654 = vxpose.xlu0.b32.cont [2/16] 0.0, 128
        %2655 = vxpose.xlu0.b32.cont [3/16] 0.0, 128
        %2656 = vxpose.xlu0.b32.cont [4/16] 0.0, 128
        %2657 = vxpose.xlu0.b32.cont [5/16] 0.0, 128
        %2658 = vxpose.xlu0.b32.cont [6/16] 0.0, 128
        %2659 = vxpose.xlu0.b32.cont [7/16] 0.0, 128
        %2660 = vxpose.xlu0.b32.cont [8/16] 0.0, 128
        %2661 = vxpose.xlu0.b32.cont [9/16] 0.0, 128
        %2662 = vxpose.xlu0.b32.cont [10/16] 0.0, 128
        %2663 = vxpose.xlu0.b32.cont [11/16] 0.0, 128
        %2664 = vxpose.xlu0.b32.cont [12/16] 0.0, 128
        %2665 = vxpose.xlu0.b32.cont [13/16] 0.0, 128
        %2666 = vxpose.xlu0.b32.cont [14/16] 0.0, 128
        %2667 = vxpose.xlu0.b32.cont [15/16] 0.0, 128
        %2668 = vxpose.xlu0.b32.end [16/16] 0.0, 128
        %v2669 = vpop.trf.xlu0
        %v2670 = vpop.trf.xlu0
        %v2671 = vpop.trf.xlu0
        %v2672 = vpop.trf.xlu0
        %v2673 = vpop.trf.xlu0
        %v2674 = vpop.trf.xlu0
        %v2675 = vpop.trf.xlu0
        %v2676 = vpop.trf.xlu0
        %v2677 = vpop.trf.xlu0
        %v2678 = vpop.trf.xlu0
        %v2679 = vpop.trf.xlu0
        %v2680 = vpop.trf.xlu0
        %v2681 = vpop.trf.xlu0
        %v2682 = vpop.trf.xlu0
        %v2683 = vpop.trf.xlu0
        %v2684 = vpop.trf.xlu0
        %2685 = vxpose.xlu0.b32.start [1/16] %v2587, 128
        %2686 = vxpose.xlu0.b32.cont [2/16] 0.0, 128
        %2687 = vxpose.xlu0.b32.cont [3/16] 0.0, 128
        %2688 = vxpose.xlu0.b32.cont [4/16] 0.0, 128
        %2689 = vxpose.xlu0.b32.cont [5/16] 0.0, 128
        %2690 = vxpose.xlu0.b32.cont [6/16] 0.0, 128
        %2691 = vxpose.xlu0.b32.cont [7/16] 0.0, 128
        %2692 = vxpose.xlu0.b32.cont [8/16] 0.0, 128
        %2693 = vxpose.xlu0.b32.cont [9/16] 0.0, 128
        %2694 = vxpose.xlu0.b32.cont [10/16] 0.0, 128
        %2695 = vxpose.xlu0.b32.cont [11/16] 0.0, 128
        %2696 = vxpose.xlu0.b32.cont [12/16] 0.0, 128
        %2697 = vxpose.xlu0.b32.cont [13/16] 0.0, 128
        %2698 = vxpose.xlu0.b32.cont [14/16] 0.0, 128
        %2699 = vxpose.xlu0.b32.cont [15/16] 0.0, 128
        %2700 = vxpose.xlu0.b32.end [16/16] 0.0, 128
        %v2701 = vpop.trf.xlu0
        %v2702 = vpop.trf.xlu0
        %v2703 = vpop.trf.xlu0
        %v2704 = vpop.trf.xlu0
        %v2705 = vpop.trf.xlu0
        %v2706 = vpop.trf.xlu0
        %v2707 = vpop.trf.xlu0
        %v2708 = vpop.trf.xlu0
        %v2709 = vpop.trf.xlu0
        %v2710 = vpop.trf.xlu0
        %v2711 = vpop.trf.xlu0
        %v2712 = vpop.trf.xlu0
        %v2713 = vpop.trf.xlu0
        %v2714 = vpop.trf.xlu0
        %v2715 = vpop.trf.xlu0
        %v2716 = vpop.trf.xlu0
        %v2717 = vsel %vm1793, %v2571, 0
        %2719 = vmatpush.msra.mxu0 0.0
        %2720 = vmatpush.msra.mxu0 0.0
        %2721 = vmatpush.msra.mxu0 0.0
        %2722 = vmatpush.msra.mxu0 0.0
        %2723 = vmatpush.msra.mxu0 0.0
        %2724 = vmatpush.msra.mxu0 0.0
        %2725 = vmatpush.msra.mxu0 0.0
        %2726 = vmatpush.msra.mxu0 0.0
        %2727 = vmatpush.msra.mxu0 0.0
        %2728 = vmatpush.msra.mxu0 0.0
        %2729 = vmatpush.msra.mxu0 0.0
        %2730 = vmatpush.msra.mxu0 0.0
        %2731 = vmatpush.msra.mxu0 0.0
        %2732 = vmatpush.msra.mxu0 0.0
        %2733 = vmatpush.msra.mxu0 0.0
        %2734 = vmatpush.msra.mxu0 %v2605
        %2735 = vmatmul.f32.gmra.mxu0 %v2717
        %v2736 = vpop.f32.mrf.mxu0
        %v2737 = vadd.f32 %v2570, %v2736
        %2738 = vdwg.mxu0
        %v2739 = vsel %vm1793, %v2574, 0
        %2741 = vmatpush.msra.mxu0 0.0
        %2742 = vmatpush.msra.mxu0 0.0
        %2743 = vmatpush.msra.mxu0 0.0
        %2744 = vmatpush.msra.mxu0 0.0
        %2745 = vmatpush.msra.mxu0 0.0
        %2746 = vmatpush.msra.mxu0 0.0
        %2747 = vmatpush.msra.mxu0 0.0
        %2748 = vmatpush.msra.mxu0 0.0
        %2749 = vmatpush.msra.mxu0 0.0
        %2750 = vmatpush.msra.mxu0 0.0
        %2751 = vmatpush.msra.mxu0 0.0
        %2752 = vmatpush.msra.mxu0 0.0
        %2753 = vmatpush.msra.mxu0 0.0
        %2754 = vmatpush.msra.mxu0 0.0
        %2755 = vmatpush.msra.mxu0 0.0
        %2756 = vmatpush.msra.mxu0 %v2637
        %2757 = vmatmul.f32.gmra.mxu0 %v2739
        %v2758 = vpop.f32.mrf.mxu0
        %v2759 = vadd.f32 %v2570, %v2758
        %2760 = vdwg.mxu0
        %v2761 = vsel %vm1793, %v2576, 0
        %2763 = vmatpush.msra.mxu0 0.0
        %2764 = vmatpush.msra.mxu0 0.0
        %2765 = vmatpush.msra.mxu0 0.0
        %2766 = vmatpush.msra.mxu0 0.0
        %2767 = vmatpush.msra.mxu0 0.0
        %2768 = vmatpush.msra.mxu0 0.0
        %2769 = vmatpush.msra.mxu0 0.0
        %2770 = vmatpush.msra.mxu0 0.0
        %2771 = vmatpush.msra.mxu0 0.0
        %2772 = vmatpush.msra.mxu0 0.0
        %2773 = vmatpush.msra.mxu0 0.0
        %2774 = vmatpush.msra.mxu0 0.0
        %2775 = vmatpush.msra.mxu0 0.0
        %2776 = vmatpush.msra.mxu0 0.0
        %2777 = vmatpush.msra.mxu0 0.0
        %2778 = vmatpush.msra.mxu0 %v2669
        %2779 = vmatmul.f32.gmra.mxu0 %v2761
        %v2780 = vpop.f32.mrf.mxu0
        %v2781 = vadd.f32 %v2570, %v2780
        %2782 = vdwg.mxu0
        %v2783 = vsel %vm1793, %v2578, 0
        %2785 = vmatpush.msra.mxu0 0.0
        %2786 = vmatpush.msra.mxu0 0.0
        %2787 = vmatpush.msra.mxu0 0.0
        %2788 = vmatpush.msra.mxu0 0.0
        %2789 = vmatpush.msra.mxu0 0.0
        %2790 = vmatpush.msra.mxu0 0.0
        %2791 = vmatpush.msra.mxu0 0.0
        %2792 = vmatpush.msra.mxu0 0.0
        %2793 = vmatpush.msra.mxu0 0.0
        %2794 = vmatpush.msra.mxu0 0.0
        %2795 = vmatpush.msra.mxu0 0.0
        %2796 = vmatpush.msra.mxu0 0.0
        %2797 = vmatpush.msra.mxu0 0.0
        %2798 = vmatpush.msra.mxu0 0.0
        %2799 = vmatpush.msra.mxu0 0.0
        %2800 = vmatpush.msra.mxu0 %v2701
        %2801 = vmatmul.f32.gmra.mxu0 %v2783
        %v2802 = vpop.f32.mrf.mxu0
        %v2803 = vadd.f32 %v2570, %v2802
        %2804 = vdwg.mxu0
        %v2805 = vsel %vm1793, %v2737, -inf
        %2806 = vmax.xlane.f32.xlu0 %v2805
        %v2807 = vpop.xlane.xlu0 %2806
        %v2808 = vsel %vm1793, %v2759, -inf
        %2809 = vmax.xlane.f32.xlu0 %v2808
        %v2810 = vpop.xlane.xlu0 %2809
        %v2811 = vsel %vm1793, %v2781, -inf
        %2812 = vmax.xlane.f32.xlu0 %v2811
        %v2813 = vpop.xlane.xlu0 %2812
        %v2814 = vsel %vm1793, %v2803, -inf
        %2815 = vmax.xlane.f32.xlu0 %v2814
        %v2816 = vpop.xlane.xlu0 %2815
        %v2817 = vmax.f32 %v2807, -1e+30
        %v2818 = vmax.f32 %v2810, -1e+30
        %v2819 = vmax.f32 %v2813, -1e+30
        %v2820 = vmax.f32 %v2816, -1e+30
        %v2821 = vsub.f32 %v2737, %v2817
        %v2822 = vsub.f32 %v2759, %v2818
        %v2823 = vsub.f32 %v2781, %v2819
        %v2824 = vsub.f32 %v2803, %v2820
        %v2825 = vmul.f32 %v2821, 1.442695
        %v2826 = vpow.pop %v2825
        %v2827 = vmul.f32 %v2822, 1.442695
        %v2828 = vpow.pop %v2827
        %v2829 = vmul.f32 %v2823, 1.442695
        %v2830 = vpow.pop %v2829
        %v2831 = vmul.f32 %v2824, 1.442695
        %v2832 = vpow.pop %v2831
        %v2833 = vsel %vm1793, %v2826, 0.0
        %2834 = vadd.xlane.f32.xlu0 %v2833
        %v2835 = vpop.xlane.xlu0 %2834
        %v2836 = vsel %vm1793, %v2828, 0.0
        %2837 = vadd.xlane.f32.xlu0 %v2836
        %v2838 = vpop.xlane.xlu0 %2837
        %v2839 = vsel %vm1793, %v2830, 0.0
        %2840 = vadd.xlane.f32.xlu0 %v2839
        %v2841 = vpop.xlane.xlu0 %2840
        %v2842 = vsel %vm1793, %v2832, 0.0
        %2843 = vadd.xlane.f32.xlu0 %v2842
        %v2844 = vpop.xlane.xlu0 %2843
        %v2845 = vmax.f32 %v2835, 1e-30
        %v2846 = vmax.f32 %v2838, 1e-30
        %v2847 = vmax.f32 %v2841, 1e-30
        %v2848 = vmax.f32 %v2844, 1e-30
        %v2849 = vrcp.pop %v2845
        %v2850 = vrcp.pop %v2846
        %v2851 = vrcp.pop %v2847
        %v2852 = vrcp.pop %v2848
        %v2853 = vmul.f32 %v2826, %v2849
        %v2854 = vmul.f32 %v2828, %v2850
        %v2855 = vmul.f32 %v2830, %v2851
        %v2856 = vmul.f32 %v2832, %v2852
        %2857 = vrot.lane.b32.xlu0 %v2568, 96
        %v2858 = vpop.permute.xlu0 %2857
        %2859 = vrot.lane.b32.xlu0 %v2581, 96
        %v2860 = vpop.permute.xlu0 %2859
        %2861 = vrot.lane.b32.xlu0 %v2584, 96
        %v2862 = vpop.permute.xlu0 %2861
        %2863 = vrot.lane.b32.xlu0 %v2587, 96
        %v2864 = vpop.permute.xlu0 %2863
        %2869 = vxpose.xlu0.b32.start [1/16] %v2858, 128
        %2870 = vxpose.xlu0.b32.cont [2/16] 0.0, 128
        %2871 = vxpose.xlu0.b32.cont [3/16] 0.0, 128
        %2872 = vxpose.xlu0.b32.cont [4/16] 0.0, 128
        %2873 = vxpose.xlu0.b32.cont [5/16] 0.0, 128
        %2874 = vxpose.xlu0.b32.cont [6/16] 0.0, 128
        %2875 = vxpose.xlu0.b32.cont [7/16] 0.0, 128
        %2876 = vxpose.xlu0.b32.cont [8/16] 0.0, 128
        %2877 = vxpose.xlu0.b32.cont [9/16] 0.0, 128
        %2878 = vxpose.xlu0.b32.cont [10/16] 0.0, 128
        %2879 = vxpose.xlu0.b32.cont [11/16] 0.0, 128
        %2880 = vxpose.xlu0.b32.cont [12/16] 0.0, 128
        %2881 = vxpose.xlu0.b32.cont [13/16] 0.0, 128
        %2882 = vxpose.xlu0.b32.cont [14/16] 0.0, 128
        %2883 = vxpose.xlu0.b32.cont [15/16] 0.0, 128
        %2884 = vxpose.xlu0.b32.end [16/16] 0.0, 128
        %v2885 = vpop.trf.xlu0
        %v2886 = vpop.trf.xlu0
        %v2887 = vpop.trf.xlu0
        %v2888 = vpop.trf.xlu0
        %v2889 = vpop.trf.xlu0
        %v2890 = vpop.trf.xlu0
        %v2891 = vpop.trf.xlu0
        %v2892 = vpop.trf.xlu0
        %v2893 = vpop.trf.xlu0
        %v2894 = vpop.trf.xlu0
        %v2895 = vpop.trf.xlu0
        %v2896 = vpop.trf.xlu0
        %v2897 = vpop.trf.xlu0
        %v2898 = vpop.trf.xlu0
        %v2899 = vpop.trf.xlu0
        %v2900 = vpop.trf.xlu0
        %2901 = vxpose.xlu0.b32.start [1/16] %v2860, 128
        %2902 = vxpose.xlu0.b32.cont [2/16] 0.0, 128
        %2903 = vxpose.xlu0.b32.cont [3/16] 0.0, 128
        %2904 = vxpose.xlu0.b32.cont [4/16] 0.0, 128
        %2905 = vxpose.xlu0.b32.cont [5/16] 0.0, 128
        %2906 = vxpose.xlu0.b32.cont [6/16] 0.0, 128
        %2907 = vxpose.xlu0.b32.cont [7/16] 0.0, 128
        %2908 = vxpose.xlu0.b32.cont [8/16] 0.0, 128
        %2909 = vxpose.xlu0.b32.cont [9/16] 0.0, 128
        %2910 = vxpose.xlu0.b32.cont [10/16] 0.0, 128
        %2911 = vxpose.xlu0.b32.cont [11/16] 0.0, 128
        %2912 = vxpose.xlu0.b32.cont [12/16] 0.0, 128
        %2913 = vxpose.xlu0.b32.cont [13/16] 0.0, 128
        %2914 = vxpose.xlu0.b32.cont [14/16] 0.0, 128
        %2915 = vxpose.xlu0.b32.cont [15/16] 0.0, 128
        %2916 = vxpose.xlu0.b32.end [16/16] 0.0, 128
        %v2917 = vpop.trf.xlu0
        %v2918 = vpop.trf.xlu0
        %v2919 = vpop.trf.xlu0
        %v2920 = vpop.trf.xlu0
        %v2921 = vpop.trf.xlu0
        %v2922 = vpop.trf.xlu0
        %v2923 = vpop.trf.xlu0
        %v2924 = vpop.trf.xlu0
        %v2925 = vpop.trf.xlu0
        %v2926 = vpop.trf.xlu0
        %v2927 = vpop.trf.xlu0
        %v2928 = vpop.trf.xlu0
        %v2929 = vpop.trf.xlu0
        %v2930 = vpop.trf.xlu0
        %v2931 = vpop.trf.xlu0
        %v2932 = vpop.trf.xlu0
        %2933 = vxpose.xlu0.b32.start [1/16] %v2862, 128
        %2934 = vxpose.xlu0.b32.cont [2/16] 0.0, 128
        %2935 = vxpose.xlu0.b32.cont [3/16] 0.0, 128
        %2936 = vxpose.xlu0.b32.cont [4/16] 0.0, 128
        %2937 = vxpose.xlu0.b32.cont [5/16] 0.0, 128
        %2938 = vxpose.xlu0.b32.cont [6/16] 0.0, 128
        %2939 = vxpose.xlu0.b32.cont [7/16] 0.0, 128
        %2940 = vxpose.xlu0.b32.cont [8/16] 0.0, 128
        %2941 = vxpose.xlu0.b32.cont [9/16] 0.0, 128
        %2942 = vxpose.xlu0.b32.cont [10/16] 0.0, 128
        %2943 = vxpose.xlu0.b32.cont [11/16] 0.0, 128
        %2944 = vxpose.xlu0.b32.cont [12/16] 0.0, 128
        %2945 = vxpose.xlu0.b32.cont [13/16] 0.0, 128
        %2946 = vxpose.xlu0.b32.cont [14/16] 0.0, 128
        %2947 = vxpose.xlu0.b32.cont [15/16] 0.0, 128
        %2948 = vxpose.xlu0.b32.end [16/16] 0.0, 128
        %v2949 = vpop.trf.xlu0
        %v2950 = vpop.trf.xlu0
        %v2951 = vpop.trf.xlu0
        %v2952 = vpop.trf.xlu0
        %v2953 = vpop.trf.xlu0
        %v2954 = vpop.trf.xlu0
        %v2955 = vpop.trf.xlu0
        %v2956 = vpop.trf.xlu0
        %v2957 = vpop.trf.xlu0
        %v2958 = vpop.trf.xlu0
        %v2959 = vpop.trf.xlu0
        %v2960 = vpop.trf.xlu0
        %v2961 = vpop.trf.xlu0
        %v2962 = vpop.trf.xlu0
        %v2963 = vpop.trf.xlu0
        %v2964 = vpop.trf.xlu0
        %2965 = vxpose.xlu0.b32.start [1/16] %v2864, 128
        %2966 = vxpose.xlu0.b32.cont [2/16] 0.0, 128
        %2967 = vxpose.xlu0.b32.cont [3/16] 0.0, 128
        %2968 = vxpose.xlu0.b32.cont [4/16] 0.0, 128
        %2969 = vxpose.xlu0.b32.cont [5/16] 0.0, 128
        %2970 = vxpose.xlu0.b32.cont [6/16] 0.0, 128
        %2971 = vxpose.xlu0.b32.cont [7/16] 0.0, 128
        %2972 = vxpose.xlu0.b32.cont [8/16] 0.0, 128
        %2973 = vxpose.xlu0.b32.cont [9/16] 0.0, 128
        %2974 = vxpose.xlu0.b32.cont [10/16] 0.0, 128
        %2975 = vxpose.xlu0.b32.cont [11/16] 0.0, 128
        %2976 = vxpose.xlu0.b32.cont [12/16] 0.0, 128
        %2977 = vxpose.xlu0.b32.cont [13/16] 0.0, 128
        %2978 = vxpose.xlu0.b32.cont [14/16] 0.0, 128
        %2979 = vxpose.xlu0.b32.cont [15/16] 0.0, 128
        %2980 = vxpose.xlu0.b32.end [16/16] 0.0, 128
        %v2981 = vpop.trf.xlu0
        %v2982 = vpop.trf.xlu0
        %v2983 = vpop.trf.xlu0
        %v2984 = vpop.trf.xlu0
        %v2985 = vpop.trf.xlu0
        %v2986 = vpop.trf.xlu0
        %v2987 = vpop.trf.xlu0
        %v2988 = vpop.trf.xlu0
        %v2989 = vpop.trf.xlu0
        %v2990 = vpop.trf.xlu0
        %v2991 = vpop.trf.xlu0
        %v2992 = vpop.trf.xlu0
        %v2993 = vpop.trf.xlu0
        %v2994 = vpop.trf.xlu0
        %v2995 = vpop.trf.xlu0
        %v2996 = vpop.trf.xlu0
        %v2998 = vsel %vm1793, %v2885, 0
        %v3001 = vsel %vm1793, %v2853, 0
        %3003 = vmatpush.xpose.msra.mxu0 0.0
        %3004 = vmatpush.xpose.msra.mxu0 0.0
        %3005 = vmatpush.xpose.msra.mxu0 0.0
        %3006 = vmatpush.xpose.msra.mxu0 0.0
        %3007 = vmatpush.xpose.msra.mxu0 0.0
        %3008 = vmatpush.xpose.msra.mxu0 0.0
        %3009 = vmatpush.xpose.msra.mxu0 0.0
        %3010 = vmatpush.xpose.msra.mxu0 0.0
        %3011 = vmatpush.xpose.msra.mxu0 0.0
        %3012 = vmatpush.xpose.msra.mxu0 0.0
        %3013 = vmatpush.xpose.msra.mxu0 0.0
        %3014 = vmatpush.xpose.msra.mxu0 0.0
        %3015 = vmatpush.xpose.msra.mxu0 0.0
        %3016 = vmatpush.xpose.msra.mxu0 0.0
        %3017 = vmatpush.xpose.msra.mxu0 0.0
        %3018 = vmatpush.xpose.msra.mxu0 %v3001
        %3019 = vmatmul.f32.gmra.mxu0 %v2998
        %v3020 = vpop.f32.mrf.mxu0
        %v3021 = vadd.f32 0.0, %v3020
        %3022 = vdwg.mxu0
        %v3024 = vsel %vm1793, %v2917, 0
        %v3027 = vsel %vm1793, %v2854, 0
        %3029 = vmatpush.xpose.msra.mxu0 0.0
        %3030 = vmatpush.xpose.msra.mxu0 0.0
        %3031 = vmatpush.xpose.msra.mxu0 0.0
        %3032 = vmatpush.xpose.msra.mxu0 0.0
        %3033 = vmatpush.xpose.msra.mxu0 0.0
        %3034 = vmatpush.xpose.msra.mxu0 0.0
        %3035 = vmatpush.xpose.msra.mxu0 0.0
        %3036 = vmatpush.xpose.msra.mxu0 0.0
        %3037 = vmatpush.xpose.msra.mxu0 0.0
        %3038 = vmatpush.xpose.msra.mxu0 0.0
        %3039 = vmatpush.xpose.msra.mxu0 0.0
        %3040 = vmatpush.xpose.msra.mxu0 0.0
        %3041 = vmatpush.xpose.msra.mxu0 0.0
        %3042 = vmatpush.xpose.msra.mxu0 0.0
        %3043 = vmatpush.xpose.msra.mxu0 0.0
        %3044 = vmatpush.xpose.msra.mxu0 %v3027
        %3045 = vmatmul.f32.gmra.mxu0 %v3024
        %v3046 = vpop.f32.mrf.mxu0
        %v3047 = vadd.f32 0.0, %v3046
        %3048 = vdwg.mxu0
        %v3050 = vsel %vm1793, %v2949, 0
        %v3053 = vsel %vm1793, %v2855, 0
        %3055 = vmatpush.xpose.msra.mxu0 0.0
        %3056 = vmatpush.xpose.msra.mxu0 0.0
        %3057 = vmatpush.xpose.msra.mxu0 0.0
        %3058 = vmatpush.xpose.msra.mxu0 0.0
        %3059 = vmatpush.xpose.msra.mxu0 0.0
        %3060 = vmatpush.xpose.msra.mxu0 0.0
        %3061 = vmatpush.xpose.msra.mxu0 0.0
        %3062 = vmatpush.xpose.msra.mxu0 0.0
        %3063 = vmatpush.xpose.msra.mxu0 0.0
        %3064 = vmatpush.xpose.msra.mxu0 0.0
        %3065 = vmatpush.xpose.msra.mxu0 0.0
        %3066 = vmatpush.xpose.msra.mxu0 0.0
        %3067 = vmatpush.xpose.msra.mxu0 0.0
        %3068 = vmatpush.xpose.msra.mxu0 0.0
        %3069 = vmatpush.xpose.msra.mxu0 0.0
        %3070 = vmatpush.xpose.msra.mxu0 %v3053
        %3071 = vmatmul.f32.gmra.mxu0 %v3050
        %v3072 = vpop.f32.mrf.mxu0
        %v3073 = vadd.f32 0.0, %v3072
        %3074 = vdwg.mxu0
        %v3076 = vsel %vm1793, %v2981, 0
        %v3079 = vsel %vm1793, %v2856, 0
        %3081 = vmatpush.xpose.msra.mxu0 0.0
        %3082 = vmatpush.xpose.msra.mxu0 0.0
        %3083 = vmatpush.xpose.msra.mxu0 0.0
        %3084 = vmatpush.xpose.msra.mxu0 0.0
        %3085 = vmatpush.xpose.msra.mxu0 0.0
        %3086 = vmatpush.xpose.msra.mxu0 0.0
        %3087 = vmatpush.xpose.msra.mxu0 0.0
        %3088 = vmatpush.xpose.msra.mxu0 0.0
        %3089 = vmatpush.xpose.msra.mxu0 0.0
        %3090 = vmatpush.xpose.msra.mxu0 0.0
        %3091 = vmatpush.xpose.msra.mxu0 0.0
        %3092 = vmatpush.xpose.msra.mxu0 0.0
        %3093 = vmatpush.xpose.msra.mxu0 0.0
        %3094 = vmatpush.xpose.msra.mxu0 0.0
        %3095 = vmatpush.xpose.msra.mxu0 0.0
        %3096 = vmatpush.xpose.msra.mxu0 %v3079
        %3097 = vmatmul.f32.gmra.mxu0 %v3076
        %v3098 = vpop.f32.mrf.mxu0
        %v3099 = vadd.f32 0.0, %v3098
        %3100 = vdwg.mxu0
        %3101 = vxpose.xlu0.b32.start [1/16] %v3021, 128
        %3102 = vxpose.xlu0.b32.cont [2/16] 0.0, 128
        %3103 = vxpose.xlu0.b32.cont [3/16] 0.0, 128
        %3104 = vxpose.xlu0.b32.cont [4/16] 0.0, 128
        %3105 = vxpose.xlu0.b32.cont [5/16] 0.0, 128
        %3106 = vxpose.xlu0.b32.cont [6/16] 0.0, 128
        %3107 = vxpose.xlu0.b32.cont [7/16] 0.0, 128
        %3108 = vxpose.xlu0.b32.cont [8/16] 0.0, 128
        %3109 = vxpose.xlu0.b32.cont [9/16] 0.0, 128
        %3110 = vxpose.xlu0.b32.cont [10/16] 0.0, 128
        %3111 = vxpose.xlu0.b32.cont [11/16] 0.0, 128
        %3112 = vxpose.xlu0.b32.cont [12/16] 0.0, 128
        %3113 = vxpose.xlu0.b32.cont [13/16] 0.0, 128
        %3114 = vxpose.xlu0.b32.cont [14/16] 0.0, 128
        %3115 = vxpose.xlu0.b32.cont [15/16] 0.0, 128
        %3116 = vxpose.xlu0.b32.end [16/16] 0.0, 128
        %v3117 = vpop.trf.xlu0
        %v3118 = vpop.trf.xlu0
        %v3119 = vpop.trf.xlu0
        %v3120 = vpop.trf.xlu0
        %v3121 = vpop.trf.xlu0
        %v3122 = vpop.trf.xlu0
        %v3123 = vpop.trf.xlu0
        %v3124 = vpop.trf.xlu0
        %v3125 = vpop.trf.xlu0
        %v3126 = vpop.trf.xlu0
        %v3127 = vpop.trf.xlu0
        %v3128 = vpop.trf.xlu0
        %v3129 = vpop.trf.xlu0
        %v3130 = vpop.trf.xlu0
        %v3131 = vpop.trf.xlu0
        %v3132 = vpop.trf.xlu0
        %3133 = vxpose.xlu0.b32.start [1/16] %v3047, 128
        %3134 = vxpose.xlu0.b32.cont [2/16] 0.0, 128
        %3135 = vxpose.xlu0.b32.cont [3/16] 0.0, 128
        %3136 = vxpose.xlu0.b32.cont [4/16] 0.0, 128
        %3137 = vxpose.xlu0.b32.cont [5/16] 0.0, 128
        %3138 = vxpose.xlu0.b32.cont [6/16] 0.0, 128
        %3139 = vxpose.xlu0.b32.cont [7/16] 0.0, 128
        %3140 = vxpose.xlu0.b32.cont [8/16] 0.0, 128
        %3141 = vxpose.xlu0.b32.cont [9/16] 0.0, 128
        %3142 = vxpose.xlu0.b32.cont [10/16] 0.0, 128
        %3143 = vxpose.xlu0.b32.cont [11/16] 0.0, 128
        %3144 = vxpose.xlu0.b32.cont [12/16] 0.0, 128
        %3145 = vxpose.xlu0.b32.cont [13/16] 0.0, 128
        %3146 = vxpose.xlu0.b32.cont [14/16] 0.0, 128
        %3147 = vxpose.xlu0.b32.cont [15/16] 0.0, 128
        %3148 = vxpose.xlu0.b32.end [16/16] 0.0, 128
        %v3149 = vpop.trf.xlu0
        %v3150 = vpop.trf.xlu0
        %v3151 = vpop.trf.xlu0
        %v3152 = vpop.trf.xlu0
        %v3153 = vpop.trf.xlu0
        %v3154 = vpop.trf.xlu0
        %v3155 = vpop.trf.xlu0
        %v3156 = vpop.trf.xlu0
        %v3157 = vpop.trf.xlu0
        %v3158 = vpop.trf.xlu0
        %v3159 = vpop.trf.xlu0
        %v3160 = vpop.trf.xlu0
        %v3161 = vpop.trf.xlu0
        %v3162 = vpop.trf.xlu0
        %v3163 = vpop.trf.xlu0
        %v3164 = vpop.trf.xlu0
        %3165 = vxpose.xlu0.b32.start [1/16] %v3073, 128
        %3166 = vxpose.xlu0.b32.cont [2/16] 0.0, 128
        %3167 = vxpose.xlu0.b32.cont [3/16] 0.0, 128
        %3168 = vxpose.xlu0.b32.cont [4/16] 0.0, 128
        %3169 = vxpose.xlu0.b32.cont [5/16] 0.0, 128
        %3170 = vxpose.xlu0.b32.cont [6/16] 0.0, 128
        %3171 = vxpose.xlu0.b32.cont [7/16] 0.0, 128
        %3172 = vxpose.xlu0.b32.cont [8/16] 0.0, 128
        %3173 = vxpose.xlu0.b32.cont [9/16] 0.0, 128
        %3174 = vxpose.xlu0.b32.cont [10/16] 0.0, 128
        %3175 = vxpose.xlu0.b32.cont [11/16] 0.0, 128
        %3176 = vxpose.xlu0.b32.cont [12/16] 0.0, 128
        %3177 = vxpose.xlu0.b32.cont [13/16] 0.0, 128
        %3178 = vxpose.xlu0.b32.cont [14/16] 0.0, 128
        %3179 = vxpose.xlu0.b32.cont [15/16] 0.0, 128
        %3180 = vxpose.xlu0.b32.end [16/16] 0.0, 128
        %v3181 = vpop.trf.xlu0
        %v3182 = vpop.trf.xlu0
        %v3183 = vpop.trf.xlu0
        %v3184 = vpop.trf.xlu0
        %v3185 = vpop.trf.xlu0
        %v3186 = vpop.trf.xlu0
        %v3187 = vpop.trf.xlu0
        %v3188 = vpop.trf.xlu0
        %v3189 = vpop.trf.xlu0
        %v3190 = vpop.trf.xlu0
        %v3191 = vpop.trf.xlu0
        %v3192 = vpop.trf.xlu0
        %v3193 = vpop.trf.xlu0
        %v3194 = vpop.trf.xlu0
        %v3195 = vpop.trf.xlu0
        %v3196 = vpop.trf.xlu0
        %3197 = vxpose.xlu0.b32.start [1/16] %v3099, 128
        %3198 = vxpose.xlu0.b32.cont [2/16] 0.0, 128
        %3199 = vxpose.xlu0.b32.cont [3/16] 0.0, 128
        %3200 = vxpose.xlu0.b32.cont [4/16] 0.0, 128
        %3201 = vxpose.xlu0.b32.cont [5/16] 0.0, 128
        %3202 = vxpose.xlu0.b32.cont [6/16] 0.0, 128
        %3203 = vxpose.xlu0.b32.cont [7/16] 0.0, 128
        %3204 = vxpose.xlu0.b32.cont [8/16] 0.0, 128
        %3205 = vxpose.xlu0.b32.cont [9/16] 0.0, 128
        %3206 = vxpose.xlu0.b32.cont [10/16] 0.0, 128
        %3207 = vxpose.xlu0.b32.cont [11/16] 0.0, 128
        %3208 = vxpose.xlu0.b32.cont [12/16] 0.0, 128
        %3209 = vxpose.xlu0.b32.cont [13/16] 0.0, 128
        %3210 = vxpose.xlu0.b32.cont [14/16] 0.0, 128
        %3211 = vxpose.xlu0.b32.cont [15/16] 0.0, 128
        %3212 = vxpose.xlu0.b32.end [16/16] 0.0, 128
        %v3213 = vpop.trf.xlu0
        %v3214 = vpop.trf.xlu0
        %v3215 = vpop.trf.xlu0
        %v3216 = vpop.trf.xlu0
        %v3217 = vpop.trf.xlu0
        %v3218 = vpop.trf.xlu0
        %v3219 = vpop.trf.xlu0
        %v3220 = vpop.trf.xlu0
        %v3221 = vpop.trf.xlu0
        %v3222 = vpop.trf.xlu0
        %v3223 = vpop.trf.xlu0
        %v3224 = vpop.trf.xlu0
        %v3225 = vpop.trf.xlu0
        %v3226 = vpop.trf.xlu0
        %v3227 = vpop.trf.xlu0
        %v3228 = vpop.trf.xlu0
        %v3229 = vrot.slane %v3181, 4
        %v3230 = vsel %vm2307, %v3229, %v3117
        %v3231 = vrot.slane %v3117, 4
        %v3232 = vsel %vm2307, %v3181, %v3231
        %v3234 = vunpack.c.l.s4 1983009808
        %v3235 = vunpack.c.0.s8 %v3234
        %v3236 = vperm.slane %v3230, %v3235
        %v3238 = vunpack.c.l.s4 1983009808
        %v3239 = vunpack.c.0.s8 %v3238
        %v3240 = vperm.slane %v3232, %v3239
        %v3241 = vrot.slane %v3213, 4
        %v3242 = vsel %vm2307, %v3241, %v3149
        %v3243 = vrot.slane %v3149, 4
        %v3244 = vsel %vm2307, %v3213, %v3243
        %v3246 = vunpack.c.l.s4 1983009808
        %v3247 = vunpack.c.0.s8 %v3246
        %v3248 = vperm.slane %v3242, %v3247
        %v3250 = vunpack.c.l.s4 1983009808
        %v3251 = vunpack.c.0.s8 %v3250
        %v3252 = vperm.slane %v3244, %v3251
        %v3253 = vrot.slane %v3248, 4
        %v3254 = vsel %vm2307, %v3253, %v3236
        %v3255 = vrot.slane %v3236, 4
        %v3256 = vsel %vm2307, %v3248, %v3255
        %v3258 = vunpack.c.l.s4 1934713408
        %v3259 = vunpack.c.0.s8 %v3258
        %v3260 = vperm.slane %v3254, %v3259
        %v3262 = vunpack.c.l.s4 1934713408
        %v3263 = vunpack.c.0.s8 %v3262
        %v3264 = vperm.slane %v3256, %v3263
        %v3265 = vrot.slane %v3252, 4
        %v3266 = vsel %vm2307, %v3265, %v3240
        %v3267 = vrot.slane %v3240, 4
        %v3268 = vsel %vm2307, %v3252, %v3267
        %v3270 = vunpack.c.l.s4 1934713408
        %v3271 = vunpack.c.0.s8 %v3270
        %v3272 = vperm.slane %v3266, %v3271
        %v3274 = vunpack.c.l.s4 1934713408
        %v3275 = vunpack.c.0.s8 %v3274
        %v3276 = vperm.slane %v3268, %v3275
        %v3277 = vrot.slane %v3260, 4
        %v3278 = vsel %vm2307, 0.0, %v3277
        %v3279 = vrot.slane %v3264, 4
        %v3280 = vsel %vm2307, 0.0, %v3279
        %v3281 = vrot.slane %v3272, 4
        %v3282 = vsel %vm2307, 0.0, %v3281
        %v3283 = vrot.slane %v3276, 4
        %v3284 = vsel %vm2307, 0.0, %v3283
        %v3285 = vsel %vm2307, %v3279, %v3260
        %v3287 = vunpack.c.l.s4 1983009808
        %v3288 = vunpack.c.0.s8 %v3287
        %v3289 = vperm.slane %v3285, %v3288
        %v3290 = vrot.slane %v3280, 4
        %v3291 = vsel %vm2307, %v3290, %v3278
        %v3293 = vunpack.c.l.s4 1983009808
        %v3294 = vunpack.c.0.s8 %v3293
        %v3295 = vperm.slane %v3291, %v3294
        %v3296 = vsel %vm2307, %v3283, %v3272
        %v3298 = vunpack.c.l.s4 1983009808
        %v3299 = vunpack.c.0.s8 %v3298
        %v3300 = vperm.slane %v3296, %v3299
        %v3301 = vrot.slane %v3284, 4
        %v3302 = vsel %vm2307, %v3301, %v3282
        %v3304 = vunpack.c.l.s4 1983009808
        %v3305 = vunpack.c.0.s8 %v3304
        %v3306 = vperm.slane %v3302, %v3305
        %v3307 = vrot.slane %v3295, 4
        %v3308 = vsel %vm2307, %v3307, %v3289
        %v3309 = vrot.slane %v3289, 4
        %v3310 = vsel %vm2307, %v3295, %v3309
        %v3312 = vunpack.c.l.s4 1934713408
        %v3313 = vunpack.c.0.s8 %v3312
        %v3314 = vperm.slane %v3308, %v3313
        %v3316 = vunpack.c.l.s4 1934713408
        %v3317 = vunpack.c.0.s8 %v3316
        %v3318 = vperm.slane %v3310, %v3317
        %v3319 = vrot.slane %v3306, 4
        %v3320 = vsel %vm2307, %v3319, %v3300
        %v3321 = vrot.slane %v3300, 4
        %v3322 = vsel %vm2307, %v3306, %v3321
        %v3324 = vunpack.c.l.s4 1934713408
        %v3325 = vunpack.c.0.s8 %v3324
        %v3326 = vperm.slane %v3320, %v3325
        %v3328 = vunpack.c.l.s4 1934713408
        %v3329 = vunpack.c.0.s8 %v3328
        %v3330 = vperm.slane %v3322, %v3329
        %v3331 = vrot.slane %v3326, 4
        %v3332 = vsel %vm2307, %v3331, %v3314
        %v3333 = vrot.slane %v3314, 4
        %v3334 = vsel %vm2307, %v3326, %v3333
        %v3335 = vrot.slane %v3330, 4
        %v3336 = vsel %vm2307, %v3335, %v3318
        %v3337 = vrot.slane %v3318, 4
        %v3338 = vsel %vm2307, %v3330, %v3337
        %3340 = vrot.lane.b32.xlu0 %v3334, 8
        %v3341 = vpop.permute.xlu0 %3340
        %3344 = vrot.lane.b32.xlu0 %v3336, 16
        %v3345 = vpop.permute.xlu0 %3344
        %3348 = vrot.lane.b32.xlu0 %v3338, 24
        %v3349 = vpop.permute.xlu0 %3348
        %v3351 = vsel %vm1793, %v3332, %v3341
        %v3352 = vsel %vm2430, %v3351, %v3345
        %v3353 = vsel %vm2432, %v3352, %v3349
        %v3354 = vld [vmem:[%s1313] sm:$0xff]
        %v3355 = vld [vmem:[%s1313 + $0x8] sm:$0xff]
        %v3356 = vld [vmem:[%s1313 + $0x10] sm:$0xff]
        %v3357 = vld [vmem:[%s1313 + $0x18] sm:$0xff]
        %v3359 = vsel %vm1613, %v3353, 0
        %3361 = vmatpush.msra.mxu0 0.0
        %3362 = vmatpush.msra.mxu0 0.0
        %3363 = vmatpush.msra.mxu0 0.0
        %3364 = vmatpush.msra.mxu0 0.0
        %3365 = vmatpush.msra.mxu0 0.0
        %3366 = vmatpush.msra.mxu0 0.0
        %3367 = vmatpush.msra.mxu0 0.0
        %3368 = vmatpush.msra.mxu0 0.0
        %3369 = vmatpush.msra.mxu0 0.0
        %3370 = vmatpush.msra.mxu0 0.0
        %3371 = vmatpush.msra.mxu0 0.0
        %3372 = vmatpush.msra.mxu0 0.0
        %3373 = vmatpush.msra.mxu0 %v3357
        %3374 = vmatpush.msra.mxu0 %v3356
        %3375 = vmatpush.msra.mxu0 %v3355
        %3376 = vmatpush.msra.mxu0 %v3354
        %3377 = vmatmul.f32.gmra.mxu0 %v3359
        %v3378 = vpop.f32.mrf.mxu0
        %v3379 = vadd.f32 0.0, %v3378
        %3380 = vdwg.mxu0
        %v3381 = vadd.f32 %v2507, %v3379
        %v3382 = vld [vmem:[%s1322] sm:$0x1]
        %v3384 = vperm.slane %v3382, 0
        %v3386 = vadd.f32 %v3381, %v3384
        %v3387 = vld [vmem:[%s1331] sm:$0x1]
        %v3388 = vld [vmem:[%s1340] sm:$0x1]
        %v3389 = vsel %vm1613, %v3386, 0.0
        %3390 = vadd.xlane.f32.xlu0 %v3389
        %v3391 = vpop.xlane.xlu0 %3390
        %v3392 = vmul.f32 %v3391, %v2478
        %v3393 = vmul.f32 %v3386, %v3386
        %v3394 = vsel %vm1613, %v3393, 0.0
        %3395 = vadd.xlane.f32.xlu0 %v3394
        %v3396 = vpop.xlane.xlu0 %3395
        %v3397 = vmul.f32 %v3396, %v2478
        %v3398 = vmul.f32 %v3392, %v3392
        %v3399 = vsub.f32 %v3397, %v3398
        %v3400 = vsub.f32 %v3386, %v3392
        %v3401 = vadd.f32 %v3399, 1e-05
        %v3402 = vrsqrt.pop %v3401
        %v3403 = vmul.f32 %v3402, %v3401
        %v3404 = vmul.f32 %v3403, %v3402
        %v3405 = vmul.f32 0.5, %v3404
        %v3406 = vsub.f32 1.5, %v3405
        %v3407 = vmul.f32 %v3402, %v3406
        %vm3408 = vweird.f32 %v3401
        %vm3409 = vweird.f32 %v3402
        %vm3410 = vmor %vm3408, %vm3409
        %v3411 = vsel %vm3410, %v3402, %v3407
        %v3412 = vmul.f32 %v3400, %v3411
        %v3414 = vperm.slane %v3387, 0
        %v3416 = vmul.f32 %v3412, %v3414
        %v3418 = vperm.slane %v3388, 0
        %v3420 = vadd.f32 %v3416, %v3418
        %v3421 = vld [vmem:[%s1350] sm:$0xff]
        %v3422 = vld [vmem:[%s1350 + $0x8] sm:$0xff]
        %v3423 = vld [vmem:[%s1350 + $0x10] sm:$0xff]
        %v3424 = vld [vmem:[%s1350 + $0x18] sm:$0xff]
        %v3425 = vld [vmem:[%s1359] sm:$0x1]
        %v3427 = vperm.slane %v3425, 0
        %v3430 = vsel %vm1613, %v3420, 0
        %3432 = vmatpush.msra.mxu0 0.0
        %3433 = vmatpush.msra.mxu0 0.0
        %3434 = vmatpush.msra.mxu0 0.0
        %3435 = vmatpush.msra.mxu0 0.0
        %3436 = vmatpush.msra.mxu0 0.0
        %3437 = vmatpush.msra.mxu0 0.0
        %3438 = vmatpush.msra.mxu0 0.0
        %3439 = vmatpush.msra.mxu0 0.0
        %3440 = vmatpush.msra.mxu0 0.0
        %3441 = vmatpush.msra.mxu0 0.0
        %3442 = vmatpush.msra.mxu0 0.0
        %3443 = vmatpush.msra.mxu0 0.0
        %3444 = vmatpush.msra.mxu0 %v3424
        %3445 = vmatpush.msra.mxu0 %v3423
        %3446 = vmatpush.msra.mxu0 %v3422
        %3447 = vmatpush.msra.mxu0 %v3421
        %3448 = vmatmul.f32.gmra.mxu0 %v3430
        %v3449 = vpop.f32.mrf.mxu0
        %v3450 = vadd.f32 %v3427, %v3449
        %3451 = vdwg.mxu0
        %v3452 = vmax.f32 %v3450, 0.0
        %v3453 = vld [vmem:[%s1560] sm:$0xff]
        %v3454 = vld [vmem:[%s1560 + $0x8] sm:$0xff]
        %v3455 = vld [vmem:[%s1560 + $0x10] sm:$0xff]
        %v3456 = vld [vmem:[%s1560 + $0x18] sm:$0xff]
        %v3457 = vld [vmem:[%s1560 + $0x20] sm:$0xff]
        %v3458 = vld [vmem:[%s1560 + $0x28] sm:$0xff]
        %v3459 = vld [vmem:[%s1560 + $0x30] sm:$0xff]
        %v3460 = vld [vmem:[%s1560 + $0x38] sm:$0xff]
        %vm3461 = vcmask 523264
        %v3463 = vsel %vm3461, %v3452, 0
        %3465 = vmatpush.msra.mxu0 0.0
        %3466 = vmatpush.msra.mxu0 0.0
        %3467 = vmatpush.msra.mxu0 0.0
        %3468 = vmatpush.msra.mxu0 0.0
        %3469 = vmatpush.msra.mxu0 0.0
        %3470 = vmatpush.msra.mxu0 0.0
        %3471 = vmatpush.msra.mxu0 0.0
        %3472 = vmatpush.msra.mxu0 0.0
        %3473 = vmatpush.msra.mxu0 %v3460
        %3474 = vmatpush.msra.mxu0 %v3459
        %3475 = vmatpush.msra.mxu0 %v3458
        %3476 = vmatpush.msra.mxu0 %v3457
        %3477 = vmatpush.msra.mxu0 %v3456
        %3478 = vmatpush.msra.mxu0 %v3455
        %3479 = vmatpush.msra.mxu0 %v3454
        %3480 = vmatpush.msra.mxu0 %v3453
        %3481 = vmatmul.f32.gmra.mxu0 %v3463
        %v3482 = vpop.f32.mrf.mxu0
        %v3483 = vadd.f32 0.0, %v3482
        %3484 = vdwg.mxu0
        %v3485 = vadd.f32 %v3420, %v3483
        %v3486 = vld [vmem:[%s1368] sm:$0x1]
        %v3488 = vperm.slane %v3486, 0
        %v3490 = vadd.f32 %v3485, %v3488
        %v3491 = vld [vmem:[%s1377] sm:$0x1]
        %v3492 = vld [vmem:[%s1386] sm:$0x1]
        %v3493 = vsel %vm1613, %v3490, 0.0
        %3494 = vadd.xlane.f32.xlu0 %v3493
        %v3495 = vpop.xlane.xlu0 %3494
        %v3496 = vmul.f32 %v3495, %v2478
        %v3497 = vmul.f32 %v3490, %v3490
        %v3498 = vsel %vm1613, %v3497, 0.0
        %3499 = vadd.xlane.f32.xlu0 %v3498
        %v3500 = vpop.xlane.xlu0 %3499
        %v3501 = vmul.f32 %v3500, %v2478
        %v3502 = vmul.f32 %v3496, %v3496
        %v3503 = vsub.f32 %v3501, %v3502
        %v3504 = vsub.f32 %v3490, %v3496
        %v3505 = vadd.f32 %v3503, 1e-05
        %v3506 = vrsqrt.pop %v3505
        %v3507 = vmul.f32 %v3506, %v3505
        %v3508 = vmul.f32 %v3507, %v3506
        %v3509 = vmul.f32 0.5, %v3508
        %v3510 = vsub.f32 1.5, %v3509
        %v3511 = vmul.f32 %v3506, %v3510
        %vm3512 = vweird.f32 %v3505
        %vm3513 = vweird.f32 %v3506
        %vm3514 = vmor %vm3512, %vm3513
        %v3515 = vsel %vm3514, %v3506, %v3511
        %v3516 = vmul.f32 %v3504, %v3515
        %v3518 = vperm.slane %v3491, 0
        %v3520 = vmul.f32 %v3516, %v3518
        %v3522 = vperm.slane %v3492, 0
        %v3524 = vadd.f32 %v3520, %v3522
        %3525 = vst.msk [vmem:[#allocation2] sm:$0xff] %vm1613, %v3524
        %p3526 = scmp.eq.s32.totalorder %s98, 1
        // Predicated region
        $region221: #{tpu_custom_call.1} parent=135 // pred_check
          %p3527 = pneg %p3526
        $region222: #{tpu_custom_call.1} parent=135 // pred_check_branch
          %3529 = sbr.rel (%p3527) target = $region224
        $region223: #{tpu_custom_call.1} parent=135 // pred_region
          %v3531 = vrot.slane %v3524, 2
          %v3532 = vrot.slane %v3524, 4
          %v3533 = vrot.slane %v3524, 6
          %vm3537 = vcmask 254976
          %v3538 = vsel %vm3537, %v3524, 0.0
          %v3539 = vsel %vm3537, %v3531, 0.0
          %v3540 = vadd.f32 %v3538, %v3539
          %v3541 = vsel %vm3537, %v3532, 0.0
          %v3542 = vadd.f32 %v3540, %v3541
          %v3543 = vsel %vm3537, %v3533, 0.0
          %v3544 = vadd.f32 %v3542, %v3543
          %v3545 = vrcp.pop 4.0
          %v3546 = vmul.f32 4.0, %v3545
          %v3547 = vsub.f32 1.0, %v3546
          %v3548 = vmul.f32 %v3545, %v3547
          %v3549 = vadd.f32 %v3545, %v3548
          %vm3550 = vweird.f32 %v3545
          %v3551 = vsel %vm3550, %v3545, %v3549
          %v3552 = vmul.f32 %v3544, %v3551
          %v3553 = vld [vmem:[%s55] sm:$0xff]
          %v3554 = vld [vmem:[%s55 + $0x8] sm:$0xff]
          %v3555 = vld [vmem:[%s55 + $0x10] sm:$0xff]
          %v3556 = vld [vmem:[%s55 + $0x18] sm:$0xff]
          %v3557 = vld [vmem:[%s57] sm:$0x1]
          %v3559 = vperm.slane %v3557, 0
          %v3562 = vsel %vm1613, %v3552, 0
          %3564 = vmatpush.msra.mxu0 0.0
          %3565 = vmatpush.msra.mxu0 0.0
          %3566 = vmatpush.msra.mxu0 0.0
          %3567 = vmatpush.msra.mxu0 0.0
          %3568 = vmatpush.msra.mxu0 0.0
          %3569 = vmatpush.msra.mxu0 0.0
          %3570 = vmatpush.msra.mxu0 0.0
          %3571 = vmatpush.msra.mxu0 0.0
          %3572 = vmatpush.msra.mxu0 0.0
          %3573 = vmatpush.msra.mxu0 0.0
          %3574 = vmatpush.msra.mxu0 0.0
          %3575 = vmatpush.msra.mxu0 0.0
          %3576 = vmatpush.msra.mxu0 %v3556
          %3577 = vmatpush.msra.mxu0 %v3555
          %3578 = vmatpush.msra.mxu0 %v3554
          %3579 = vmatpush.msra.mxu0 %v3553
          %3580 = vmatmul.f32.gmra.mxu0 %v3562
          %v3581 = vpop.f32.mrf.mxu0
          %v3582 = vadd.f32 %v3559, %v3581
          %3583 = vdwg.mxu0
          %vm3584 = vcmask 123904
          %3585 = vst.msk [vmem:[#allocation35] sm:$0x3] %vm3584, %v3582
        $region224: #{tpu_custom_call.1} parent=135 // pred_fallthru
          _
        // Predicated region
        $region225: #{tpu_custom_call.1} parent=135 // pred_check
          %p3586 = pneg %p820
        $region226: #{tpu_custom_call.1} parent=135 // pred_check_branch
          %3588 = sbr.rel (%p3586) target = $region228
        $region227: #{tpu_custom_call.1} parent=135 // pred_region
          %3590 = vsyncadd [#allocation5], 0
          %s3592 = sshll.u32 [#allocation35], 4
          %s3593 = int_to_ptr.vmem [resolvable:$true] %s3592
          %s3594 = sshll.u32 %s59, 4
          %s3595 = int_to_ptr.hbm [resolvable:$true] %s3594
          %3597 = dma.vmem_to_hbm [thread:$0]  %s3593, 32, %s3595, [#allocation5]
        $region228: #{tpu_custom_call.1} parent=135 // pred_fallthru
          _
        // Predicated region
        $region229: #{tpu_custom_call.1} parent=135 // pred_check
          %p3598 = pneg %p820
        $region230: #{tpu_custom_call.1} parent=135 // pred_check_branch
          %3600 = sbr.rel (%p3598) target = $region232
        $region231: #{tpu_custom_call.1} parent=135 // pred_region
          %3602 = dma.done [#allocation5], 32
        $region232: #{tpu_custom_call.1} parent=135 // pred_fallthru
          _
      $region136: #{tpu_custom_call.1} parent=5 // pred_fallthru
        _
      %p3603 = scmp.le.s32.totalorder 2, %s93
      // Predicated region
      $region233: #{tpu_custom_call.1} parent=5 // pred_check
        %p3604 = pneg %p3603
      $region234: #{tpu_custom_call.1} parent=5 // pred_check_branch
        %3606 = sbr.rel (%p3604) target = $region236
      $region235: #{tpu_custom_call.1} parent=5 // pred_region
        %s3607 = ssub.s32 %s93, 2
      $region236: #{tpu_custom_call.1} parent=5 // pred_fallthru
        _
    $region6: #{tpu_custom_call.1} parent=1 // loop_footer
      %s97 = sadd.s32 1, %s93
    $region7: #{tpu_custom_call.1} parent=1 // loop_footer_branch
      %92 = sbr.rel target = $region3
    $region8: #{tpu_custom_call.1} parent=1 // loop_exit
      _
    %3608 = vsyncpa [#allocation4], 1
    %s3609 = scalar_lea.sflag [#allocation4], 1
    %3610 = vsyncpa %s3609, 1
    %3611 = vsyncpa [#allocation7], 1
    %3612 = vsyncpa [#allocation10], 1
    %3613 = vsyncpa [#allocation13], 1
    %s3614 = scalar_lea.sflag [#allocation13], 1
    %3615 = vsyncpa %s3614, 1
    %3616 = vsyncpa [#allocation16], 1
    %s3617 = scalar_lea.sflag [#allocation16], 1
    %3618 = vsyncpa %s3617, 1
    %3619 = vsyncpa [#allocation19], 1
    %s3620 = scalar_lea.sflag [#allocation19], 1
    %3621 = vsyncpa %s3620, 1
    %3622 = vsyncpa [#allocation22], 1
    %s3623 = scalar_lea.sflag [#allocation22], 1
    %3624 = vsyncpa %s3623, 1
    %3625 = vsyncpa [#allocation25], 1
    %s3626 = scalar_lea.sflag [#allocation25], 1
    %3627 = vsyncpa %s3626, 1
    %3628 = vsyncpa [#allocation28], 1
    %s3629 = scalar_lea.sflag [#allocation28], 1
    %3630 = vsyncpa %s3629, 1
    %3631 = vsyncpa [#allocation31], 1
    %s3632 = scalar_lea.sflag [#allocation31], 1
    %3633 = vsyncpa %s3632, 1
    %3634 = vsyncpa [#allocation34], 1
    %s3635 = scalar_lea.sflag [#allocation34], 1
    %3636 = vsyncpa %s3635, 1
    %3637 = vsyncpa [#allocation5], 1
    %s3638 = scalar_lea.sflag [#allocation5], 1
    %3639 = vsyncpa %s3638, 1

</llo_original>
